<compile_context>
chip_gen: v7x
topology: tpu7x:2x2x1
jax: 0.10.0
libtpu: 0.0.40
codegen_flags: <defaults>
</compile_context>

<pallas_src>
import jax
import jax.numpy as jnp
from jax.experimental import pallas as pl
from jax.experimental.pallas import tpu as pltpu

# ---- model dims (small, consistent with the module) ----
B = 2            # batch
L = 8            # sequence length
IN_FEATURES = 6  # in_features
E = 32           # embed dim
H = 4            # heads
DH = E // H      # head dim
HD = H * DH      # = E, heads concatenated
D_BLOCKS = 2     # depth D
OUT_FEATURES = 5
OUT_PAD = 128    # lane-dense padded output width
LN_EPS = 1e-5
NEG_INF = -1e30  # finite "masked" logit (avoids -inf - -inf = NaN)

# ---- packed-vector-parameter row layout (one 128-lane row per vector) ----
R_LN1G, R_LN1B, R_LN2G, R_LN2B, R_BO, R_B2, R_BQKV, R_B1 = range(8)
BLOCK_ROWS = 8
R_EMBED_B = D_BLOCKS * BLOCK_ROWS + 0
R_NORM_G = D_BLOCKS * BLOCK_ROWS + 1
R_NORM_B = D_BLOCKS * BLOCK_ROWS + 2
R_OUT_B = D_BLOCKS * BLOCK_ROWS + 3
N_VEC_ROWS = D_BLOCKS * BLOCK_ROWS + 4
VEC_LANES = 128


def _layernorm(x, gamma, beta):
    mu = jnp.mean(x, axis=-1, keepdims=True)
    var = jnp.mean((x - mu) ** 2, axis=-1, keepdims=True)
    return (x - mu) * jax.lax.rsqrt(var + LN_EPS) * gamma + beta


# ---------------- fully fused forward kernel (single invocation) ------------
def _fwd_kernel(xp_ref, dm_ref, negs_ref, vecs_ref,
                embw_ref, wqkv_ref, wo_ref, w1_ref, w2_ref, outw_ref,
                o_ref):
    f32, bf16 = jnp.float32, jnp.bfloat16
    BL = B * L
    G = B * H

    x_in = xp_ref[:, 0:IN_FEATURES]                          # (BL, IN)
    padded = xp_ref[:, IN_FEATURES:IN_FEATURES + 1] > 0.5    # (BL, 1)
    logd = dm_ref[0]                                         # (B, L, L)
    masked = dm_ref[1] > 0.5                                 # (B, L, L)

    def vec(row, n):                                         # (1, n) param row
        return vecs_ref[row:row + 1, 0:n]

    # ---- embedding Linear: x @ W + b ----
    h = jnp.dot(x_in.astype(bf16), embw_ref[...],
                preferred_element_type=f32) + vec(R_EMBED_B, E)          # (BL, E)

    scale = 1.0 / (DH ** 0.5)
    for d in range(D_BLOCKS):          # unrolled; static indices into stacked weights
        base = d * BLOCK_ROWS

        # ---- norm_1 ----
        x0 = _layernorm(h, vec(base + R_LN1G, E), vec(base + R_LN1B, E))

        # ---- fused q|k|v projection: ONE (BL,E)@(E,3*H*DH) matmul ----
        qkv = jnp.dot(x0.astype(bf16), wqkv_ref[d],
                      preferred_element_type=f32) + vec(base + R_BQKV, 3 * HD)
        qkv3 = qkv.reshape(B, L, 3 * HD)     # leading-dim split (sublane aligned)

        def heads(off):                      # lane slab -> (B*H, L, DH)
            parts = [qkv3[:, :, off + hh * DH: off + (hh + 1) * DH][:, None]
                     for hh in range(H)]     # each (B, 1, L, DH)
            return jnp.concatenate(parts, axis=1).reshape(G, L, DH)

        q, k, v = heads(0), heads(HD), heads(2 * HD)

        # per-(block, head) bias = NegativeLinear(log-distance), mask folded in
        bias_parts = []
        for hh in range(H):
            w = negs_ref[d, hh]               # strictly negative weight (SMEM scalar)
            c = negs_ref[D_BLOCKS + d, hh]    # bias (SMEM scalar)
            bias_parts.append(jnp.where(masked, NEG_INF, w * logd + c)[:, None])
        bias = jnp.concatenate(bias_parts, axis=1).reshape(G, L, L)

        # ---- batched attention over g = b*H + h ----
        logits = jnp.einsum("gld,gmd->glm", q.astype(bf16), k.astype(bf16),
                            preferred_element_type=f32) * scale + bias
        m = jnp.max(logits, axis=-1, keepdims=True)
        p = jnp.exp(logits - m)
        attn = p / jnp.sum(p, axis=-1, keepdims=True)        # exact softmax (f32)
        ctx = jnp.einsum("glm,gmd->gld", attn.astype(bf16), v.astype(bf16),
                         preferred_element_type=f32)          # (G, L, DH)

        # ---- merge heads -> ONE (BL,H*DH)@(H*DH,E) output projection ----
        ctx4 = ctx.reshape(B, H, L, DH)
        merged = jnp.concatenate([ctx4[:, hh] for hh in range(H)], axis=2)  # (B,L,HD)
        x1 = jnp.dot(merged.reshape(BL, HD).astype(bf16), wo_ref[d],
                     preferred_element_type=f32) + vec(base + R_BO, E)

        # dropout == identity (inference); residual wiring per the reference
        x2 = _layernorm(x1 + x0, vec(base + R_LN2G, E), vec(base + R_LN2B, E))

        # ---- MLP: Linear(E,4E) -> ReLU -> Linear(4E,E) ----
        h1 = jnp.maximum(
            jnp.dot(x2.astype(bf16), w1_ref[d], preferred_element_type=f32)
            + vec(base + R_B1, 4 * E), 0.0)
        x3 = jnp.dot(h1.astype(bf16), w2_ref[d],
                     preferred_element_type=f32) + vec(base + R_B2, E)
        x3 = jnp.where(padded, 0.0, x3)      # x3.masked_fill_(padding_mask, 0)
        h = x3 + x2

    # ---- head: final LayerNorm -> per-batch mean over L -> out Linear ----
    # (mean includes padded tokens, same as the previous accepted version)
    xn = _layernorm(h, vec(R_NORM_G, E), vec(R_NORM_B, E))   # (BL, E)
    xm = jnp.concatenate(
        [jnp.mean(xn[b * L:(b + 1) * L, :], axis=0, keepdims=True)
         for b in range(B)], axis=0)                         # (B, E)
    o_ref[...] = jnp.dot(xm.astype(bf16), outw_ref[...],
                         preferred_element_type=f32) + vec(R_OUT_B, OUT_PAD)


# ---------------- wrapper: mask/bias setup + single pallas_call -------------
def transformer_forward(params, x, padding, r):
    Bn, Ln, Fin = x.shape

    # pairwise distance -> log; log(0) on the diagonal clamped to finite so the
    # (negative) NegativeLinear weight cannot produce +/-inf before masking.
    diff = r[:, None, :, :] - r[:, :, None, :]
    dist = jnp.sqrt(jnp.sum(diff * diff, axis=-1))                 # (B, L, L)
    logd = jnp.clip(jnp.nan_to_num(jnp.log(dist)), -1e30, 1e30)

    eye = jnp.eye(Ln, dtype=bool)
    attn_mask = (padding[:, None, :] | padding[:, :, None]) | eye[None]
    dm = jnp.stack([logd, attn_mask.astype(jnp.float32)], axis=0)  # (2, B, L, L)

    xp = jnp.concatenate(
        [x.reshape(Bn * Ln, Fin),
         padding.astype(jnp.float32).reshape(Bn * Ln, 1)], axis=1)  # (B*L, Fin+1)

    vmem = pl.BlockSpec(memory_space=pltpu.MemorySpace.VMEM)
    smem = pl.BlockSpec(memory_space=pltpu.MemorySpace.SMEM)

    out = pl.pallas_call(
        _fwd_kernel,
        out_shape=jax.ShapeDtypeStruct((Bn, OUT_PAD), jnp.float32),
        in_specs=[vmem,      # xp: activations + padding column
                  vmem,      # dm: log-distance | attention mask
                  smem,      # negs: NegativeLinear scalars
                  vmem,      # vecs: packed LN/bias vectors
                  vmem, vmem, vmem, vmem, vmem, vmem],   # big bf16 weights
        out_specs=vmem,
    )(xp, dm, params["negs"], params["vecs"],
      params["embed_w"], params["wqkv"], params["wo"],
      params["w1"], params["w2"], params["out_w"])
    return out[:, :OUT_FEATURES]


# ---------------- deterministic parameter init -------------------------------
def init_params(key):
    keys = iter(jax.random.split(key, 32))

    def nrm(shape, scale=0.1):
        return scale * jax.random.normal(next(keys), shape, dtype=jnp.float32)

    D = D_BLOCKS
    # big matrices, stored bf16 (native MXU input dtype)
    embed_w = nrm((IN_FEATURES, E)).astype(jnp.bfloat16)
    wqkv = nrm((D, E, 3 * HD)).astype(jnp.bfloat16)     # q|k|v packed on last dim
    wo = nrm((D, HD, E)).astype(jnp.bfloat16)           # concat-heads output proj
    w1 = nrm((D, E, 4 * E)).astype(jnp.bfloat16)
    w2 = nrm((D, 4 * E, E)).astype(jnp.bfloat16)
    out_w = jnp.zeros((E, OUT_PAD), jnp.float32).at[:, :OUT_FEATURES].set(
        nrm((E, OUT_FEATURES))).astype(jnp.bfloat16)

    # NegativeLinear(1, H): rows [0:D) = weights forced negative, [D:2D) = biases
    negw = -jax.nn.softplus(nrm((D, H), 1.0))
    negb = nrm((D, H))
    negs = jnp.concatenate([negw, negb], axis=0)        # (2D, H) f32, -> SMEM

    # all LayerNorm / Linear bias vectors packed into one (rows, 128) f32 array
    vecs = jnp.zeros((N_VEC_ROWS, VEC_LANES), jnp.float32)

    def setrow(v, row, data):
        return v.at[row, :data.shape[0]].set(data)

    for d in range(D):
        base = d * BLOCK_ROWS
        vecs = setrow(vecs, base + R_LN1G, jnp.ones((E,), jnp.float32))
        vecs = setrow(vecs, base + R_LN1B, jnp.zeros((E,), jnp.float32))
        vecs = setrow(vecs, base + R_LN2G, jnp.ones((E,), jnp.float32))
        vecs = setrow(vecs, base + R_LN2B, jnp.zeros((E,), jnp.float32))
        vecs = setrow(vecs, base + R_BO, nrm((E,)))
        vecs = setrow(vecs, base + R_B2, nrm((E,)))
        vecs = setrow(vecs, base + R_BQKV, nrm((3 * HD,)))
        vecs = setrow(vecs, base + R_B1, nrm((4 * E,)))
    vecs = setrow(vecs, R_EMBED_B, nrm((E,)))
    vecs = setrow(vecs, R_NORM_G, jnp.ones((E,), jnp.float32))
    vecs = setrow(vecs, R_NORM_B, jnp.zeros((E,), jnp.float32))
    vecs = setrow(vecs, R_OUT_B, nrm((OUT_FEATURES,)))

    return {"embed_w": embed_w, "wqkv": wqkv, "wo": wo, "w1": w1, "w2": w2,
            "out_w": out_w, "negs": negs, "vecs": vecs}


if __name__ == "__main__":
    key = jax.random.PRNGKey(0)
    kx, kr, kp = jax.random.split(key, 3)
    params = init_params(kp)

    x = jax.random.normal(kx, (B, L, IN_FEATURES), dtype=jnp.float32)
    r = jax.random.normal(kr, (B, L, 3), dtype=jnp.float32)
    # no padded tokens (a fully-padded row is degenerate in the reference too)
    padding = jnp.zeros((B, L), dtype=bool)

    fwd = jax.jit(transformer_forward)
    out = jax.block_until_ready(fwd(params, x, padding, r))
    assert out.shape == (B, OUT_FEATURES), out.shape
    assert bool(jnp.all(jnp.isfinite(out)))
    print("KERNEL_OK")
</pallas_src>

<mosaic_0001>
module attributes {stable_mosaic.version = 11 : i64} {
  func.func @_fwd_kernel(%arg0: memref<16x7xf32, #tpu.memory_space<vmem>>, %arg1: memref<2x2x8x8xf32, #tpu.memory_space<vmem>>, %arg2: memref<4x4xf32, #tpu.memory_space<smem>>, %arg3: memref<20x128xf32, #tpu.memory_space<vmem>>, %arg4: memref<6x32xbf16, #tpu.memory_space<vmem>>, %arg5: memref<2x32x96xbf16, #tpu.memory_space<vmem>>, %arg6: memref<2x32x32xbf16, #tpu.memory_space<vmem>>, %arg7: memref<2x32x128xbf16, #tpu.memory_space<vmem>>, %arg8: memref<2x128x32xbf16, #tpu.memory_space<vmem>>, %arg9: memref<32x128xbf16, #tpu.memory_space<vmem>>, %arg10: memref<2x128xf32, #tpu.memory_space<vmem>>) attributes {dimension_semantics = [], scalar_prefetch = 0 : i64, scratch_operands = 0 : i64, tpu.core_type = #tpu.core_type<tc>} {
    %c0 = arith.constant 0 : index
    %c0_0 = arith.constant 0 : index
    %0 = vector.load %arg0[%c0, %c0_0] : memref<16x7xf32, #tpu.memory_space<vmem>>, vector<16x6xf32>
    %c0_1 = arith.constant 0 : index
    %c6 = arith.constant 6 : index
    %1 = vector.load %arg0[%c0_1, %c6] : memref<16x7xf32, #tpu.memory_space<vmem>>, vector<16x1xf32>
    %cst = arith.constant 5.000000e-01 : f32
    %2 = vector.broadcast %cst : f32 to vector<16x1xf32>
    %3 = arith.cmpf ogt, %1, %2 : vector<16x1xf32>
    %c0_2 = arith.constant 0 : index
    %c0_3 = arith.constant 0 : index
    %c0_4 = arith.constant 0 : index
    %c0_5 = arith.constant 0 : index
    %4 = vector.load %arg1[%c0_2, %c0_3, %c0_4, %c0_5] : memref<2x2x8x8xf32, #tpu.memory_space<vmem>>, vector<1x2x8x8xf32>
    %5 = vector.shape_cast %4 : vector<1x2x8x8xf32> to vector<2x8x8xf32>
    %c1 = arith.constant 1 : index
    %c0_6 = arith.constant 0 : index
    %c0_7 = arith.constant 0 : index
    %c0_8 = arith.constant 0 : index
    %6 = vector.load %arg1[%c1, %c0_6, %c0_7, %c0_8] : memref<2x2x8x8xf32, #tpu.memory_space<vmem>>, vector<1x2x8x8xf32>
    %7 = vector.shape_cast %6 : vector<1x2x8x8xf32> to vector<2x8x8xf32>
    %cst_9 = arith.constant 5.000000e-01 : f32
    %8 = vector.broadcast %cst_9 : f32 to vector<2x8x8xf32>
    %9 = arith.cmpf ogt, %7, %8 : vector<2x8x8xf32>
    %10 = arith.truncf %0 : vector<16x6xf32> to vector<16x6xbf16>
    %c0_10 = arith.constant 0 : index
    %c0_11 = arith.constant 0 : index
    %11 = vector.load %arg4[%c0_10, %c0_11] : memref<6x32xbf16, #tpu.memory_space<vmem>>, vector<6x32xbf16>
    %cst_12 = arith.constant dense<0.000000e+00> : vector<16x32xf32>
    %12 = tpu.matmul %10, %11, %cst_12 {dimension_numbers = #tpu.dot_dimension_numbers<[1], [0], [0], [1], [0, 0, 1, 1], [], []>} : vector<16x6xbf16>, vector<6x32xbf16>, vector<16x32xf32> -> vector<16x32xf32>
    %c16 = arith.constant 16 : index
    %c0_13 = arith.constant 0 : index
    %13 = vector.load %arg3[%c16, %c0_13] : memref<20x128xf32, #tpu.memory_space<vmem>>, vector<1x32xf32>
    %14 = vector.broadcast %13 : vector<1x32xf32> to vector<16x32xf32>
    %15 = arith.addf %12, %14 : vector<16x32xf32>
    %c0_14 = arith.constant 0 : index
    %c0_15 = arith.constant 0 : index
    %16 = vector.load %arg3[%c0_14, %c0_15] : memref<20x128xf32, #tpu.memory_space<vmem>>, vector<1x32xf32>
    %c1_16 = arith.constant 1 : index
    %c0_17 = arith.constant 0 : index
    %17 = vector.load %arg3[%c1_16, %c0_17] : memref<20x128xf32, #tpu.memory_space<vmem>>, vector<1x32xf32>
    %cst_18 = arith.constant dense<0.000000e+00> : vector<16xf32>
    %18 = vector.multi_reduction <add>, %15, %cst_18 [1] : vector<16x32xf32> to vector<16xf32>
    %19 = vector.shape_cast %18 : vector<16xf32> to vector<16x1xf32>
    %cst_19 = arith.constant 3.200000e+01 : f32
    %20 = vector.broadcast %cst_19 : f32 to vector<16x1xf32>
    %21 = arith.divf %19, %20 : vector<16x1xf32>
    %22 = vector.broadcast %21 : vector<16x1xf32> to vector<16x32xf32>
    %23 = arith.subf %15, %22 : vector<16x32xf32>
    %24 = arith.mulf %23, %23 : vector<16x32xf32>
    %cst_20 = arith.constant dense<0.000000e+00> : vector<16xf32>
    %25 = vector.multi_reduction <add>, %24, %cst_20 [1] : vector<16x32xf32> to vector<16xf32>
    %26 = vector.shape_cast %25 : vector<16xf32> to vector<16x1xf32>
    %cst_21 = arith.constant 3.200000e+01 : f32
    %27 = vector.broadcast %cst_21 : f32 to vector<16x1xf32>
    %28 = arith.divf %26, %27 : vector<16x1xf32>
    %29 = vector.broadcast %21 : vector<16x1xf32> to vector<16x32xf32>
    %30 = arith.subf %15, %29 : vector<16x32xf32>
    %cst_22 = arith.constant 9.99999974E-6 : f32
    %31 = vector.broadcast %cst_22 : f32 to vector<16x1xf32>
    %32 = arith.addf %28, %31 : vector<16x1xf32>
    %33 = math.rsqrt %32 : vector<16x1xf32>
    %34 = vector.broadcast %33 : vector<16x1xf32> to vector<16x32xf32>
    %35 = arith.mulf %30, %34 : vector<16x32xf32>
    %36 = vector.broadcast %16 : vector<1x32xf32> to vector<16x32xf32>
    %37 = arith.mulf %35, %36 : vector<16x32xf32>
    %38 = vector.broadcast %17 : vector<1x32xf32> to vector<16x32xf32>
    %39 = arith.addf %37, %38 : vector<16x32xf32>
    %40 = arith.truncf %39 : vector<16x32xf32> to vector<16x32xbf16>
    %c0_23 = arith.constant 0 : index
    %c0_24 = arith.constant 0 : index
    %c0_25 = arith.constant 0 : index
    %41 = vector.load %arg5[%c0_23, %c0_24, %c0_25] : memref<2x32x96xbf16, #tpu.memory_space<vmem>>, vector<1x32x96xbf16>
    %42 = vector.shape_cast %41 : vector<1x32x96xbf16> to vector<32x96xbf16>
    %cst_26 = arith.constant dense<0.000000e+00> : vector<16x96xf32>
    %43 = tpu.matmul %40, %42, %cst_26 {dimension_numbers = #tpu.dot_dimension_numbers<[1], [0], [0], [1], [0, 0, 1, 1], [], []>} : vector<16x32xbf16>, vector<32x96xbf16>, vector<16x96xf32> -> vector<16x96xf32>
    %c6_27 = arith.constant 6 : index
    %c0_28 = arith.constant 0 : index
    %44 = vector.load %arg3[%c6_27, %c0_28] : memref<20x128xf32, #tpu.memory_space<vmem>>, vector<1x96xf32>
    %45 = vector.broadcast %44 : vector<1x96xf32> to vector<16x96xf32>
    %46 = arith.addf %43, %45 : vector<16x96xf32>
    %47 = vector.shape_cast %46 : vector<16x96xf32> to vector<2x8x96xf32>
    %48 = vector.extract_strided_slice %47 {offsets = [0, 0, 0], sizes = [2, 8, 8], strides = [1, 1, 1]} : vector<2x8x96xf32> to vector<2x8x8xf32>
    %49 = vector.shape_cast %48 : vector<2x8x8xf32> to vector<2x1x8x8xf32>
    %50 = vector.extract_strided_slice %47 {offsets = [0, 0, 8], sizes = [2, 8, 8], strides = [1, 1, 1]} : vector<2x8x96xf32> to vector<2x8x8xf32>
    %51 = vector.shape_cast %50 : vector<2x8x8xf32> to vector<2x1x8x8xf32>
    %52 = vector.extract_strided_slice %47 {offsets = [0, 0, 16], sizes = [2, 8, 8], strides = [1, 1, 1]} : vector<2x8x96xf32> to vector<2x8x8xf32>
    %53 = vector.shape_cast %52 : vector<2x8x8xf32> to vector<2x1x8x8xf32>
    %54 = vector.extract_strided_slice %47 {offsets = [0, 0, 24], sizes = [2, 8, 8], strides = [1, 1, 1]} : vector<2x8x96xf32> to vector<2x8x8xf32>
    %55 = vector.shape_cast %54 : vector<2x8x8xf32> to vector<2x1x8x8xf32>
    %56 = tpu.concatenate %49, %51, %53, %55 in 1 : vector<2x1x8x8xf32>, vector<2x1x8x8xf32>, vector<2x1x8x8xf32>, vector<2x1x8x8xf32> -> vector<2x4x8x8xf32>
    %57 = vector.shape_cast %56 : vector<2x4x8x8xf32> to vector<8x8x8xf32>
    %58 = vector.extract_strided_slice %47 {offsets = [0, 0, 32], sizes = [2, 8, 8], strides = [1, 1, 1]} : vector<2x8x96xf32> to vector<2x8x8xf32>
    %59 = vector.shape_cast %58 : vector<2x8x8xf32> to vector<2x1x8x8xf32>
    %60 = vector.extract_strided_slice %47 {offsets = [0, 0, 40], sizes = [2, 8, 8], strides = [1, 1, 1]} : vector<2x8x96xf32> to vector<2x8x8xf32>
    %61 = vector.shape_cast %60 : vector<2x8x8xf32> to vector<2x1x8x8xf32>
    %62 = vector.extract_strided_slice %47 {offsets = [0, 0, 48], sizes = [2, 8, 8], strides = [1, 1, 1]} : vector<2x8x96xf32> to vector<2x8x8xf32>
    %63 = vector.shape_cast %62 : vector<2x8x8xf32> to vector<2x1x8x8xf32>
    %64 = vector.extract_strided_slice %47 {offsets = [0, 0, 56], sizes = [2, 8, 8], strides = [1, 1, 1]} : vector<2x8x96xf32> to vector<2x8x8xf32>
    %65 = vector.shape_cast %64 : vector<2x8x8xf32> to vector<2x1x8x8xf32>
    %66 = tpu.concatenate %59, %61, %63, %65 in 1 : vector<2x1x8x8xf32>, vector<2x1x8x8xf32>, vector<2x1x8x8xf32>, vector<2x1x8x8xf32> -> vector<2x4x8x8xf32>
    %67 = vector.shape_cast %66 : vector<2x4x8x8xf32> to vector<8x8x8xf32>
    %68 = vector.extract_strided_slice %47 {offsets = [0, 0, 64], sizes = [2, 8, 8], strides = [1, 1, 1]} : vector<2x8x96xf32> to vector<2x8x8xf32>
    %69 = vector.shape_cast %68 : vector<2x8x8xf32> to vector<2x1x8x8xf32>
    %70 = vector.extract_strided_slice %47 {offsets = [0, 0, 72], sizes = [2, 8, 8], strides = [1, 1, 1]} : vector<2x8x96xf32> to vector<2x8x8xf32>
    %71 = vector.shape_cast %70 : vector<2x8x8xf32> to vector<2x1x8x8xf32>
    %72 = vector.extract_strided_slice %47 {offsets = [0, 0, 80], sizes = [2, 8, 8], strides = [1, 1, 1]} : vector<2x8x96xf32> to vector<2x8x8xf32>
    %73 = vector.shape_cast %72 : vector<2x8x8xf32> to vector<2x1x8x8xf32>
    %74 = vector.extract_strided_slice %47 {offsets = [0, 0, 88], sizes = [2, 8, 8], strides = [1, 1, 1]} : vector<2x8x96xf32> to vector<2x8x8xf32>
    %75 = vector.shape_cast %74 : vector<2x8x8xf32> to vector<2x1x8x8xf32>
    %76 = tpu.concatenate %69, %71, %73, %75 in 1 : vector<2x1x8x8xf32>, vector<2x1x8x8xf32>, vector<2x1x8x8xf32>, vector<2x1x8x8xf32> -> vector<2x4x8x8xf32>
    %77 = vector.shape_cast %76 : vector<2x4x8x8xf32> to vector<8x8x8xf32>
    %c0_29 = arith.constant 0 : index
    %c0_30 = arith.constant 0 : index
    %78 = memref.load %arg2[%c0_29, %c0_30] : memref<4x4xf32, #tpu.memory_space<smem>>
    %c2 = arith.constant 2 : index
    %c0_31 = arith.constant 0 : index
    %79 = memref.load %arg2[%c2, %c0_31] : memref<4x4xf32, #tpu.memory_space<smem>>
    %80 = vector.broadcast %78 : f32 to vector<2x8x8xf32>
    %81 = arith.mulf %80, %5 : vector<2x8x8xf32>
    %82 = vector.broadcast %79 : f32 to vector<2x8x8xf32>
    %83 = arith.addf %81, %82 : vector<2x8x8xf32>
    %cst_32 = arith.constant -1.000000e+30 : f32
    %84 = vector.broadcast %cst_32 : f32 to vector<2x8x8xf32>
    %85 = arith.select %9, %84, %83 : vector<2x8x8xi1>, vector<2x8x8xf32>
    %86 = vector.shape_cast %85 : vector<2x8x8xf32> to vector<2x1x8x8xf32>
    %c0_33 = arith.constant 0 : index
    %c1_34 = arith.constant 1 : index
    %87 = memref.load %arg2[%c0_33, %c1_34] : memref<4x4xf32, #tpu.memory_space<smem>>
    %c2_35 = arith.constant 2 : index
    %c1_36 = arith.constant 1 : index
    %88 = memref.load %arg2[%c2_35, %c1_36] : memref<4x4xf32, #tpu.memory_space<smem>>
    %89 = vector.broadcast %87 : f32 to vector<2x8x8xf32>
    %90 = arith.mulf %89, %5 : vector<2x8x8xf32>
    %91 = vector.broadcast %88 : f32 to vector<2x8x8xf32>
    %92 = arith.addf %90, %91 : vector<2x8x8xf32>
    %cst_37 = arith.constant -1.000000e+30 : f32
    %93 = vector.broadcast %cst_37 : f32 to vector<2x8x8xf32>
    %94 = arith.select %9, %93, %92 : vector<2x8x8xi1>, vector<2x8x8xf32>
    %95 = vector.shape_cast %94 : vector<2x8x8xf32> to vector<2x1x8x8xf32>
    %c0_38 = arith.constant 0 : index
    %c2_39 = arith.constant 2 : index
    %96 = memref.load %arg2[%c0_38, %c2_39] : memref<4x4xf32, #tpu.memory_space<smem>>
    %c2_40 = arith.constant 2 : index
    %c2_41 = arith.constant 2 : index
    %97 = memref.load %arg2[%c2_40, %c2_41] : memref<4x4xf32, #tpu.memory_space<smem>>
    %98 = vector.broadcast %96 : f32 to vector<2x8x8xf32>
    %99 = arith.mulf %98, %5 : vector<2x8x8xf32>
    %100 = vector.broadcast %97 : f32 to vector<2x8x8xf32>
    %101 = arith.addf %99, %100 : vector<2x8x8xf32>
    %cst_42 = arith.constant -1.000000e+30 : f32
    %102 = vector.broadcast %cst_42 : f32 to vector<2x8x8xf32>
    %103 = arith.select %9, %102, %101 : vector<2x8x8xi1>, vector<2x8x8xf32>
    %104 = vector.shape_cast %103 : vector<2x8x8xf32> to vector<2x1x8x8xf32>
    %c0_43 = arith.constant 0 : index
    %c3 = arith.constant 3 : index
    %105 = memref.load %arg2[%c0_43, %c3] : memref<4x4xf32, #tpu.memory_space<smem>>
    %c2_44 = arith.constant 2 : index
    %c3_45 = arith.constant 3 : index
    %106 = memref.load %arg2[%c2_44, %c3_45] : memref<4x4xf32, #tpu.memory_space<smem>>
    %107 = vector.broadcast %105 : f32 to vector<2x8x8xf32>
    %108 = arith.mulf %107, %5 : vector<2x8x8xf32>
    %109 = vector.broadcast %106 : f32 to vector<2x8x8xf32>
    %110 = arith.addf %108, %109 : vector<2x8x8xf32>
    %cst_46 = arith.constant -1.000000e+30 : f32
    %111 = vector.broadcast %cst_46 : f32 to vector<2x8x8xf32>
    %112 = arith.select %9, %111, %110 : vector<2x8x8xi1>, vector<2x8x8xf32>
    %113 = vector.shape_cast %112 : vector<2x8x8xf32> to vector<2x1x8x8xf32>
    %114 = tpu.concatenate %86, %95, %104, %113 in 1 : vector<2x1x8x8xf32>, vector<2x1x8x8xf32>, vector<2x1x8x8xf32>, vector<2x1x8x8xf32> -> vector<2x4x8x8xf32>
    %115 = vector.shape_cast %114 : vector<2x4x8x8xf32> to vector<8x8x8xf32>
    %116 = arith.truncf %57 : vector<8x8x8xf32> to vector<8x8x8xbf16>
    %117 = arith.truncf %67 : vector<8x8x8xf32> to vector<8x8x8xbf16>
    "tpu.trace_start"() <{level = 10 : i32, message = "gld,gmd->glm"}> : () -> ()
    %cst_47 = arith.constant dense<0.000000e+00> : vector<8x8x8xf32>
    %118 = tpu.matmul %116, %117, %cst_47 {dimension_numbers = #tpu.dot_dimension_numbers<[2], [2], [1], [1], [0, 0, 0, 1, 1, 1], [0], [0]>} : vector<8x8x8xbf16>, vector<8x8x8xbf16>, vector<8x8x8xf32> -> vector<8x8x8xf32>
    "tpu.trace_stop"() : () -> ()
    %cst_48 = arith.constant 0.353553385 : f32
    %119 = vector.broadcast %cst_48 : f32 to vector<8x8x8xf32>
    %120 = arith.mulf %118, %119 : vector<8x8x8xf32>
    %121 = arith.addf %120, %115 : vector<8x8x8xf32>
    %cst_49 = arith.constant dense<0xFF800000> : vector<8x8xf32>
    %122 = vector.multi_reduction <maximumf>, %121, %cst_49 [2] : vector<8x8x8xf32> to vector<8x8xf32>
    %123 = vector.shape_cast %122 : vector<8x8xf32> to vector<8x8x1xf32>
    %124 = vector.broadcast %123 : vector<8x8x1xf32> to vector<8x8x8xf32>
    %125 = arith.subf %121, %124 : vector<8x8x8xf32>
    %126 = math.exp %125 : vector<8x8x8xf32>
    %cst_50 = arith.constant dense<0.000000e+00> : vector<8x8xf32>
    %127 = vector.multi_reduction <add>, %126, %cst_50 [2] : vector<8x8x8xf32> to vector<8x8xf32>
    %128 = vector.shape_cast %127 : vector<8x8xf32> to vector<8x8x1xf32>
    %129 = vector.broadcast %128 : vector<8x8x1xf32> to vector<8x8x8xf32>
    %130 = arith.divf %126, %129 : vector<8x8x8xf32>
    %131 = arith.truncf %130 : vector<8x8x8xf32> to vector<8x8x8xbf16>
    %132 = arith.truncf %77 : vector<8x8x8xf32> to vector<8x8x8xbf16>
    "tpu.trace_start"() <{level = 10 : i32, message = "glm,gmd->gld"}> : () -> ()
    %cst_51 = arith.constant dense<0.000000e+00> : vector<8x8x8xf32>
    %133 = tpu.matmul %131, %132, %cst_51 {dimension_numbers = #tpu.dot_dimension_numbers<[2], [1], [1], [2], [0, 0, 0, 1, 1, 2], [0], [0]>} : vector<8x8x8xbf16>, vector<8x8x8xbf16>, vector<8x8x8xf32> -> vector<8x8x8xf32>
    "tpu.trace_stop"() : () -> ()
    %134 = vector.shape_cast %133 : vector<8x8x8xf32> to vector<2x4x8x8xf32>
    %135 = vector.extract_strided_slice %134 {offsets = [0, 0, 0, 0], sizes = [2, 1, 8, 8], strides = [1, 1, 1, 1]} : vector<2x4x8x8xf32> to vector<2x1x8x8xf32>
    %136 = vector.shape_cast %135 : vector<2x1x8x8xf32> to vector<2x8x8xf32>
    %137 = vector.extract_strided_slice %134 {offsets = [0, 1, 0, 0], sizes = [2, 1, 8, 8], strides = [1, 1, 1, 1]} : vector<2x4x8x8xf32> to vector<2x1x8x8xf32>
    %138 = vector.shape_cast %137 : vector<2x1x8x8xf32> to vector<2x8x8xf32>
    %139 = vector.extract_strided_slice %134 {offsets = [0, 2, 0, 0], sizes = [2, 1, 8, 8], strides = [1, 1, 1, 1]} : vector<2x4x8x8xf32> to vector<2x1x8x8xf32>
    %140 = vector.shape_cast %139 : vector<2x1x8x8xf32> to vector<2x8x8xf32>
    %141 = vector.extract_strided_slice %134 {offsets = [0, 3, 0, 0], sizes = [2, 1, 8, 8], strides = [1, 1, 1, 1]} : vector<2x4x8x8xf32> to vector<2x1x8x8xf32>
    %142 = vector.shape_cast %141 : vector<2x1x8x8xf32> to vector<2x8x8xf32>
    %143 = tpu.concatenate %136, %138, %140, %142 in 2 : vector<2x8x8xf32>, vector<2x8x8xf32>, vector<2x8x8xf32>, vector<2x8x8xf32> -> vector<2x8x32xf32>
    %144 = vector.shape_cast %143 : vector<2x8x32xf32> to vector<16x32xf32>
    %145 = arith.truncf %144 : vector<16x32xf32> to vector<16x32xbf16>
    %c0_52 = arith.constant 0 : index
    %c0_53 = arith.constant 0 : index
    %c0_54 = arith.constant 0 : index
    %146 = vector.load %arg6[%c0_52, %c0_53, %c0_54] : memref<2x32x32xbf16, #tpu.memory_space<vmem>>, vector<1x32x32xbf16>
    %147 = vector.shape_cast %146 : vector<1x32x32xbf16> to vector<32x32xbf16>
    %cst_55 = arith.constant dense<0.000000e+00> : vector<16x32xf32>
    %148 = tpu.matmul %145, %147, %cst_55 {dimension_numbers = #tpu.dot_dimension_numbers<[1], [0], [0], [1], [0, 0, 1, 1], [], []>} : vector<16x32xbf16>, vector<32x32xbf16>, vector<16x32xf32> -> vector<16x32xf32>
    %c4 = arith.constant 4 : index
    %c0_56 = arith.constant 0 : index
    %149 = vector.load %arg3[%c4, %c0_56] : memref<20x128xf32, #tpu.memory_space<vmem>>, vector<1x32xf32>
    %150 = vector.broadcast %149 : vector<1x32xf32> to vector<16x32xf32>
    %151 = arith.addf %148, %150 : vector<16x32xf32>
    %152 = arith.addf %151, %39 : vector<16x32xf32>
    %c2_57 = arith.constant 2 : index
    %c0_58 = arith.constant 0 : index
    %153 = vector.load %arg3[%c2_57, %c0_58] : memref<20x128xf32, #tpu.memory_space<vmem>>, vector<1x32xf32>
    %c3_59 = arith.constant 3 : index
    %c0_60 = arith.constant 0 : index
    %154 = vector.load %arg3[%c3_59, %c0_60] : memref<20x128xf32, #tpu.memory_space<vmem>>, vector<1x32xf32>
    %cst_61 = arith.constant dense<0.000000e+00> : vector<16xf32>
    %155 = vector.multi_reduction <add>, %152, %cst_61 [1] : vector<16x32xf32> to vector<16xf32>
    %156 = vector.shape_cast %155 : vector<16xf32> to vector<16x1xf32>
    %cst_62 = arith.constant 3.200000e+01 : f32
    %157 = vector.broadcast %cst_62 : f32 to vector<16x1xf32>
    %158 = arith.divf %156, %157 : vector<16x1xf32>
    %159 = vector.broadcast %158 : vector<16x1xf32> to vector<16x32xf32>
    %160 = arith.subf %152, %159 : vector<16x32xf32>
    %161 = arith.mulf %160, %160 : vector<16x32xf32>
    %cst_63 = arith.constant dense<0.000000e+00> : vector<16xf32>
    %162 = vector.multi_reduction <add>, %161, %cst_63 [1] : vector<16x32xf32> to vector<16xf32>
    %163 = vector.shape_cast %162 : vector<16xf32> to vector<16x1xf32>
    %cst_64 = arith.constant 3.200000e+01 : f32
    %164 = vector.broadcast %cst_64 : f32 to vector<16x1xf32>
    %165 = arith.divf %163, %164 : vector<16x1xf32>
    %166 = vector.broadcast %158 : vector<16x1xf32> to vector<16x32xf32>
    %167 = arith.subf %152, %166 : vector<16x32xf32>
    %cst_65 = arith.constant 9.99999974E-6 : f32
    %168 = vector.broadcast %cst_65 : f32 to vector<16x1xf32>
    %169 = arith.addf %165, %168 : vector<16x1xf32>
    %170 = math.rsqrt %169 : vector<16x1xf32>
    %171 = vector.broadcast %170 : vector<16x1xf32> to vector<16x32xf32>
    %172 = arith.mulf %167, %171 : vector<16x32xf32>
    %173 = vector.broadcast %153 : vector<1x32xf32> to vector<16x32xf32>
    %174 = arith.mulf %172, %173 : vector<16x32xf32>
    %175 = vector.broadcast %154 : vector<1x32xf32> to vector<16x32xf32>
    %176 = arith.addf %174, %175 : vector<16x32xf32>
    %177 = arith.truncf %176 : vector<16x32xf32> to vector<16x32xbf16>
    %c0_66 = arith.constant 0 : index
    %c0_67 = arith.constant 0 : index
    %c0_68 = arith.constant 0 : index
    %178 = vector.load %arg7[%c0_66, %c0_67, %c0_68] : memref<2x32x128xbf16, #tpu.memory_space<vmem>>, vector<1x32x128xbf16>
    %179 = vector.shape_cast %178 : vector<1x32x128xbf16> to vector<32x128xbf16>
    %cst_69 = arith.constant dense<0.000000e+00> : vector<16x128xf32>
    %180 = tpu.matmul %177, %179, %cst_69 {dimension_numbers = #tpu.dot_dimension_numbers<[1], [0], [0], [1], [0, 0, 1, 1], [], []>} : vector<16x32xbf16>, vector<32x128xbf16>, vector<16x128xf32> -> vector<16x128xf32>
    %c7 = arith.constant 7 : index
    %c0_70 = arith.constant 0 : index
    %181 = vector.load %arg3[%c7, %c0_70] : memref<20x128xf32, #tpu.memory_space<vmem>>, vector<1x128xf32>
    %182 = vector.broadcast %181 : vector<1x128xf32> to vector<16x128xf32>
    %183 = arith.addf %180, %182 : vector<16x128xf32>
    %cst_71 = arith.constant 0.000000e+00 : f32
    %184 = vector.broadcast %cst_71 : f32 to vector<16x128xf32>
    %185 = arith.maximumf %183, %184 : vector<16x128xf32>
    %186 = arith.truncf %185 : vector<16x128xf32> to vector<16x128xbf16>
    %c0_72 = arith.constant 0 : index
    %c0_73 = arith.constant 0 : index
    %c0_74 = arith.constant 0 : index
    %187 = vector.load %arg8[%c0_72, %c0_73, %c0_74] : memref<2x128x32xbf16, #tpu.memory_space<vmem>>, vector<1x128x32xbf16>
    %188 = vector.shape_cast %187 : vector<1x128x32xbf16> to vector<128x32xbf16>
    %cst_75 = arith.constant dense<0.000000e+00> : vector<16x32xf32>
    %189 = tpu.matmul %186, %188, %cst_75 {dimension_numbers = #tpu.dot_dimension_numbers<[1], [0], [0], [1], [0, 0, 1, 1], [], []>} : vector<16x128xbf16>, vector<128x32xbf16>, vector<16x32xf32> -> vector<16x32xf32>
    %c5 = arith.constant 5 : index
    %c0_76 = arith.constant 0 : index
    %190 = vector.load %arg3[%c5, %c0_76] : memref<20x128xf32, #tpu.memory_space<vmem>>, vector<1x32xf32>
    %191 = vector.broadcast %190 : vector<1x32xf32> to vector<16x32xf32>
    %192 = arith.addf %189, %191 : vector<16x32xf32>
    %cst_77 = arith.constant 0.000000e+00 : f32
    %193 = vector.shape_cast %3 : vector<16x1xi1> to vector<16x1xi1>
    %194 = vector.broadcast %193 : vector<16x1xi1> to vector<16x32xi1>
    %195 = vector.broadcast %cst_77 : f32 to vector<16x32xf32>
    %196 = arith.select %194, %195, %192 : vector<16x32xi1>, vector<16x32xf32>
    %197 = arith.addf %196, %176 : vector<16x32xf32>
    %c8 = arith.constant 8 : index
    %c0_78 = arith.constant 0 : index
    %198 = vector.load %arg3[%c8, %c0_78] : memref<20x128xf32, #tpu.memory_space<vmem>>, vector<1x32xf32>
    %c9 = arith.constant 9 : index
    %c0_79 = arith.constant 0 : index
    %199 = vector.load %arg3[%c9, %c0_79] : memref<20x128xf32, #tpu.memory_space<vmem>>, vector<1x32xf32>
    %cst_80 = arith.constant dense<0.000000e+00> : vector<16xf32>
    %200 = vector.multi_reduction <add>, %197, %cst_80 [1] : vector<16x32xf32> to vector<16xf32>
    %201 = vector.shape_cast %200 : vector<16xf32> to vector<16x1xf32>
    %cst_81 = arith.constant 3.200000e+01 : f32
    %202 = vector.broadcast %cst_81 : f32 to vector<16x1xf32>
    %203 = arith.divf %201, %202 : vector<16x1xf32>
    %204 = vector.broadcast %203 : vector<16x1xf32> to vector<16x32xf32>
    %205 = arith.subf %197, %204 : vector<16x32xf32>
    %206 = arith.mulf %205, %205 : vector<16x32xf32>
    %cst_82 = arith.constant dense<0.000000e+00> : vector<16xf32>
    %207 = vector.multi_reduction <add>, %206, %cst_82 [1] : vector<16x32xf32> to vector<16xf32>
    %208 = vector.shape_cast %207 : vector<16xf32> to vector<16x1xf32>
    %cst_83 = arith.constant 3.200000e+01 : f32
    %209 = vector.broadcast %cst_83 : f32 to vector<16x1xf32>
    %210 = arith.divf %208, %209 : vector<16x1xf32>
    %211 = vector.broadcast %203 : vector<16x1xf32> to vector<16x32xf32>
    %212 = arith.subf %197, %211 : vector<16x32xf32>
    %cst_84 = arith.constant 9.99999974E-6 : f32
    %213 = vector.broadcast %cst_84 : f32 to vector<16x1xf32>
    %214 = arith.addf %210, %213 : vector<16x1xf32>
    %215 = math.rsqrt %214 : vector<16x1xf32>
    %216 = vector.broadcast %215 : vector<16x1xf32> to vector<16x32xf32>
    %217 = arith.mulf %212, %216 : vector<16x32xf32>
    %218 = vector.broadcast %198 : vector<1x32xf32> to vector<16x32xf32>
    %219 = arith.mulf %217, %218 : vector<16x32xf32>
    %220 = vector.broadcast %199 : vector<1x32xf32> to vector<16x32xf32>
    %221 = arith.addf %219, %220 : vector<16x32xf32>
    %222 = arith.truncf %221 : vector<16x32xf32> to vector<16x32xbf16>
    %c1_85 = arith.constant 1 : index
    %c0_86 = arith.constant 0 : index
    %c0_87 = arith.constant 0 : index
    %223 = vector.load %arg5[%c1_85, %c0_86, %c0_87] : memref<2x32x96xbf16, #tpu.memory_space<vmem>>, vector<1x32x96xbf16>
    %224 = vector.shape_cast %223 : vector<1x32x96xbf16> to vector<32x96xbf16>
    %cst_88 = arith.constant dense<0.000000e+00> : vector<16x96xf32>
    %225 = tpu.matmul %222, %224, %cst_88 {dimension_numbers = #tpu.dot_dimension_numbers<[1], [0], [0], [1], [0, 0, 1, 1], [], []>} : vector<16x32xbf16>, vector<32x96xbf16>, vector<16x96xf32> -> vector<16x96xf32>
    %c14 = arith.constant 14 : index
    %c0_89 = arith.constant 0 : index
    %226 = vector.load %arg3[%c14, %c0_89] : memref<20x128xf32, #tpu.memory_space<vmem>>, vector<1x96xf32>
    %227 = vector.broadcast %226 : vector<1x96xf32> to vector<16x96xf32>
    %228 = arith.addf %225, %227 : vector<16x96xf32>
    %229 = vector.shape_cast %228 : vector<16x96xf32> to vector<2x8x96xf32>
    %230 = vector.extract_strided_slice %229 {offsets = [0, 0, 0], sizes = [2, 8, 8], strides = [1, 1, 1]} : vector<2x8x96xf32> to vector<2x8x8xf32>
    %231 = vector.shape_cast %230 : vector<2x8x8xf32> to vector<2x1x8x8xf32>
    %232 = vector.extract_strided_slice %229 {offsets = [0, 0, 8], sizes = [2, 8, 8], strides = [1, 1, 1]} : vector<2x8x96xf32> to vector<2x8x8xf32>
    %233 = vector.shape_cast %232 : vector<2x8x8xf32> to vector<2x1x8x8xf32>
    %234 = vector.extract_strided_slice %229 {offsets = [0, 0, 16], sizes = [2, 8, 8], strides = [1, 1, 1]} : vector<2x8x96xf32> to vector<2x8x8xf32>
    %235 = vector.shape_cast %234 : vector<2x8x8xf32> to vector<2x1x8x8xf32>
    %236 = vector.extract_strided_slice %229 {offsets = [0, 0, 24], sizes = [2, 8, 8], strides = [1, 1, 1]} : vector<2x8x96xf32> to vector<2x8x8xf32>
    %237 = vector.shape_cast %236 : vector<2x8x8xf32> to vector<2x1x8x8xf32>
    %238 = tpu.concatenate %231, %233, %235, %237 in 1 : vector<2x1x8x8xf32>, vector<2x1x8x8xf32>, vector<2x1x8x8xf32>, vector<2x1x8x8xf32> -> vector<2x4x8x8xf32>
    %239 = vector.shape_cast %238 : vector<2x4x8x8xf32> to vector<8x8x8xf32>
    %240 = vector.extract_strided_slice %229 {offsets = [0, 0, 32], sizes = [2, 8, 8], strides = [1, 1, 1]} : vector<2x8x96xf32> to vector<2x8x8xf32>
    %241 = vector.shape_cast %240 : vector<2x8x8xf32> to vector<2x1x8x8xf32>
    %242 = vector.extract_strided_slice %229 {offsets = [0, 0, 40], sizes = [2, 8, 8], strides = [1, 1, 1]} : vector<2x8x96xf32> to vector<2x8x8xf32>
    %243 = vector.shape_cast %242 : vector<2x8x8xf32> to vector<2x1x8x8xf32>
    %244 = vector.extract_strided_slice %229 {offsets = [0, 0, 48], sizes = [2, 8, 8], strides = [1, 1, 1]} : vector<2x8x96xf32> to vector<2x8x8xf32>
    %245 = vector.shape_cast %244 : vector<2x8x8xf32> to vector<2x1x8x8xf32>
    %246 = vector.extract_strided_slice %229 {offsets = [0, 0, 56], sizes = [2, 8, 8], strides = [1, 1, 1]} : vector<2x8x96xf32> to vector<2x8x8xf32>
    %247 = vector.shape_cast %246 : vector<2x8x8xf32> to vector<2x1x8x8xf32>
    %248 = tpu.concatenate %241, %243, %245, %247 in 1 : vector<2x1x8x8xf32>, vector<2x1x8x8xf32>, vector<2x1x8x8xf32>, vector<2x1x8x8xf32> -> vector<2x4x8x8xf32>
    %249 = vector.shape_cast %248 : vector<2x4x8x8xf32> to vector<8x8x8xf32>
    %250 = vector.extract_strided_slice %229 {offsets = [0, 0, 64], sizes = [2, 8, 8], strides = [1, 1, 1]} : vector<2x8x96xf32> to vector<2x8x8xf32>
    %251 = vector.shape_cast %250 : vector<2x8x8xf32> to vector<2x1x8x8xf32>
    %252 = vector.extract_strided_slice %229 {offsets = [0, 0, 72], sizes = [2, 8, 8], strides = [1, 1, 1]} : vector<2x8x96xf32> to vector<2x8x8xf32>
    %253 = vector.shape_cast %252 : vector<2x8x8xf32> to vector<2x1x8x8xf32>
    %254 = vector.extract_strided_slice %229 {offsets = [0, 0, 80], sizes = [2, 8, 8], strides = [1, 1, 1]} : vector<2x8x96xf32> to vector<2x8x8xf32>
    %255 = vector.shape_cast %254 : vector<2x8x8xf32> to vector<2x1x8x8xf32>
    %256 = vector.extract_strided_slice %229 {offsets = [0, 0, 88], sizes = [2, 8, 8], strides = [1, 1, 1]} : vector<2x8x96xf32> to vector<2x8x8xf32>
    %257 = vector.shape_cast %256 : vector<2x8x8xf32> to vector<2x1x8x8xf32>
    %258 = tpu.concatenate %251, %253, %255, %257 in 1 : vector<2x1x8x8xf32>, vector<2x1x8x8xf32>, vector<2x1x8x8xf32>, vector<2x1x8x8xf32> -> vector<2x4x8x8xf32>
    %259 = vector.shape_cast %258 : vector<2x4x8x8xf32> to vector<8x8x8xf32>
    %c1_90 = arith.constant 1 : index
    %c0_91 = arith.constant 0 : index
    %260 = memref.load %arg2[%c1_90, %c0_91] : memref<4x4xf32, #tpu.memory_space<smem>>
    %c3_92 = arith.constant 3 : index
    %c0_93 = arith.constant 0 : index
    %261 = memref.load %arg2[%c3_92, %c0_93] : memref<4x4xf32, #tpu.memory_space<smem>>
    %262 = vector.broadcast %260 : f32 to vector<2x8x8xf32>
    %263 = arith.mulf %262, %5 : vector<2x8x8xf32>
    %264 = vector.broadcast %261 : f32 to vector<2x8x8xf32>
    %265 = arith.addf %263, %264 : vector<2x8x8xf32>
    %cst_94 = arith.constant -1.000000e+30 : f32
    %266 = vector.broadcast %cst_94 : f32 to vector<2x8x8xf32>
    %267 = arith.select %9, %266, %265 : vector<2x8x8xi1>, vector<2x8x8xf32>
    %268 = vector.shape_cast %267 : vector<2x8x8xf32> to vector<2x1x8x8xf32>
    %c1_95 = arith.constant 1 : index
    %c1_96 = arith.constant 1 : index
    %269 = memref.load %arg2[%c1_95, %c1_96] : memref<4x4xf32, #tpu.memory_space<smem>>
    %c3_97 = arith.constant 3 : index
    %c1_98 = arith.constant 1 : index
    %270 = memref.load %arg2[%c3_97, %c1_98] : memref<4x4xf32, #tpu.memory_space<smem>>
    %271 = vector.broadcast %269 : f32 to vector<2x8x8xf32>
    %272 = arith.mulf %271, %5 : vector<2x8x8xf32>
    %273 = vector.broadcast %270 : f32 to vector<2x8x8xf32>
    %274 = arith.addf %272, %273 : vector<2x8x8xf32>
    %cst_99 = arith.constant -1.000000e+30 : f32
    %275 = vector.broadcast %cst_99 : f32 to vector<2x8x8xf32>
    %276 = arith.select %9, %275, %274 : vector<2x8x8xi1>, vector<2x8x8xf32>
    %277 = vector.shape_cast %276 : vector<2x8x8xf32> to vector<2x1x8x8xf32>
    %c1_100 = arith.constant 1 : index
    %c2_101 = arith.constant 2 : index
    %278 = memref.load %arg2[%c1_100, %c2_101] : memref<4x4xf32, #tpu.memory_space<smem>>
    %c3_102 = arith.constant 3 : index
    %c2_103 = arith.constant 2 : index
    %279 = memref.load %arg2[%c3_102, %c2_103] : memref<4x4xf32, #tpu.memory_space<smem>>
    %280 = vector.broadcast %278 : f32 to vector<2x8x8xf32>
    %281 = arith.mulf %280, %5 : vector<2x8x8xf32>
    %282 = vector.broadcast %279 : f32 to vector<2x8x8xf32>
    %283 = arith.addf %281, %282 : vector<2x8x8xf32>
    %cst_104 = arith.constant -1.000000e+30 : f32
    %284 = vector.broadcast %cst_104 : f32 to vector<2x8x8xf32>
    %285 = arith.select %9, %284, %283 : vector<2x8x8xi1>, vector<2x8x8xf32>
    %286 = vector.shape_cast %285 : vector<2x8x8xf32> to vector<2x1x8x8xf32>
    %c1_105 = arith.constant 1 : index
    %c3_106 = arith.constant 3 : index
    %287 = memref.load %arg2[%c1_105, %c3_106] : memref<4x4xf32, #tpu.memory_space<smem>>
    %c3_107 = arith.constant 3 : index
    %c3_108 = arith.constant 3 : index
    %288 = memref.load %arg2[%c3_107, %c3_108] : memref<4x4xf32, #tpu.memory_space<smem>>
    %289 = vector.broadcast %287 : f32 to vector<2x8x8xf32>
    %290 = arith.mulf %289, %5 : vector<2x8x8xf32>
    %291 = vector.broadcast %288 : f32 to vector<2x8x8xf32>
    %292 = arith.addf %290, %291 : vector<2x8x8xf32>
    %cst_109 = arith.constant -1.000000e+30 : f32
    %293 = vector.broadcast %cst_109 : f32 to vector<2x8x8xf32>
    %294 = arith.select %9, %293, %292 : vector<2x8x8xi1>, vector<2x8x8xf32>
    %295 = vector.shape_cast %294 : vector<2x8x8xf32> to vector<2x1x8x8xf32>
    %296 = tpu.concatenate %268, %277, %286, %295 in 1 : vector<2x1x8x8xf32>, vector<2x1x8x8xf32>, vector<2x1x8x8xf32>, vector<2x1x8x8xf32> -> vector<2x4x8x8xf32>
    %297 = vector.shape_cast %296 : vector<2x4x8x8xf32> to vector<8x8x8xf32>
    %298 = arith.truncf %239 : vector<8x8x8xf32> to vector<8x8x8xbf16>
    %299 = arith.truncf %249 : vector<8x8x8xf32> to vector<8x8x8xbf16>
    "tpu.trace_start"() <{level = 10 : i32, message = "gld,gmd->glm"}> : () -> ()
    %cst_110 = arith.constant dense<0.000000e+00> : vector<8x8x8xf32>
    %300 = tpu.matmul %298, %299, %cst_110 {dimension_numbers = #tpu.dot_dimension_numbers<[2], [2], [1], [1], [0, 0, 0, 1, 1, 1], [0], [0]>} : vector<8x8x8xbf16>, vector<8x8x8xbf16>, vector<8x8x8xf32> -> vector<8x8x8xf32>
    "tpu.trace_stop"() : () -> ()
    %cst_111 = arith.constant 0.353553385 : f32
    %301 = vector.broadcast %cst_111 : f32 to vector<8x8x8xf32>
    %302 = arith.mulf %300, %301 : vector<8x8x8xf32>
    %303 = arith.addf %302, %297 : vector<8x8x8xf32>
    %cst_112 = arith.constant dense<0xFF800000> : vector<8x8xf32>
    %304 = vector.multi_reduction <maximumf>, %303, %cst_112 [2] : vector<8x8x8xf32> to vector<8x8xf32>
    %305 = vector.shape_cast %304 : vector<8x8xf32> to vector<8x8x1xf32>
    %306 = vector.broadcast %305 : vector<8x8x1xf32> to vector<8x8x8xf32>
    %307 = arith.subf %303, %306 : vector<8x8x8xf32>
    %308 = math.exp %307 : vector<8x8x8xf32>
    %cst_113 = arith.constant dense<0.000000e+00> : vector<8x8xf32>
    %309 = vector.multi_reduction <add>, %308, %cst_113 [2] : vector<8x8x8xf32> to vector<8x8xf32>
    %310 = vector.shape_cast %309 : vector<8x8xf32> to vector<8x8x1xf32>
    %311 = vector.broadcast %310 : vector<8x8x1xf32> to vector<8x8x8xf32>
    %312 = arith.divf %308, %311 : vector<8x8x8xf32>
    %313 = arith.truncf %312 : vector<8x8x8xf32> to vector<8x8x8xbf16>
    %314 = arith.truncf %259 : vector<8x8x8xf32> to vector<8x8x8xbf16>
    "tpu.trace_start"() <{level = 10 : i32, message = "glm,gmd->gld"}> : () -> ()
    %cst_114 = arith.constant dense<0.000000e+00> : vector<8x8x8xf32>
    %315 = tpu.matmul %313, %314, %cst_114 {dimension_numbers = #tpu.dot_dimension_numbers<[2], [1], [1], [2], [0, 0, 0, 1, 1, 2], [0], [0]>} : vector<8x8x8xbf16>, vector<8x8x8xbf16>, vector<8x8x8xf32> -> vector<8x8x8xf32>
    "tpu.trace_stop"() : () -> ()
    %316 = vector.shape_cast %315 : vector<8x8x8xf32> to vector<2x4x8x8xf32>
    %317 = vector.extract_strided_slice %316 {offsets = [0, 0, 0, 0], sizes = [2, 1, 8, 8], strides = [1, 1, 1, 1]} : vector<2x4x8x8xf32> to vector<2x1x8x8xf32>
    %318 = vector.shape_cast %317 : vector<2x1x8x8xf32> to vector<2x8x8xf32>
    %319 = vector.extract_strided_slice %316 {offsets = [0, 1, 0, 0], sizes = [2, 1, 8, 8], strides = [1, 1, 1, 1]} : vector<2x4x8x8xf32> to vector<2x1x8x8xf32>
    %320 = vector.shape_cast %319 : vector<2x1x8x8xf32> to vector<2x8x8xf32>
    %321 = vector.extract_strided_slice %316 {offsets = [0, 2, 0, 0], sizes = [2, 1, 8, 8], strides = [1, 1, 1, 1]} : vector<2x4x8x8xf32> to vector<2x1x8x8xf32>
    %322 = vector.shape_cast %321 : vector<2x1x8x8xf32> to vector<2x8x8xf32>
    %323 = vector.extract_strided_slice %316 {offsets = [0, 3, 0, 0], sizes = [2, 1, 8, 8], strides = [1, 1, 1, 1]} : vector<2x4x8x8xf32> to vector<2x1x8x8xf32>
    %324 = vector.shape_cast %323 : vector<2x1x8x8xf32> to vector<2x8x8xf32>
    %325 = tpu.concatenate %318, %320, %322, %324 in 2 : vector<2x8x8xf32>, vector<2x8x8xf32>, vector<2x8x8xf32>, vector<2x8x8xf32> -> vector<2x8x32xf32>
    %326 = vector.shape_cast %325 : vector<2x8x32xf32> to vector<16x32xf32>
    %327 = arith.truncf %326 : vector<16x32xf32> to vector<16x32xbf16>
    %c1_115 = arith.constant 1 : index
    %c0_116 = arith.constant 0 : index
    %c0_117 = arith.constant 0 : index
    %328 = vector.load %arg6[%c1_115, %c0_116, %c0_117] : memref<2x32x32xbf16, #tpu.memory_space<vmem>>, vector<1x32x32xbf16>
    %329 = vector.shape_cast %328 : vector<1x32x32xbf16> to vector<32x32xbf16>
    %cst_118 = arith.constant dense<0.000000e+00> : vector<16x32xf32>
    %330 = tpu.matmul %327, %329, %cst_118 {dimension_numbers = #tpu.dot_dimension_numbers<[1], [0], [0], [1], [0, 0, 1, 1], [], []>} : vector<16x32xbf16>, vector<32x32xbf16>, vector<16x32xf32> -> vector<16x32xf32>
    %c12 = arith.constant 12 : index
    %c0_119 = arith.constant 0 : index
    %331 = vector.load %arg3[%c12, %c0_119] : memref<20x128xf32, #tpu.memory_space<vmem>>, vector<1x32xf32>
    %332 = vector.broadcast %331 : vector<1x32xf32> to vector<16x32xf32>
    %333 = arith.addf %330, %332 : vector<16x32xf32>
    %334 = arith.addf %333, %221 : vector<16x32xf32>
    %c10 = arith.constant 10 : index
    %c0_120 = arith.constant 0 : index
    %335 = vector.load %arg3[%c10, %c0_120] : memref<20x128xf32, #tpu.memory_space<vmem>>, vector<1x32xf32>
    %c11 = arith.constant 11 : index
    %c0_121 = arith.constant 0 : index
    %336 = vector.load %arg3[%c11, %c0_121] : memref<20x128xf32, #tpu.memory_space<vmem>>, vector<1x32xf32>
    %cst_122 = arith.constant dense<0.000000e+00> : vector<16xf32>
    %337 = vector.multi_reduction <add>, %334, %cst_122 [1] : vector<16x32xf32> to vector<16xf32>
    %338 = vector.shape_cast %337 : vector<16xf32> to vector<16x1xf32>
    %cst_123 = arith.constant 3.200000e+01 : f32
    %339 = vector.broadcast %cst_123 : f32 to vector<16x1xf32>
    %340 = arith.divf %338, %339 : vector<16x1xf32>
    %341 = vector.broadcast %340 : vector<16x1xf32> to vector<16x32xf32>
    %342 = arith.subf %334, %341 : vector<16x32xf32>
    %343 = arith.mulf %342, %342 : vector<16x32xf32>
    %cst_124 = arith.constant dense<0.000000e+00> : vector<16xf32>
    %344 = vector.multi_reduction <add>, %343, %cst_124 [1] : vector<16x32xf32> to vector<16xf32>
    %345 = vector.shape_cast %344 : vector<16xf32> to vector<16x1xf32>
    %cst_125 = arith.constant 3.200000e+01 : f32
    %346 = vector.broadcast %cst_125 : f32 to vector<16x1xf32>
    %347 = arith.divf %345, %346 : vector<16x1xf32>
    %348 = vector.broadcast %340 : vector<16x1xf32> to vector<16x32xf32>
    %349 = arith.subf %334, %348 : vector<16x32xf32>
    %cst_126 = arith.constant 9.99999974E-6 : f32
    %350 = vector.broadcast %cst_126 : f32 to vector<16x1xf32>
    %351 = arith.addf %347, %350 : vector<16x1xf32>
    %352 = math.rsqrt %351 : vector<16x1xf32>
    %353 = vector.broadcast %352 : vector<16x1xf32> to vector<16x32xf32>
    %354 = arith.mulf %349, %353 : vector<16x32xf32>
    %355 = vector.broadcast %335 : vector<1x32xf32> to vector<16x32xf32>
    %356 = arith.mulf %354, %355 : vector<16x32xf32>
    %357 = vector.broadcast %336 : vector<1x32xf32> to vector<16x32xf32>
    %358 = arith.addf %356, %357 : vector<16x32xf32>
    %359 = arith.truncf %358 : vector<16x32xf32> to vector<16x32xbf16>
    %c1_127 = arith.constant 1 : index
    %c0_128 = arith.constant 0 : index
    %c0_129 = arith.constant 0 : index
    %360 = vector.load %arg7[%c1_127, %c0_128, %c0_129] : memref<2x32x128xbf16, #tpu.memory_space<vmem>>, vector<1x32x128xbf16>
    %361 = vector.shape_cast %360 : vector<1x32x128xbf16> to vector<32x128xbf16>
    %cst_130 = arith.constant dense<0.000000e+00> : vector<16x128xf32>
    %362 = tpu.matmul %359, %361, %cst_130 {dimension_numbers = #tpu.dot_dimension_numbers<[1], [0], [0], [1], [0, 0, 1, 1], [], []>} : vector<16x32xbf16>, vector<32x128xbf16>, vector<16x128xf32> -> vector<16x128xf32>
    %c15 = arith.constant 15 : index
    %c0_131 = arith.constant 0 : index
    %363 = vector.load %arg3[%c15, %c0_131] : memref<20x128xf32, #tpu.memory_space<vmem>>, vector<1x128xf32>
    %364 = vector.broadcast %363 : vector<1x128xf32> to vector<16x128xf32>
    %365 = arith.addf %362, %364 : vector<16x128xf32>
    %cst_132 = arith.constant 0.000000e+00 : f32
    %366 = vector.broadcast %cst_132 : f32 to vector<16x128xf32>
    %367 = arith.maximumf %365, %366 : vector<16x128xf32>
    %368 = arith.truncf %367 : vector<16x128xf32> to vector<16x128xbf16>
    %c1_133 = arith.constant 1 : index
    %c0_134 = arith.constant 0 : index
    %c0_135 = arith.constant 0 : index
    %369 = vector.load %arg8[%c1_133, %c0_134, %c0_135] : memref<2x128x32xbf16, #tpu.memory_space<vmem>>, vector<1x128x32xbf16>
    %370 = vector.shape_cast %369 : vector<1x128x32xbf16> to vector<128x32xbf16>
    %cst_136 = arith.constant dense<0.000000e+00> : vector<16x32xf32>
    %371 = tpu.matmul %368, %370, %cst_136 {dimension_numbers = #tpu.dot_dimension_numbers<[1], [0], [0], [1], [0, 0, 1, 1], [], []>} : vector<16x128xbf16>, vector<128x32xbf16>, vector<16x32xf32> -> vector<16x32xf32>
    %c13 = arith.constant 13 : index
    %c0_137 = arith.constant 0 : index
    %372 = vector.load %arg3[%c13, %c0_137] : memref<20x128xf32, #tpu.memory_space<vmem>>, vector<1x32xf32>
    %373 = vector.broadcast %372 : vector<1x32xf32> to vector<16x32xf32>
    %374 = arith.addf %371, %373 : vector<16x32xf32>
    %cst_138 = arith.constant 0.000000e+00 : f32
    %375 = vector.shape_cast %3 : vector<16x1xi1> to vector<16x1xi1>
    %376 = vector.broadcast %375 : vector<16x1xi1> to vector<16x32xi1>
    %377 = vector.broadcast %cst_138 : f32 to vector<16x32xf32>
    %378 = arith.select %376, %377, %374 : vector<16x32xi1>, vector<16x32xf32>
    %379 = arith.addf %378, %358 : vector<16x32xf32>
    %c17 = arith.constant 17 : index
    %c0_139 = arith.constant 0 : index
    %380 = vector.load %arg3[%c17, %c0_139] : memref<20x128xf32, #tpu.memory_space<vmem>>, vector<1x32xf32>
    %c18 = arith.constant 18 : index
    %c0_140 = arith.constant 0 : index
    %381 = vector.load %arg3[%c18, %c0_140] : memref<20x128xf32, #tpu.memory_space<vmem>>, vector<1x32xf32>
    %cst_141 = arith.constant dense<0.000000e+00> : vector<16xf32>
    %382 = vector.multi_reduction <add>, %379, %cst_141 [1] : vector<16x32xf32> to vector<16xf32>
    %383 = vector.shape_cast %382 : vector<16xf32> to vector<16x1xf32>
    %cst_142 = arith.constant 3.200000e+01 : f32
    %384 = vector.broadcast %cst_142 : f32 to vector<16x1xf32>
    %385 = arith.divf %383, %384 : vector<16x1xf32>
    %386 = vector.broadcast %385 : vector<16x1xf32> to vector<16x32xf32>
    %387 = arith.subf %379, %386 : vector<16x32xf32>
    %388 = arith.mulf %387, %387 : vector<16x32xf32>
    %cst_143 = arith.constant dense<0.000000e+00> : vector<16xf32>
    %389 = vector.multi_reduction <add>, %388, %cst_143 [1] : vector<16x32xf32> to vector<16xf32>
    %390 = vector.shape_cast %389 : vector<16xf32> to vector<16x1xf32>
    %cst_144 = arith.constant 3.200000e+01 : f32
    %391 = vector.broadcast %cst_144 : f32 to vector<16x1xf32>
    %392 = arith.divf %390, %391 : vector<16x1xf32>
    %393 = vector.broadcast %385 : vector<16x1xf32> to vector<16x32xf32>
    %394 = arith.subf %379, %393 : vector<16x32xf32>
    %cst_145 = arith.constant 9.99999974E-6 : f32
    %395 = vector.broadcast %cst_145 : f32 to vector<16x1xf32>
    %396 = arith.addf %392, %395 : vector<16x1xf32>
    %397 = math.rsqrt %396 : vector<16x1xf32>
    %398 = vector.broadcast %397 : vector<16x1xf32> to vector<16x32xf32>
    %399 = arith.mulf %394, %398 : vector<16x32xf32>
    %400 = vector.broadcast %380 : vector<1x32xf32> to vector<16x32xf32>
    %401 = arith.mulf %399, %400 : vector<16x32xf32>
    %402 = vector.broadcast %381 : vector<1x32xf32> to vector<16x32xf32>
    %403 = arith.addf %401, %402 : vector<16x32xf32>
    %404 = vector.extract_strided_slice %403 {offsets = [0, 0], sizes = [8, 32], strides = [1, 1]} : vector<16x32xf32> to vector<8x32xf32>
    %cst_146 = arith.constant dense<0.000000e+00> : vector<32xf32>
    %405 = vector.multi_reduction <add>, %404, %cst_146 [0] : vector<8x32xf32> to vector<32xf32>
    %406 = vector.shape_cast %405 : vector<32xf32> to vector<1x32xf32>
    %cst_147 = arith.constant 8.000000e+00 : f32
    %407 = vector.broadcast %cst_147 : f32 to vector<1x32xf32>
    %408 = arith.divf %406, %407 : vector<1x32xf32>
    %409 = vector.extract_strided_slice %403 {offsets = [8, 0], sizes = [8, 32], strides = [1, 1]} : vector<16x32xf32> to vector<8x32xf32>
    %cst_148 = arith.constant dense<0.000000e+00> : vector<32xf32>
    %410 = vector.multi_reduction <add>, %409, %cst_148 [0] : vector<8x32xf32> to vector<32xf32>
    %411 = vector.shape_cast %410 : vector<32xf32> to vector<1x32xf32>
    %cst_149 = arith.constant 8.000000e+00 : f32
    %412 = vector.broadcast %cst_149 : f32 to vector<1x32xf32>
    %413 = arith.divf %411, %412 : vector<1x32xf32>
    %414 = tpu.concatenate %408, %413 in 0 : vector<1x32xf32>, vector<1x32xf32> -> vector<2x32xf32>
    %415 = arith.truncf %414 : vector<2x32xf32> to vector<2x32xbf16>
    %c0_150 = arith.constant 0 : index
    %c0_151 = arith.constant 0 : index
    %416 = vector.load %arg9[%c0_150, %c0_151] : memref<32x128xbf16, #tpu.memory_space<vmem>>, vector<32x128xbf16>
    %cst_152 = arith.constant dense<0.000000e+00> : vector<2x128xf32>
    %417 = tpu.matmul %415, %416, %cst_152 {dimension_numbers = #tpu.dot_dimension_numbers<[1], [0], [0], [1], [0, 0, 1, 1], [], []>} : vector<2x32xbf16>, vector<32x128xbf16>, vector<2x128xf32> -> vector<2x128xf32>
    %c19 = arith.constant 19 : index
    %c0_153 = arith.constant 0 : index
    %418 = vector.load %arg3[%c19, %c0_153] : memref<20x128xf32, #tpu.memory_space<vmem>>, vector<1x128xf32>
    %419 = vector.broadcast %418 : vector<1x128xf32> to vector<2x128xf32>
    %420 = arith.addf %417, %419 : vector<2x128xf32>
    %c0_154 = arith.constant 0 : index
    %c0_155 = arith.constant 0 : index
    %421 = vector.load %arg10[%c0_154, %c0_155] : memref<2x128xf32, #tpu.memory_space<vmem>>, vector<2x128xf32>
    tpu.vector_store %arg10[%c0_154, %c0_155], %420 {strides = array<i32>} : memref<2x128xf32, #tpu.memory_space<vmem>>, vector<2x128xf32>,
    return
  }
}

</mosaic_0001>

<llo_original>
// kernel: transformer_forward.1
$region0: #{transformer_forward.1}
  #allocation0 [shape = 'u32[]', space=smem, size = 0x4, offset = 0x4, fixed_abs, tag = 'smem constant byte address 0x4 - core index']
  #allocation1 [shape = 'u32[144,128]{1,0:T(1,128)}', space=vmem, size = 0x12000, scoped, tag = 'internal scratch']
  %s0 = inlined_call_operand.vmem [shape: f32[16,7], index: 0, kind: input, shape index: {}]
  %s1 = inlined_call_operand.vmem [shape: f32[2,2,8,8], index: 1, kind: input, shape index: {}]
  %s2 = inlined_call_operand.vmem [shape: f32[4,4], index: 2, kind: input, shape index: {}]
  %s3 = inlined_call_operand.vmem [shape: f32[20,128], index: 3, kind: input, shape index: {}]
  %s4 = inlined_call_operand.vmem [shape: bf16[6,32], index: 4, kind: input, shape index: {}]
  %s5 = inlined_call_operand.vmem [shape: bf16[2,32,96], index: 5, kind: input, shape index: {}]
  %s6 = inlined_call_operand.vmem [shape: bf16[2,32,32], index: 6, kind: input, shape index: {}]
  %s7 = inlined_call_operand.vmem [shape: bf16[2,32,128], index: 7, kind: input, shape index: {}]
  %s8 = inlined_call_operand.vmem [shape: bf16[2,128,32], index: 8, kind: input, shape index: {}]
  %s9 = inlined_call_operand.vmem [shape: bf16[32,128], index: 9, kind: input, shape index: {}]
  %s10 = inlined_call_operand.hbm [shape: f32[2,128], index: 10, kind: output, shape index: {}]
  %s11 = sld [smem:[#allocation0]]
  $region54: #{transformer_forward.1} parent=0
    _
  %s13 = ssub.s32 1, %s11
  %s14 = scalar_select 0, %s13, %s11
  $region1: #{transformer_forward.1} parent=0
    #allocation2 [shape = 'u8[2048]{0}', space=smem, size = 0x800, scoped, tag = 'input window, operand 2, single buffered']
    #allocation3 [shape = 's32[1]{0}', space=sflag, size = 0x4, scoped, tag = 'scoped memory for transformer_forward.1']
    #allocation4 [shape = 's32[1]{0}', space=sflag, size = 0x4, scoped, tag = 'scoped memory for transformer_forward.1']
    #allocation5 [shape = 'u8[1024]{0}', space=vmem, size = 0x400, scoped, tag = 'output window, operand 0, single buffered']
    %15 = vsyncpa [#allocation4], 0
    %16 = vsyncpa [#allocation3], 0
    // Predicated region
    $region2: #{transformer_forward.1} parent=1 // pred_check
      _
    $region3: #{transformer_forward.1} parent=1 // pred_check_branch
      %18 = sbr.rel (0) target = $region5
    $region4: #{transformer_forward.1} parent=1 // pred_region
      _
    $region5: #{transformer_forward.1} parent=1 // pred_fallthru
      _
    // Predicated region
    $region6: #{transformer_forward.1} parent=1 // pred_check
      _
    $region7: #{transformer_forward.1} parent=1 // pred_check_branch
      %20 = sbr.rel (0) target = $region9
    $region8: #{transformer_forward.1} parent=1 // pred_region
      _
    $region9: #{transformer_forward.1} parent=1 // pred_fallthru
      _
    // Predicated region
    $region10: #{transformer_forward.1} parent=1 // pred_check
      _
    $region11: #{transformer_forward.1} parent=1 // pred_check_branch
      %22 = sbr.rel (0) target = $region13
    $region12: #{transformer_forward.1} parent=1 // pred_region
      %s24 = ssub.s32 64, 64
      %25 = vsyncadd [#allocation4], %s24
      %s27 = sshll.u32 %s2, 4
      %s28 = int_to_ptr.vmem [resolvable:$true] %s27
      %30 = dma.vmem_to_smem %s28, 64, [#allocation2], [#allocation4]
    $region13: #{transformer_forward.1} parent=1 // pred_fallthru
      _
    // Predicated region
    $region14: #{transformer_forward.1} parent=1 // pred_check
      _
    $region15: #{transformer_forward.1} parent=1 // pred_check_branch
      %32 = sbr.rel (0) target = $region17
    $region16: #{transformer_forward.1} parent=1 // pred_region
      _
    $region17: #{transformer_forward.1} parent=1 // pred_fallthru
      _
    // Predicated region
    $region18: #{transformer_forward.1} parent=1 // pred_check
      _
    $region19: #{transformer_forward.1} parent=1 // pred_check_branch
      %34 = sbr.rel (0) target = $region21
    $region20: #{transformer_forward.1} parent=1 // pred_region
      _
    $region21: #{transformer_forward.1} parent=1 // pred_fallthru
      _
    // Predicated region
    $region22: #{transformer_forward.1} parent=1 // pred_check
      _
    $region23: #{transformer_forward.1} parent=1 // pred_check_branch
      %36 = sbr.rel (0) target = $region25
    $region24: #{transformer_forward.1} parent=1 // pred_region
      _
    $region25: #{transformer_forward.1} parent=1 // pred_fallthru
      _
    // Predicated region
    $region26: #{transformer_forward.1} parent=1 // pred_check
      _
    $region27: #{transformer_forward.1} parent=1 // pred_check_branch
      %38 = sbr.rel (0) target = $region29
    $region28: #{transformer_forward.1} parent=1 // pred_region
      _
    $region29: #{transformer_forward.1} parent=1 // pred_fallthru
      _
    // Predicated region
    $region30: #{transformer_forward.1} parent=1 // pred_check
      _
    $region31: #{transformer_forward.1} parent=1 // pred_check_branch
      %40 = sbr.rel (0) target = $region33
    $region32: #{transformer_forward.1} parent=1 // pred_region
      _
    $region33: #{transformer_forward.1} parent=1 // pred_fallthru
      _
    // Predicated region
    $region34: #{transformer_forward.1} parent=1 // pred_check
      _
    $region35: #{transformer_forward.1} parent=1 // pred_check_branch
      %42 = sbr.rel (0) target = $region37
    $region36: #{transformer_forward.1} parent=1 // pred_region
      _
    $region37: #{transformer_forward.1} parent=1 // pred_fallthru
      _
    // Predicated region
    $region38: #{transformer_forward.1} parent=1 // pred_check
      _
    $region39: #{transformer_forward.1} parent=1 // pred_check_branch
      %44 = sbr.rel (0) target = $region41
    $region40: #{transformer_forward.1} parent=1 // pred_region
      _
    $region41: #{transformer_forward.1} parent=1 // pred_fallthru
      _
    // Predicated region
    $region42: #{transformer_forward.1} parent=1 // pred_check
      _
    $region43: #{transformer_forward.1} parent=1 // pred_check_branch
      %46 = sbr.rel (0) target = $region45
    $region44: #{transformer_forward.1} parent=1 // pred_region
      %47 = dma.done [#allocation4], 64
    $region45: #{transformer_forward.1} parent=1 // pred_fallthru
      _
    %48 = sfence
    %v50 = vld [vmem:[%s0] sm:$0xff]
    %v51 = vld [vmem:[%s0 + $0x8] sm:$0xff]
    %vm52 = vcmp.gt.f32.partialorder %v50, 0.5
    %vm53 = vcmp.gt.f32.partialorder %v51, 0.5
    %v54 = vld [vmem:[%s1] sm:$0xff]
    %v55 = vld [vmem:[%s1 + $0x8] sm:$0xff]
    %s56 = scalar_lea.vmem %s1, 16
    %v57 = vld [vmem:[%s56] sm:$0xff]
    %v58 = vld [vmem:[%s56 + $0x8] sm:$0xff]
    %vm59 = vcmp.gt.f32.partialorder %v57, 0.5
    %vm60 = vcmp.gt.f32.partialorder %v58, 0.5
    %v61 = vpack.c.bf16 %v51, %v50
    %v62 = vld [vmem:[%s4] sm:$0x7]
    %v63 = vld [vmem:[%s3 + $0x10] sm:$0x1]
    %v64 = vlaneseq
    %v65 = vshrl.u32 %v64, 7
    %v66 = vsub.s32 0, %v65
    %v67 = vrot.slane %v63, %v66
    %vm68 = vcmask 48128
    %v70 = vsel %vm68, %v61, 0
    %vm72 = vcmask 1042432
    %v74 = vsel %vm72, %v62, 0
    %76 = vmatprep.subr.bf16.mxu0 0
    %77 = vmatpush1.bf16.msra.mxu0 %v74
    %78 = vmatprep.subr.bf16.mxu0 0
    %79 = vmatpush1.bf16.msra.mxu0 0
    %80 = vmatprep.subr.bf16.mxu0 0
    %81 = vmatpush1.bf16.msra.mxu0 0
    %82 = vmatprep.subr.bf16.mxu0 0
    %83 = vmatpush1.bf16.msra.mxu0 0
    %84 = vmatprep.subr.bf16.mxu0 0
    %85 = vmatpush1.bf16.msra.mxu0 0
    %86 = vmatprep.subr.bf16.mxu0 0
    %87 = vmatpush1.bf16.msra.mxu0 0
    %88 = vmatprep.subr.bf16.mxu0 0
    %89 = vmatpush1.bf16.msra.mxu0 0
    %90 = vmatprep.subr.bf16.mxu0 0
    %91 = vmatpush1.bf16.msra.mxu0 0
    %92 = vmatprep.subr.bf16.mxu0 0
    %93 = vmatpush1.bf16.msra.mxu0 0
    %94 = vmatprep.subr.bf16.mxu0 0
    %95 = vmatpush1.bf16.msra.mxu0 0
    %96 = vmatprep.subr.bf16.mxu0 0
    %97 = vmatpush1.bf16.msra.mxu0 0
    %98 = vmatprep.subr.bf16.mxu0 0
    %99 = vmatpush1.bf16.msra.mxu0 0
    %100 = vmatprep.subr.bf16.mxu0 0
    %101 = vmatpush1.bf16.msra.mxu0 0
    %102 = vmatprep.subr.bf16.mxu0 0
    %103 = vmatpush1.bf16.msra.mxu0 0
    %104 = vmatprep.subr.bf16.mxu0 0
    %105 = vmatpush1.bf16.msra.mxu0 0
    %106 = vmatprep.subr.bf16.mxu0 0
    %107 = vmatpush1.bf16.msra.mxu0 0
    %108 = vmatprep.mubr.bf16.mxu0 0
    %109 = vmatmul.mubr.bf16.gmra.mrb[0].mxu0 %v70
    %v110 = vpop.f32.mrb[0].mxu0
    %v111 = vadd.f32 %v67, %v110
    %v112 = vpop.f32.mrb[0].mxu0
    %v113 = vpop.f32.mrb[0].mxu0
    %v114 = vadd.f32 %v67, %v113
    %v115 = vpop.f32.mrb[0].mxu0
    %116 = vdwg.mxu0
    %v117 = vld [vmem:[%s3] sm:$0x1]
    %v118 = vld [vmem:[%s3 + $0x1] sm:$0x1]
    %vm119 = vcmask 261120
    %v120 = vsel %vm119, %v111, 0.0
    %121 = vadd.xlane.f32.xlu0 %v120
    %v122 = vpop.xlane.xlu0 %121
    %v123 = vsel %vm119, %v114, 0.0
    %124 = vadd.xlane.f32.xlu0 %v123
    %v125 = vpop.xlane.xlu0 %124
    %v126 = vrcp.pop 32.0
    %v127 = vmul.f32 %v122, %v126
    %v128 = vmul.f32 %v125, %v126
    %v129 = vsub.f32 %v111, %v127
    %v130 = vsub.f32 %v114, %v128
    %v131 = vmul.f32 %v129, %v129
    %v132 = vmul.f32 %v130, %v130
    %v133 = vsel %vm119, %v131, 0.0
    %134 = vadd.xlane.f32.xlu0 %v133
    %v135 = vpop.xlane.xlu0 %134
    %v136 = vsel %vm119, %v132, 0.0
    %137 = vadd.xlane.f32.xlu0 %v136
    %v138 = vpop.xlane.xlu0 %137
    %v139 = vmul.f32 %v135, %v126
    %v140 = vmul.f32 %v138, %v126
    %v141 = vadd.f32 %v139, 1e-05
    %v142 = vadd.f32 %v140, 1e-05
    %v143 = vrsqrt.pop %v141
    %v144 = vrsqrt.pop %v142
    %v145 = vmul.f32 %v129, %v143
    %v146 = vmul.f32 %v130, %v144
    %v147 = vlaneseq
    %v148 = vshrl.u32 %v147, 7
    %v149 = vsub.s32 0, %v148
    %v150 = vrot.slane %v117, %v149
    %v151 = vmul.f32 %v145, %v150
    %v152 = vmul.f32 %v146, %v150
    %v153 = vlaneseq
    %v154 = vshrl.u32 %v153, 7
    %v155 = vsub.s32 0, %v154
    %v156 = vrot.slane %v118, %v155
    %v157 = vadd.f32 %v151, %v156
    %v158 = vadd.f32 %v152, %v156
    %v159 = vpack.c.bf16 %v158, %v157
    %v160 = vld [vmem:[%s5] sm:$0xf]
    %v161 = vld [vmem:[%s5 + $0x4] sm:$0xf]
    %v162 = vld [vmem:[%s5 + $0x8] sm:$0xf]
    %v163 = vld [vmem:[%s5 + $0xc] sm:$0xf]
    %v164 = vld [vmem:[%s3 + $0x6] sm:$0x1]
    %v165 = vlaneseq
    %v166 = vshrl.u32 %v165, 7
    %v167 = vsub.s32 0, %v166
    %v168 = vrot.slane %v164, %v167
    %v173 = vunpack.c.l.b16 %v160
    %v174 = vunpack.c.l.b16 %v161
    %v175 = vunpack.c.l.b16 %v162
    %v176 = vunpack.c.l.b16 %v163
    %v177 = vpack.c.b16 %v174, %v173
    %v178 = vpack.c.b16 %v176, %v175
    %v182 = vsel %vm119, %v159, 0
    %184 = vmatprep.subr.bf16.mxu0 0
    %185 = vmatpush1.bf16.msra.mxu0 %v177
    %186 = vmatprep.subr.bf16.mxu0 0
    %187 = vmatpush1.bf16.msra.mxu0 %v178
    %188 = vmatprep.subr.bf16.mxu0 0
    %189 = vmatpush1.bf16.msra.mxu0 0
    %190 = vmatprep.subr.bf16.mxu0 0
    %191 = vmatpush1.bf16.msra.mxu0 0
    %192 = vmatprep.subr.bf16.mxu0 0
    %193 = vmatpush1.bf16.msra.mxu0 0
    %194 = vmatprep.subr.bf16.mxu0 0
    %195 = vmatpush1.bf16.msra.mxu0 0
    %196 = vmatprep.subr.bf16.mxu0 0
    %197 = vmatpush1.bf16.msra.mxu0 0
    %198 = vmatprep.subr.bf16.mxu0 0
    %199 = vmatpush1.bf16.msra.mxu0 0
    %200 = vmatprep.subr.bf16.mxu0 0
    %201 = vmatpush1.bf16.msra.mxu0 0
    %202 = vmatprep.subr.bf16.mxu0 0
    %203 = vmatpush1.bf16.msra.mxu0 0
    %204 = vmatprep.subr.bf16.mxu0 0
    %205 = vmatpush1.bf16.msra.mxu0 0
    %206 = vmatprep.subr.bf16.mxu0 0
    %207 = vmatpush1.bf16.msra.mxu0 0
    %208 = vmatprep.subr.bf16.mxu0 0
    %209 = vmatpush1.bf16.msra.mxu0 0
    %210 = vmatprep.subr.bf16.mxu0 0
    %211 = vmatpush1.bf16.msra.mxu0 0
    %212 = vmatprep.subr.bf16.mxu0 0
    %213 = vmatpush1.bf16.msra.mxu0 0
    %214 = vmatprep.subr.bf16.mxu0 0
    %215 = vmatpush1.bf16.msra.mxu0 0
    %216 = vmatprep.mubr.bf16.mxu0 0
    %217 = vmatmul.mubr.bf16.gmra.mrb[0].mxu0 %v182
    %v218 = vpop.f32.mrb[0].mxu0
    %v219 = vadd.f32 %v168, %v218
    %v220 = vpop.f32.mrb[0].mxu0
    %v221 = vpop.f32.mrb[0].mxu0
    %v222 = vadd.f32 %v168, %v221
    %v223 = vpop.f32.mrb[0].mxu0
    %224 = vdwg.mxu0
    %227 = vrot.lane.b32.xlu0 %v219, 120
    %v228 = vpop.permute.xlu0 %227
    %229 = vrot.lane.b32.xlu0 %v222, 120
    %v230 = vpop.permute.xlu0 %229
    %233 = vrot.lane.b32.xlu0 %v219, 112
    %v234 = vpop.permute.xlu0 %233
    %235 = vrot.lane.b32.xlu0 %v222, 112
    %v236 = vpop.permute.xlu0 %235
    %239 = vrot.lane.b32.xlu0 %v219, 104
    %v240 = vpop.permute.xlu0 %239
    %241 = vrot.lane.b32.xlu0 %v222, 104
    %v242 = vpop.permute.xlu0 %241
    %s245 = sld [smem:[#allocation2]]
    %s246 = sld [smem:[#allocation2 + $0x100]]
    %v247 = vstv %s245
    %v248 = vmul.f32 %v247, %v54
    %v249 = vmul.f32 %v247, %v55
    %v250 = vstv %s246
    %v251 = vadd.f32 %v248, %v250
    %v252 = vadd.f32 %v249, %v250
    %v253 = vsel %vm59, -1e+30, %v251
    %v254 = vsel %vm60, -1e+30, %v252
    %s255 = sld [smem:[#allocation2 + $0x1]]
    %s256 = sld [smem:[#allocation2 + $0x101]]
    %v257 = vstv %s255
    %v258 = vmul.f32 %v257, %v54
    %v259 = vmul.f32 %v257, %v55
    %v260 = vstv %s256
    %v261 = vadd.f32 %v258, %v260
    %v262 = vadd.f32 %v259, %v260
    %v263 = vsel %vm59, -1e+30, %v261
    %v264 = vsel %vm60, -1e+30, %v262
    %s265 = sld [smem:[#allocation2 + $0x2]]
    %s266 = sld [smem:[#allocation2 + $0x102]]
    %v267 = vstv %s265
    %v268 = vmul.f32 %v267, %v54
    %v269 = vmul.f32 %v267, %v55
    %v270 = vstv %s266
    %v271 = vadd.f32 %v268, %v270
    %v272 = vadd.f32 %v269, %v270
    %v273 = vsel %vm59, -1e+30, %v271
    %v274 = vsel %vm60, -1e+30, %v272
    %s275 = sld [smem:[#allocation2 + $0x3]]
    %s276 = sld [smem:[#allocation2 + $0x103]]
    %v277 = vstv %s275
    %v278 = vmul.f32 %v277, %v54
    %v279 = vmul.f32 %v277, %v55
    %v280 = vstv %s276
    %v281 = vadd.f32 %v278, %v280
    %v282 = vadd.f32 %v279, %v280
    %v283 = vsel %vm59, -1e+30, %v281
    %v284 = vsel %vm60, -1e+30, %v282
    %v285 = vpack.c.bf16 %v219, %v219
    %v286 = vpack.c.bf16 %v228, %v228
    %v287 = vpack.c.bf16 %v234, %v234
    %v288 = vpack.c.bf16 %v240, %v240
    %v289 = vpack.c.bf16 %v222, %v222
    %v290 = vpack.c.bf16 %v230, %v230
    %v291 = vpack.c.bf16 %v236, %v236
    %v292 = vpack.c.bf16 %v242, %v242
    %294 = vrot.lane.b32.xlu0 %v285, 96
    %v295 = vpop.permute.xlu0 %294
    %vm296 = vcmask 64512
    %v298 = vsel %vm296, %v285, 0
    %v301 = vsel %vm296, %v295, 0
    %303 = vmatprep.subr.bf16.mxu0 0
    %304 = vmatpush1.bf16.xpose.msra.mxu0 %v301
    %305 = vmatprep.subr.bf16.mxu0 0
    %306 = vmatpush1.bf16.xpose.msra.mxu0 0
    %307 = vmatprep.subr.bf16.mxu0 0
    %308 = vmatpush1.bf16.xpose.msra.mxu0 0
    %309 = vmatprep.subr.bf16.mxu0 0
    %310 = vmatpush1.bf16.xpose.msra.mxu0 0
    %311 = vmatprep.subr.bf16.mxu0 0
    %312 = vmatpush1.bf16.xpose.msra.mxu0 0
    %313 = vmatprep.subr.bf16.mxu0 0
    %314 = vmatpush1.bf16.xpose.msra.mxu0 0
    %315 = vmatprep.subr.bf16.mxu0 0
    %316 = vmatpush1.bf16.xpose.msra.mxu0 0
    %317 = vmatprep.subr.bf16.mxu0 0
    %318 = vmatpush1.bf16.xpose.msra.mxu0 0
    %319 = vmatprep.subr.bf16.mxu0 0
    %320 = vmatpush1.bf16.xpose.msra.mxu0 0
    %321 = vmatprep.subr.bf16.mxu0 0
    %322 = vmatpush1.bf16.xpose.msra.mxu0 0
    %323 = vmatprep.subr.bf16.mxu0 0
    %324 = vmatpush1.bf16.xpose.msra.mxu0 0
    %325 = vmatprep.subr.bf16.mxu0 0
    %326 = vmatpush1.bf16.xpose.msra.mxu0 0
    %327 = vmatprep.subr.bf16.mxu0 0
    %328 = vmatpush1.bf16.xpose.msra.mxu0 0
    %329 = vmatprep.subr.bf16.mxu0 0
    %330 = vmatpush1.bf16.xpose.msra.mxu0 0
    %331 = vmatprep.subr.bf16.mxu0 0
    %332 = vmatpush1.bf16.xpose.msra.mxu0 0
    %333 = vmatprep.subr.bf16.mxu0 0
    %334 = vmatpush1.bf16.xpose.msra.mxu0 0
    %335 = vmatprep.mubr.bf16.mxu0 0
    %336 = vmatmul.mubr.bf16.gmra.mrb[0].mxu0 %v298
    %v337 = vpop.f32.mrb[0].mxu0
    %v338 = vadd.f32 0.0, %v337
    %v339 = vpop.f32.mrb[0].mxu0
    %v340 = vpop.f32.mrb[0].mxu0
    %v341 = vpop.f32.mrb[0].mxu0
    %342 = vdwg.mxu0
    %344 = vrot.lane.b32.xlu0 %v286, 96
    %v345 = vpop.permute.xlu0 %344
    %v347 = vsel %vm296, %v286, 0
    %v350 = vsel %vm296, %v345, 0
    %352 = vmatprep.subr.bf16.mxu0 0
    %353 = vmatpush1.bf16.xpose.msra.mxu0 %v350
    %354 = vmatprep.subr.bf16.mxu0 0
    %355 = vmatpush1.bf16.xpose.msra.mxu0 0
    %356 = vmatprep.subr.bf16.mxu0 0
    %357 = vmatpush1.bf16.xpose.msra.mxu0 0
    %358 = vmatprep.subr.bf16.mxu0 0
    %359 = vmatpush1.bf16.xpose.msra.mxu0 0
    %360 = vmatprep.subr.bf16.mxu0 0
    %361 = vmatpush1.bf16.xpose.msra.mxu0 0
    %362 = vmatprep.subr.bf16.mxu0 0
    %363 = vmatpush1.bf16.xpose.msra.mxu0 0
    %364 = vmatprep.subr.bf16.mxu0 0
    %365 = vmatpush1.bf16.xpose.msra.mxu0 0
    %366 = vmatprep.subr.bf16.mxu0 0
    %367 = vmatpush1.bf16.xpose.msra.mxu0 0
    %368 = vmatprep.subr.bf16.mxu0 0
    %369 = vmatpush1.bf16.xpose.msra.mxu0 0
    %370 = vmatprep.subr.bf16.mxu0 0
    %371 = vmatpush1.bf16.xpose.msra.mxu0 0
    %372 = vmatprep.subr.bf16.mxu0 0
    %373 = vmatpush1.bf16.xpose.msra.mxu0 0
    %374 = vmatprep.subr.bf16.mxu0 0
    %375 = vmatpush1.bf16.xpose.msra.mxu0 0
    %376 = vmatprep.subr.bf16.mxu0 0
    %377 = vmatpush1.bf16.xpose.msra.mxu0 0
    %378 = vmatprep.subr.bf16.mxu0 0
    %379 = vmatpush1.bf16.xpose.msra.mxu0 0
    %380 = vmatprep.subr.bf16.mxu0 0
    %381 = vmatpush1.bf16.xpose.msra.mxu0 0
    %382 = vmatprep.subr.bf16.mxu0 0
    %383 = vmatpush1.bf16.xpose.msra.mxu0 0
    %384 = vmatprep.mubr.bf16.mxu0 0
    %385 = vmatmul.mubr.bf16.gmra.mrb[0].mxu0 %v347
    %v386 = vpop.f32.mrb[0].mxu0
    %v387 = vadd.f32 0.0, %v386
    %v388 = vpop.f32.mrb[0].mxu0
    %v389 = vpop.f32.mrb[0].mxu0
    %v390 = vpop.f32.mrb[0].mxu0
    %391 = vdwg.mxu0
    %393 = vrot.lane.b32.xlu0 %v287, 96
    %v394 = vpop.permute.xlu0 %393
    %v396 = vsel %vm296, %v287, 0
    %v399 = vsel %vm296, %v394, 0
    %401 = vmatprep.subr.bf16.mxu0 0
    %402 = vmatpush1.bf16.xpose.msra.mxu0 %v399
    %403 = vmatprep.subr.bf16.mxu0 0
    %404 = vmatpush1.bf16.xpose.msra.mxu0 0
    %405 = vmatprep.subr.bf16.mxu0 0
    %406 = vmatpush1.bf16.xpose.msra.mxu0 0
    %407 = vmatprep.subr.bf16.mxu0 0
    %408 = vmatpush1.bf16.xpose.msra.mxu0 0
    %409 = vmatprep.subr.bf16.mxu0 0
    %410 = vmatpush1.bf16.xpose.msra.mxu0 0
    %411 = vmatprep.subr.bf16.mxu0 0
    %412 = vmatpush1.bf16.xpose.msra.mxu0 0
    %413 = vmatprep.subr.bf16.mxu0 0
    %414 = vmatpush1.bf16.xpose.msra.mxu0 0
    %415 = vmatprep.subr.bf16.mxu0 0
    %416 = vmatpush1.bf16.xpose.msra.mxu0 0
    %417 = vmatprep.subr.bf16.mxu0 0
    %418 = vmatpush1.bf16.xpose.msra.mxu0 0
    %419 = vmatprep.subr.bf16.mxu0 0
    %420 = vmatpush1.bf16.xpose.msra.mxu0 0
    %421 = vmatprep.subr.bf16.mxu0 0
    %422 = vmatpush1.bf16.xpose.msra.mxu0 0
    %423 = vmatprep.subr.bf16.mxu0 0
    %424 = vmatpush1.bf16.xpose.msra.mxu0 0
    %425 = vmatprep.subr.bf16.mxu0 0
    %426 = vmatpush1.bf16.xpose.msra.mxu0 0
    %427 = vmatprep.subr.bf16.mxu0 0
    %428 = vmatpush1.bf16.xpose.msra.mxu0 0
    %429 = vmatprep.subr.bf16.mxu0 0
    %430 = vmatpush1.bf16.xpose.msra.mxu0 0
    %431 = vmatprep.subr.bf16.mxu0 0
    %432 = vmatpush1.bf16.xpose.msra.mxu0 0
    %433 = vmatprep.mubr.bf16.mxu0 0
    %434 = vmatmul.mubr.bf16.gmra.mrb[0].mxu0 %v396
    %v435 = vpop.f32.mrb[0].mxu0
    %v436 = vadd.f32 0.0, %v435
    %v437 = vpop.f32.mrb[0].mxu0
    %v438 = vpop.f32.mrb[0].mxu0
    %v439 = vpop.f32.mrb[0].mxu0
    %440 = vdwg.mxu0
    %442 = vrot.lane.b32.xlu0 %v288, 96
    %v443 = vpop.permute.xlu0 %442
    %v445 = vsel %vm296, %v288, 0
    %v448 = vsel %vm296, %v443, 0
    %450 = vmatprep.subr.bf16.mxu0 0
    %451 = vmatpush1.bf16.xpose.msra.mxu0 %v448
    %452 = vmatprep.subr.bf16.mxu0 0
    %453 = vmatpush1.bf16.xpose.msra.mxu0 0
    %454 = vmatprep.subr.bf16.mxu0 0
    %455 = vmatpush1.bf16.xpose.msra.mxu0 0
    %456 = vmatprep.subr.bf16.mxu0 0
    %457 = vmatpush1.bf16.xpose.msra.mxu0 0
    %458 = vmatprep.subr.bf16.mxu0 0
    %459 = vmatpush1.bf16.xpose.msra.mxu0 0
    %460 = vmatprep.subr.bf16.mxu0 0
    %461 = vmatpush1.bf16.xpose.msra.mxu0 0
    %462 = vmatprep.subr.bf16.mxu0 0
    %463 = vmatpush1.bf16.xpose.msra.mxu0 0
    %464 = vmatprep.subr.bf16.mxu0 0
    %465 = vmatpush1.bf16.xpose.msra.mxu0 0
    %466 = vmatprep.subr.bf16.mxu0 0
    %467 = vmatpush1.bf16.xpose.msra.mxu0 0
    %468 = vmatprep.subr.bf16.mxu0 0
    %469 = vmatpush1.bf16.xpose.msra.mxu0 0
    %470 = vmatprep.subr.bf16.mxu0 0
    %471 = vmatpush1.bf16.xpose.msra.mxu0 0
    %472 = vmatprep.subr.bf16.mxu0 0
    %473 = vmatpush1.bf16.xpose.msra.mxu0 0
    %474 = vmatprep.subr.bf16.mxu0 0
    %475 = vmatpush1.bf16.xpose.msra.mxu0 0
    %476 = vmatprep.subr.bf16.mxu0 0
    %477 = vmatpush1.bf16.xpose.msra.mxu0 0
    %478 = vmatprep.subr.bf16.mxu0 0
    %479 = vmatpush1.bf16.xpose.msra.mxu0 0
    %480 = vmatprep.subr.bf16.mxu0 0
    %481 = vmatpush1.bf16.xpose.msra.mxu0 0
    %482 = vmatprep.mubr.bf16.mxu0 0
    %483 = vmatmul.mubr.bf16.gmra.mrb[0].mxu0 %v445
    %v484 = vpop.f32.mrb[0].mxu0
    %v485 = vadd.f32 0.0, %v484
    %v486 = vpop.f32.mrb[0].mxu0
    %v487 = vpop.f32.mrb[0].mxu0
    %v488 = vpop.f32.mrb[0].mxu0
    %489 = vdwg.mxu0
    %491 = vrot.lane.b32.xlu0 %v289, 96
    %v492 = vpop.permute.xlu0 %491
    %v494 = vsel %vm296, %v289, 0
    %v497 = vsel %vm296, %v492, 0
    %499 = vmatprep.subr.bf16.mxu0 0
    %500 = vmatpush1.bf16.xpose.msra.mxu0 %v497
    %501 = vmatprep.subr.bf16.mxu0 0
    %502 = vmatpush1.bf16.xpose.msra.mxu0 0
    %503 = vmatprep.subr.bf16.mxu0 0
    %504 = vmatpush1.bf16.xpose.msra.mxu0 0
    %505 = vmatprep.subr.bf16.mxu0 0
    %506 = vmatpush1.bf16.xpose.msra.mxu0 0
    %507 = vmatprep.subr.bf16.mxu0 0
    %508 = vmatpush1.bf16.xpose.msra.mxu0 0
    %509 = vmatprep.subr.bf16.mxu0 0
    %510 = vmatpush1.bf16.xpose.msra.mxu0 0
    %511 = vmatprep.subr.bf16.mxu0 0
    %512 = vmatpush1.bf16.xpose.msra.mxu0 0
    %513 = vmatprep.subr.bf16.mxu0 0
    %514 = vmatpush1.bf16.xpose.msra.mxu0 0
    %515 = vmatprep.subr.bf16.mxu0 0
    %516 = vmatpush1.bf16.xpose.msra.mxu0 0
    %517 = vmatprep.subr.bf16.mxu0 0
    %518 = vmatpush1.bf16.xpose.msra.mxu0 0
    %519 = vmatprep.subr.bf16.mxu0 0
    %520 = vmatpush1.bf16.xpose.msra.mxu0 0
    %521 = vmatprep.subr.bf16.mxu0 0
    %522 = vmatpush1.bf16.xpose.msra.mxu0 0
    %523 = vmatprep.subr.bf16.mxu0 0
    %524 = vmatpush1.bf16.xpose.msra.mxu0 0
    %525 = vmatprep.subr.bf16.mxu0 0
    %526 = vmatpush1.bf16.xpose.msra.mxu0 0
    %527 = vmatprep.subr.bf16.mxu0 0
    %528 = vmatpush1.bf16.xpose.msra.mxu0 0
    %529 = vmatprep.subr.bf16.mxu0 0
    %530 = vmatpush1.bf16.xpose.msra.mxu0 0
    %531 = vmatprep.mubr.bf16.mxu0 0
    %532 = vmatmul.mubr.bf16.gmra.mrb[0].mxu0 %v494
    %v533 = vpop.f32.mrb[0].mxu0
    %v534 = vadd.f32 0.0, %v533
    %v535 = vpop.f32.mrb[0].mxu0
    %v536 = vpop.f32.mrb[0].mxu0
    %v537 = vpop.f32.mrb[0].mxu0
    %538 = vdwg.mxu0
    %540 = vrot.lane.b32.xlu0 %v290, 96
    %v541 = vpop.permute.xlu0 %540
    %v543 = vsel %vm296, %v290, 0
    %v546 = vsel %vm296, %v541, 0
    %548 = vmatprep.subr.bf16.mxu0 0
    %549 = vmatpush1.bf16.xpose.msra.mxu0 %v546
    %550 = vmatprep.subr.bf16.mxu0 0
    %551 = vmatpush1.bf16.xpose.msra.mxu0 0
    %552 = vmatprep.subr.bf16.mxu0 0
    %553 = vmatpush1.bf16.xpose.msra.mxu0 0
    %554 = vmatprep.subr.bf16.mxu0 0
    %555 = vmatpush1.bf16.xpose.msra.mxu0 0
    %556 = vmatprep.subr.bf16.mxu0 0
    %557 = vmatpush1.bf16.xpose.msra.mxu0 0
    %558 = vmatprep.subr.bf16.mxu0 0
    %559 = vmatpush1.bf16.xpose.msra.mxu0 0
    %560 = vmatprep.subr.bf16.mxu0 0
    %561 = vmatpush1.bf16.xpose.msra.mxu0 0
    %562 = vmatprep.subr.bf16.mxu0 0
    %563 = vmatpush1.bf16.xpose.msra.mxu0 0
    %564 = vmatprep.subr.bf16.mxu0 0
    %565 = vmatpush1.bf16.xpose.msra.mxu0 0
    %566 = vmatprep.subr.bf16.mxu0 0
    %567 = vmatpush1.bf16.xpose.msra.mxu0 0
    %568 = vmatprep.subr.bf16.mxu0 0
    %569 = vmatpush1.bf16.xpose.msra.mxu0 0
    %570 = vmatprep.subr.bf16.mxu0 0
    %571 = vmatpush1.bf16.xpose.msra.mxu0 0
    %572 = vmatprep.subr.bf16.mxu0 0
    %573 = vmatpush1.bf16.xpose.msra.mxu0 0
    %574 = vmatprep.subr.bf16.mxu0 0
    %575 = vmatpush1.bf16.xpose.msra.mxu0 0
    %576 = vmatprep.subr.bf16.mxu0 0
    %577 = vmatpush1.bf16.xpose.msra.mxu0 0
    %578 = vmatprep.subr.bf16.mxu0 0
    %579 = vmatpush1.bf16.xpose.msra.mxu0 0
    %580 = vmatprep.mubr.bf16.mxu0 0
    %581 = vmatmul.mubr.bf16.gmra.mrb[0].mxu0 %v543
    %v582 = vpop.f32.mrb[0].mxu0
    %v583 = vadd.f32 0.0, %v582
    %v584 = vpop.f32.mrb[0].mxu0
    %v585 = vpop.f32.mrb[0].mxu0
    %v586 = vpop.f32.mrb[0].mxu0
    %587 = vdwg.mxu0
    %589 = vrot.lane.b32.xlu0 %v291, 96
    %v590 = vpop.permute.xlu0 %589
    %v592 = vsel %vm296, %v291, 0
    %v595 = vsel %vm296, %v590, 0
    %597 = vmatprep.subr.bf16.mxu0 0
    %598 = vmatpush1.bf16.xpose.msra.mxu0 %v595
    %599 = vmatprep.subr.bf16.mxu0 0
    %600 = vmatpush1.bf16.xpose.msra.mxu0 0
    %601 = vmatprep.subr.bf16.mxu0 0
    %602 = vmatpush1.bf16.xpose.msra.mxu0 0
    %603 = vmatprep.subr.bf16.mxu0 0
    %604 = vmatpush1.bf16.xpose.msra.mxu0 0
    %605 = vmatprep.subr.bf16.mxu0 0
    %606 = vmatpush1.bf16.xpose.msra.mxu0 0
    %607 = vmatprep.subr.bf16.mxu0 0
    %608 = vmatpush1.bf16.xpose.msra.mxu0 0
    %609 = vmatprep.subr.bf16.mxu0 0
    %610 = vmatpush1.bf16.xpose.msra.mxu0 0
    %611 = vmatprep.subr.bf16.mxu0 0
    %612 = vmatpush1.bf16.xpose.msra.mxu0 0
    %613 = vmatprep.subr.bf16.mxu0 0
    %614 = vmatpush1.bf16.xpose.msra.mxu0 0
    %615 = vmatprep.subr.bf16.mxu0 0
    %616 = vmatpush1.bf16.xpose.msra.mxu0 0
    %617 = vmatprep.subr.bf16.mxu0 0
    %618 = vmatpush1.bf16.xpose.msra.mxu0 0
    %619 = vmatprep.subr.bf16.mxu0 0
    %620 = vmatpush1.bf16.xpose.msra.mxu0 0
    %621 = vmatprep.subr.bf16.mxu0 0
    %622 = vmatpush1.bf16.xpose.msra.mxu0 0
    %623 = vmatprep.subr.bf16.mxu0 0
    %624 = vmatpush1.bf16.xpose.msra.mxu0 0
    %625 = vmatprep.subr.bf16.mxu0 0
    %626 = vmatpush1.bf16.xpose.msra.mxu0 0
    %627 = vmatprep.subr.bf16.mxu0 0
    %628 = vmatpush1.bf16.xpose.msra.mxu0 0
    %629 = vmatprep.mubr.bf16.mxu0 0
    %630 = vmatmul.mubr.bf16.gmra.mrb[0].mxu0 %v592
    %v631 = vpop.f32.mrb[0].mxu0
    %v632 = vadd.f32 0.0, %v631
    %v633 = vpop.f32.mrb[0].mxu0
    %v634 = vpop.f32.mrb[0].mxu0
    %v635 = vpop.f32.mrb[0].mxu0
    %636 = vdwg.mxu0
    %638 = vrot.lane.b32.xlu0 %v292, 96
    %v639 = vpop.permute.xlu0 %638
    %v641 = vsel %vm296, %v292, 0
    %v644 = vsel %vm296, %v639, 0
    %646 = vmatprep.subr.bf16.mxu0 0
    %647 = vmatpush1.bf16.xpose.msra.mxu0 %v644
    %648 = vmatprep.subr.bf16.mxu0 0
    %649 = vmatpush1.bf16.xpose.msra.mxu0 0
    %650 = vmatprep.subr.bf16.mxu0 0
    %651 = vmatpush1.bf16.xpose.msra.mxu0 0
    %652 = vmatprep.subr.bf16.mxu0 0
    %653 = vmatpush1.bf16.xpose.msra.mxu0 0
    %654 = vmatprep.subr.bf16.mxu0 0
    %655 = vmatpush1.bf16.xpose.msra.mxu0 0
    %656 = vmatprep.subr.bf16.mxu0 0
    %657 = vmatpush1.bf16.xpose.msra.mxu0 0
    %658 = vmatprep.subr.bf16.mxu0 0
    %659 = vmatpush1.bf16.xpose.msra.mxu0 0
    %660 = vmatprep.subr.bf16.mxu0 0
    %661 = vmatpush1.bf16.xpose.msra.mxu0 0
    %662 = vmatprep.subr.bf16.mxu0 0
    %663 = vmatpush1.bf16.xpose.msra.mxu0 0
    %664 = vmatprep.subr.bf16.mxu0 0
    %665 = vmatpush1.bf16.xpose.msra.mxu0 0
    %666 = vmatprep.subr.bf16.mxu0 0
    %667 = vmatpush1.bf16.xpose.msra.mxu0 0
    %668 = vmatprep.subr.bf16.mxu0 0
    %669 = vmatpush1.bf16.xpose.msra.mxu0 0
    %670 = vmatprep.subr.bf16.mxu0 0
    %671 = vmatpush1.bf16.xpose.msra.mxu0 0
    %672 = vmatprep.subr.bf16.mxu0 0
    %673 = vmatpush1.bf16.xpose.msra.mxu0 0
    %674 = vmatprep.subr.bf16.mxu0 0
    %675 = vmatpush1.bf16.xpose.msra.mxu0 0
    %676 = vmatprep.subr.bf16.mxu0 0
    %677 = vmatpush1.bf16.xpose.msra.mxu0 0
    %678 = vmatprep.mubr.bf16.mxu0 0
    %679 = vmatmul.mubr.bf16.gmra.mrb[0].mxu0 %v641
    %v680 = vpop.f32.mrb[0].mxu0
    %v681 = vadd.f32 0.0, %v680
    %v682 = vpop.f32.mrb[0].mxu0
    %v683 = vpop.f32.mrb[0].mxu0
    %v684 = vpop.f32.mrb[0].mxu0
    %685 = vdwg.mxu0
    %v686 = vmul.f32 %v338, 0.35355338
    %v687 = vmul.f32 %v387, 0.35355338
    %v688 = vmul.f32 %v436, 0.35355338
    %v689 = vmul.f32 %v485, 0.35355338
    %v690 = vmul.f32 %v534, 0.35355338
    %v691 = vmul.f32 %v583, 0.35355338
    %v692 = vmul.f32 %v632, 0.35355338
    %v693 = vmul.f32 %v681, 0.35355338
    %v694 = vadd.f32 %v686, %v253
    %v695 = vadd.f32 %v687, %v263
    %v696 = vadd.f32 %v688, %v273
    %v697 = vadd.f32 %v689, %v283
    %v698 = vadd.f32 %v690, %v254
    %v699 = vadd.f32 %v691, %v264
    %v700 = vadd.f32 %v692, %v274
    %v701 = vadd.f32 %v693, %v284
    %v702 = vsel %vm296, %v694, -inf
    %703 = vmax.xlane.f32.xlu0 %v702
    %v704 = vpop.xlane.xlu0 %703
    %v705 = vsel %vm296, %v695, -inf
    %706 = vmax.xlane.f32.xlu0 %v705
    %v707 = vpop.xlane.xlu0 %706
    %v708 = vsel %vm296, %v696, -inf
    %709 = vmax.xlane.f32.xlu0 %v708
    %v710 = vpop.xlane.xlu0 %709
    %v711 = vsel %vm296, %v697, -inf
    %712 = vmax.xlane.f32.xlu0 %v711
    %v713 = vpop.xlane.xlu0 %712
    %v714 = vsel %vm296, %v698, -inf
    %715 = vmax.xlane.f32.xlu0 %v714
    %v716 = vpop.xlane.xlu0 %715
    %v717 = vsel %vm296, %v699, -inf
    %718 = vmax.xlane.f32.xlu0 %v717
    %v719 = vpop.xlane.xlu0 %718
    %v720 = vsel %vm296, %v700, -inf
    %721 = vmax.xlane.f32.xlu0 %v720
    %v722 = vpop.xlane.xlu0 %721
    %v723 = vsel %vm296, %v701, -inf
    %724 = vmax.xlane.f32.xlu0 %v723
    %v725 = vpop.xlane.xlu0 %724
    %v726 = vsub.f32 %v694, %v704
    %v727 = vsub.f32 %v695, %v707
    %v728 = vsub.f32 %v696, %v710
    %v729 = vsub.f32 %v697, %v713
    %v730 = vsub.f32 %v698, %v716
    %v731 = vsub.f32 %v699, %v719
    %v732 = vsub.f32 %v700, %v722
    %v733 = vsub.f32 %v701, %v725
    %v734 = vmul.f32 %v726, 1.442695
    %v735 = vpow.pop %v734
    %v736 = vmul.f32 %v727, 1.442695
    %v737 = vpow.pop %v736
    %v738 = vmul.f32 %v728, 1.442695
    %v739 = vpow.pop %v738
    %v740 = vmul.f32 %v729, 1.442695
    %v741 = vpow.pop %v740
    %v742 = vmul.f32 %v730, 1.442695
    %v743 = vpow.pop %v742
    %v744 = vmul.f32 %v731, 1.442695
    %v745 = vpow.pop %v744
    %v746 = vmul.f32 %v732, 1.442695
    %v747 = vpow.pop %v746
    %v748 = vmul.f32 %v733, 1.442695
    %v749 = vpow.pop %v748
    %v750 = vsel %vm296, %v735, 0.0
    %751 = vadd.xlane.f32.xlu0 %v750
    %v752 = vpop.xlane.xlu0 %751
    %v753 = vsel %vm296, %v737, 0.0
    %754 = vadd.xlane.f32.xlu0 %v753
    %v755 = vpop.xlane.xlu0 %754
    %v756 = vsel %vm296, %v739, 0.0
    %757 = vadd.xlane.f32.xlu0 %v756
    %v758 = vpop.xlane.xlu0 %757
    %v759 = vsel %vm296, %v741, 0.0
    %760 = vadd.xlane.f32.xlu0 %v759
    %v761 = vpop.xlane.xlu0 %760
    %v762 = vsel %vm296, %v743, 0.0
    %763 = vadd.xlane.f32.xlu0 %v762
    %v764 = vpop.xlane.xlu0 %763
    %v765 = vsel %vm296, %v745, 0.0
    %766 = vadd.xlane.f32.xlu0 %v765
    %v767 = vpop.xlane.xlu0 %766
    %v768 = vsel %vm296, %v747, 0.0
    %769 = vadd.xlane.f32.xlu0 %v768
    %v770 = vpop.xlane.xlu0 %769
    %v771 = vsel %vm296, %v749, 0.0
    %772 = vadd.xlane.f32.xlu0 %v771
    %v773 = vpop.xlane.xlu0 %772
    %v774 = vrcp.pop %v752
    %v775 = vmul.f32 %v735, %v774
    %v776 = vrcp.pop %v755
    %v777 = vmul.f32 %v737, %v776
    %v778 = vrcp.pop %v758
    %v779 = vmul.f32 %v739, %v778
    %v780 = vrcp.pop %v761
    %v781 = vmul.f32 %v741, %v780
    %v782 = vrcp.pop %v764
    %v783 = vmul.f32 %v743, %v782
    %v784 = vrcp.pop %v767
    %v785 = vmul.f32 %v745, %v784
    %v786 = vrcp.pop %v770
    %v787 = vmul.f32 %v747, %v786
    %v788 = vrcp.pop %v773
    %v789 = vmul.f32 %v749, %v788
    %v790 = vpack.c.bf16 %v775, %v775
    %v791 = vpack.c.bf16 %v777, %v777
    %v792 = vpack.c.bf16 %v779, %v779
    %v793 = vpack.c.bf16 %v781, %v781
    %v794 = vpack.c.bf16 %v783, %v783
    %v795 = vpack.c.bf16 %v785, %v785
    %v796 = vpack.c.bf16 %v787, %v787
    %v797 = vpack.c.bf16 %v789, %v789
    %798 = vrot.lane.b32.xlu0 %v285, 64
    %v799 = vpop.permute.xlu0 %798
    %v801 = vsel %vm296, %v790, 0
    %vm803 = vcmask 1043456
    %v805 = vsel %vm803, %v799, 0
    %807 = vmatprep.subr.bf16.mxu0 0
    %808 = vmatpush1.bf16.msra.mxu0 %v805
    %809 = vmatprep.subr.bf16.mxu0 0
    %810 = vmatpush1.bf16.msra.mxu0 0
    %811 = vmatprep.subr.bf16.mxu0 0
    %812 = vmatpush1.bf16.msra.mxu0 0
    %813 = vmatprep.subr.bf16.mxu0 0
    %814 = vmatpush1.bf16.msra.mxu0 0
    %815 = vmatprep.subr.bf16.mxu0 0
    %816 = vmatpush1.bf16.msra.mxu0 0
    %817 = vmatprep.subr.bf16.mxu0 0
    %818 = vmatpush1.bf16.msra.mxu0 0
    %819 = vmatprep.subr.bf16.mxu0 0
    %820 = vmatpush1.bf16.msra.mxu0 0
    %821 = vmatprep.subr.bf16.mxu0 0
    %822 = vmatpush1.bf16.msra.mxu0 0
    %823 = vmatprep.subr.bf16.mxu0 0
    %824 = vmatpush1.bf16.msra.mxu0 0
    %825 = vmatprep.subr.bf16.mxu0 0
    %826 = vmatpush1.bf16.msra.mxu0 0
    %827 = vmatprep.subr.bf16.mxu0 0
    %828 = vmatpush1.bf16.msra.mxu0 0
    %829 = vmatprep.subr.bf16.mxu0 0
    %830 = vmatpush1.bf16.msra.mxu0 0
    %831 = vmatprep.subr.bf16.mxu0 0
    %832 = vmatpush1.bf16.msra.mxu0 0
    %833 = vmatprep.subr.bf16.mxu0 0
    %834 = vmatpush1.bf16.msra.mxu0 0
    %835 = vmatprep.subr.bf16.mxu0 0
    %836 = vmatpush1.bf16.msra.mxu0 0
    %837 = vmatprep.subr.bf16.mxu0 0
    %838 = vmatpush1.bf16.msra.mxu0 0
    %839 = vmatprep.mubr.bf16.mxu0 0
    %840 = vmatmul.mubr.bf16.gmra.mrb[0].mxu0 %v801
    %v841 = vpop.f32.mrb[0].mxu0
    %v842 = vadd.f32 0.0, %v841
    %v843 = vpop.f32.mrb[0].mxu0
    %v844 = vpop.f32.mrb[0].mxu0
    %v845 = vpop.f32.mrb[0].mxu0
    %846 = vdwg.mxu0
    %847 = vrot.lane.b32.xlu0 %v286, 64
    %v848 = vpop.permute.xlu0 %847
    %v850 = vsel %vm296, %v791, 0
    %v853 = vsel %vm803, %v848, 0
    %855 = vmatprep.subr.bf16.mxu0 0
    %856 = vmatpush1.bf16.msra.mxu0 %v853
    %857 = vmatprep.subr.bf16.mxu0 0
    %858 = vmatpush1.bf16.msra.mxu0 0
    %859 = vmatprep.subr.bf16.mxu0 0
    %860 = vmatpush1.bf16.msra.mxu0 0
    %861 = vmatprep.subr.bf16.mxu0 0
    %862 = vmatpush1.bf16.msra.mxu0 0
    %863 = vmatprep.subr.bf16.mxu0 0
    %864 = vmatpush1.bf16.msra.mxu0 0
    %865 = vmatprep.subr.bf16.mxu0 0
    %866 = vmatpush1.bf16.msra.mxu0 0
    %867 = vmatprep.subr.bf16.mxu0 0
    %868 = vmatpush1.bf16.msra.mxu0 0
    %869 = vmatprep.subr.bf16.mxu0 0
    %870 = vmatpush1.bf16.msra.mxu0 0
    %871 = vmatprep.subr.bf16.mxu0 0
    %872 = vmatpush1.bf16.msra.mxu0 0
    %873 = vmatprep.subr.bf16.mxu0 0
    %874 = vmatpush1.bf16.msra.mxu0 0
    %875 = vmatprep.subr.bf16.mxu0 0
    %876 = vmatpush1.bf16.msra.mxu0 0
    %877 = vmatprep.subr.bf16.mxu0 0
    %878 = vmatpush1.bf16.msra.mxu0 0
    %879 = vmatprep.subr.bf16.mxu0 0
    %880 = vmatpush1.bf16.msra.mxu0 0
    %881 = vmatprep.subr.bf16.mxu0 0
    %882 = vmatpush1.bf16.msra.mxu0 0
    %883 = vmatprep.subr.bf16.mxu0 0
    %884 = vmatpush1.bf16.msra.mxu0 0
    %885 = vmatprep.subr.bf16.mxu0 0
    %886 = vmatpush1.bf16.msra.mxu0 0
    %887 = vmatprep.mubr.bf16.mxu0 0
    %888 = vmatmul.mubr.bf16.gmra.mrb[0].mxu0 %v850
    %v889 = vpop.f32.mrb[0].mxu0
    %v890 = vadd.f32 0.0, %v889
    %v891 = vpop.f32.mrb[0].mxu0
    %v892 = vpop.f32.mrb[0].mxu0
    %v893 = vpop.f32.mrb[0].mxu0
    %894 = vdwg.mxu0
    %895 = vrot.lane.b32.xlu0 %v287, 64
    %v896 = vpop.permute.xlu0 %895
    %v898 = vsel %vm296, %v792, 0
    %v901 = vsel %vm803, %v896, 0
    %903 = vmatprep.subr.bf16.mxu0 0
    %904 = vmatpush1.bf16.msra.mxu0 %v901
    %905 = vmatprep.subr.bf16.mxu0 0
    %906 = vmatpush1.bf16.msra.mxu0 0
    %907 = vmatprep.subr.bf16.mxu0 0
    %908 = vmatpush1.bf16.msra.mxu0 0
    %909 = vmatprep.subr.bf16.mxu0 0
    %910 = vmatpush1.bf16.msra.mxu0 0
    %911 = vmatprep.subr.bf16.mxu0 0
    %912 = vmatpush1.bf16.msra.mxu0 0
    %913 = vmatprep.subr.bf16.mxu0 0
    %914 = vmatpush1.bf16.msra.mxu0 0
    %915 = vmatprep.subr.bf16.mxu0 0
    %916 = vmatpush1.bf16.msra.mxu0 0
    %917 = vmatprep.subr.bf16.mxu0 0
    %918 = vmatpush1.bf16.msra.mxu0 0
    %919 = vmatprep.subr.bf16.mxu0 0
    %920 = vmatpush1.bf16.msra.mxu0 0
    %921 = vmatprep.subr.bf16.mxu0 0
    %922 = vmatpush1.bf16.msra.mxu0 0
    %923 = vmatprep.subr.bf16.mxu0 0
    %924 = vmatpush1.bf16.msra.mxu0 0
    %925 = vmatprep.subr.bf16.mxu0 0
    %926 = vmatpush1.bf16.msra.mxu0 0
    %927 = vmatprep.subr.bf16.mxu0 0
    %928 = vmatpush1.bf16.msra.mxu0 0
    %929 = vmatprep.subr.bf16.mxu0 0
    %930 = vmatpush1.bf16.msra.mxu0 0
    %931 = vmatprep.subr.bf16.mxu0 0
    %932 = vmatpush1.bf16.msra.mxu0 0
    %933 = vmatprep.subr.bf16.mxu0 0
    %934 = vmatpush1.bf16.msra.mxu0 0
    %935 = vmatprep.mubr.bf16.mxu0 0
    %936 = vmatmul.mubr.bf16.gmra.mrb[0].mxu0 %v898
    %v937 = vpop.f32.mrb[0].mxu0
    %v938 = vadd.f32 0.0, %v937
    %v939 = vpop.f32.mrb[0].mxu0
    %v940 = vpop.f32.mrb[0].mxu0
    %v941 = vpop.f32.mrb[0].mxu0
    %942 = vdwg.mxu0
    %943 = vrot.lane.b32.xlu0 %v288, 64
    %v944 = vpop.permute.xlu0 %943
    %v946 = vsel %vm296, %v793, 0
    %v949 = vsel %vm803, %v944, 0
    %951 = vmatprep.subr.bf16.mxu0 0
    %952 = vmatpush1.bf16.msra.mxu0 %v949
    %953 = vmatprep.subr.bf16.mxu0 0
    %954 = vmatpush1.bf16.msra.mxu0 0
    %955 = vmatprep.subr.bf16.mxu0 0
    %956 = vmatpush1.bf16.msra.mxu0 0
    %957 = vmatprep.subr.bf16.mxu0 0
    %958 = vmatpush1.bf16.msra.mxu0 0
    %959 = vmatprep.subr.bf16.mxu0 0
    %960 = vmatpush1.bf16.msra.mxu0 0
    %961 = vmatprep.subr.bf16.mxu0 0
    %962 = vmatpush1.bf16.msra.mxu0 0
    %963 = vmatprep.subr.bf16.mxu0 0
    %964 = vmatpush1.bf16.msra.mxu0 0
    %965 = vmatprep.subr.bf16.mxu0 0
    %966 = vmatpush1.bf16.msra.mxu0 0
    %967 = vmatprep.subr.bf16.mxu0 0
    %968 = vmatpush1.bf16.msra.mxu0 0
    %969 = vmatprep.subr.bf16.mxu0 0
    %970 = vmatpush1.bf16.msra.mxu0 0
    %971 = vmatprep.subr.bf16.mxu0 0
    %972 = vmatpush1.bf16.msra.mxu0 0
    %973 = vmatprep.subr.bf16.mxu0 0
    %974 = vmatpush1.bf16.msra.mxu0 0
    %975 = vmatprep.subr.bf16.mxu0 0
    %976 = vmatpush1.bf16.msra.mxu0 0
    %977 = vmatprep.subr.bf16.mxu0 0
    %978 = vmatpush1.bf16.msra.mxu0 0
    %979 = vmatprep.subr.bf16.mxu0 0
    %980 = vmatpush1.bf16.msra.mxu0 0
    %981 = vmatprep.subr.bf16.mxu0 0
    %982 = vmatpush1.bf16.msra.mxu0 0
    %983 = vmatprep.mubr.bf16.mxu0 0
    %984 = vmatmul.mubr.bf16.gmra.mrb[0].mxu0 %v946
    %v985 = vpop.f32.mrb[0].mxu0
    %v986 = vadd.f32 0.0, %v985
    %v987 = vpop.f32.mrb[0].mxu0
    %v988 = vpop.f32.mrb[0].mxu0
    %v989 = vpop.f32.mrb[0].mxu0
    %990 = vdwg.mxu0
    %991 = vrot.lane.b32.xlu0 %v289, 64
    %v992 = vpop.permute.xlu0 %991
    %v994 = vsel %vm296, %v794, 0
    %v997 = vsel %vm803, %v992, 0
    %999 = vmatprep.subr.bf16.mxu0 0
    %1000 = vmatpush1.bf16.msra.mxu0 %v997
    %1001 = vmatprep.subr.bf16.mxu0 0
    %1002 = vmatpush1.bf16.msra.mxu0 0
    %1003 = vmatprep.subr.bf16.mxu0 0
    %1004 = vmatpush1.bf16.msra.mxu0 0
    %1005 = vmatprep.subr.bf16.mxu0 0
    %1006 = vmatpush1.bf16.msra.mxu0 0
    %1007 = vmatprep.subr.bf16.mxu0 0
    %1008 = vmatpush1.bf16.msra.mxu0 0
    %1009 = vmatprep.subr.bf16.mxu0 0
    %1010 = vmatpush1.bf16.msra.mxu0 0
    %1011 = vmatprep.subr.bf16.mxu0 0
    %1012 = vmatpush1.bf16.msra.mxu0 0
    %1013 = vmatprep.subr.bf16.mxu0 0
    %1014 = vmatpush1.bf16.msra.mxu0 0
    %1015 = vmatprep.subr.bf16.mxu0 0
    %1016 = vmatpush1.bf16.msra.mxu0 0
    %1017 = vmatprep.subr.bf16.mxu0 0
    %1018 = vmatpush1.bf16.msra.mxu0 0
    %1019 = vmatprep.subr.bf16.mxu0 0
    %1020 = vmatpush1.bf16.msra.mxu0 0
    %1021 = vmatprep.subr.bf16.mxu0 0
    %1022 = vmatpush1.bf16.msra.mxu0 0
    %1023 = vmatprep.subr.bf16.mxu0 0
    %1024 = vmatpush1.bf16.msra.mxu0 0
    %1025 = vmatprep.subr.bf16.mxu0 0
    %1026 = vmatpush1.bf16.msra.mxu0 0
    %1027 = vmatprep.subr.bf16.mxu0 0
    %1028 = vmatpush1.bf16.msra.mxu0 0
    %1029 = vmatprep.subr.bf16.mxu0 0
    %1030 = vmatpush1.bf16.msra.mxu0 0
    %1031 = vmatprep.mubr.bf16.mxu0 0
    %1032 = vmatmul.mubr.bf16.gmra.mrb[0].mxu0 %v994
    %v1033 = vpop.f32.mrb[0].mxu0
    %v1034 = vadd.f32 0.0, %v1033
    %v1035 = vpop.f32.mrb[0].mxu0
    %v1036 = vpop.f32.mrb[0].mxu0
    %v1037 = vpop.f32.mrb[0].mxu0
    %1038 = vdwg.mxu0
    %1039 = vrot.lane.b32.xlu0 %v290, 64
    %v1040 = vpop.permute.xlu0 %1039
    %v1042 = vsel %vm296, %v795, 0
    %v1045 = vsel %vm803, %v1040, 0
    %1047 = vmatprep.subr.bf16.mxu0 0
    %1048 = vmatpush1.bf16.msra.mxu0 %v1045
    %1049 = vmatprep.subr.bf16.mxu0 0
    %1050 = vmatpush1.bf16.msra.mxu0 0
    %1051 = vmatprep.subr.bf16.mxu0 0
    %1052 = vmatpush1.bf16.msra.mxu0 0
    %1053 = vmatprep.subr.bf16.mxu0 0
    %1054 = vmatpush1.bf16.msra.mxu0 0
    %1055 = vmatprep.subr.bf16.mxu0 0
    %1056 = vmatpush1.bf16.msra.mxu0 0
    %1057 = vmatprep.subr.bf16.mxu0 0
    %1058 = vmatpush1.bf16.msra.mxu0 0
    %1059 = vmatprep.subr.bf16.mxu0 0
    %1060 = vmatpush1.bf16.msra.mxu0 0
    %1061 = vmatprep.subr.bf16.mxu0 0
    %1062 = vmatpush1.bf16.msra.mxu0 0
    %1063 = vmatprep.subr.bf16.mxu0 0
    %1064 = vmatpush1.bf16.msra.mxu0 0
    %1065 = vmatprep.subr.bf16.mxu0 0
    %1066 = vmatpush1.bf16.msra.mxu0 0
    %1067 = vmatprep.subr.bf16.mxu0 0
    %1068 = vmatpush1.bf16.msra.mxu0 0
    %1069 = vmatprep.subr.bf16.mxu0 0
    %1070 = vmatpush1.bf16.msra.mxu0 0
    %1071 = vmatprep.subr.bf16.mxu0 0
    %1072 = vmatpush1.bf16.msra.mxu0 0
    %1073 = vmatprep.subr.bf16.mxu0 0
    %1074 = vmatpush1.bf16.msra.mxu0 0
    %1075 = vmatprep.subr.bf16.mxu0 0
    %1076 = vmatpush1.bf16.msra.mxu0 0
    %1077 = vmatprep.subr.bf16.mxu0 0
    %1078 = vmatpush1.bf16.msra.mxu0 0
    %1079 = vmatprep.mubr.bf16.mxu0 0
    %1080 = vmatmul.mubr.bf16.gmra.mrb[0].mxu0 %v1042
    %v1081 = vpop.f32.mrb[0].mxu0
    %v1082 = vadd.f32 0.0, %v1081
    %v1083 = vpop.f32.mrb[0].mxu0
    %v1084 = vpop.f32.mrb[0].mxu0
    %v1085 = vpop.f32.mrb[0].mxu0
    %1086 = vdwg.mxu0
    %1087 = vrot.lane.b32.xlu0 %v291, 64
    %v1088 = vpop.permute.xlu0 %1087
    %v1090 = vsel %vm296, %v796, 0
    %v1093 = vsel %vm803, %v1088, 0
    %1095 = vmatprep.subr.bf16.mxu0 0
    %1096 = vmatpush1.bf16.msra.mxu0 %v1093
    %1097 = vmatprep.subr.bf16.mxu0 0
    %1098 = vmatpush1.bf16.msra.mxu0 0
    %1099 = vmatprep.subr.bf16.mxu0 0
    %1100 = vmatpush1.bf16.msra.mxu0 0
    %1101 = vmatprep.subr.bf16.mxu0 0
    %1102 = vmatpush1.bf16.msra.mxu0 0
    %1103 = vmatprep.subr.bf16.mxu0 0
    %1104 = vmatpush1.bf16.msra.mxu0 0
    %1105 = vmatprep.subr.bf16.mxu0 0
    %1106 = vmatpush1.bf16.msra.mxu0 0
    %1107 = vmatprep.subr.bf16.mxu0 0
    %1108 = vmatpush1.bf16.msra.mxu0 0
    %1109 = vmatprep.subr.bf16.mxu0 0
    %1110 = vmatpush1.bf16.msra.mxu0 0
    %1111 = vmatprep.subr.bf16.mxu0 0
    %1112 = vmatpush1.bf16.msra.mxu0 0
    %1113 = vmatprep.subr.bf16.mxu0 0
    %1114 = vmatpush1.bf16.msra.mxu0 0
    %1115 = vmatprep.subr.bf16.mxu0 0
    %1116 = vmatpush1.bf16.msra.mxu0 0
    %1117 = vmatprep.subr.bf16.mxu0 0
    %1118 = vmatpush1.bf16.msra.mxu0 0
    %1119 = vmatprep.subr.bf16.mxu0 0
    %1120 = vmatpush1.bf16.msra.mxu0 0
    %1121 = vmatprep.subr.bf16.mxu0 0
    %1122 = vmatpush1.bf16.msra.mxu0 0
    %1123 = vmatprep.subr.bf16.mxu0 0
    %1124 = vmatpush1.bf16.msra.mxu0 0
    %1125 = vmatprep.subr.bf16.mxu0 0
    %1126 = vmatpush1.bf16.msra.mxu0 0
    %1127 = vmatprep.mubr.bf16.mxu0 0
    %1128 = vmatmul.mubr.bf16.gmra.mrb[0].mxu0 %v1090
    %v1129 = vpop.f32.mrb[0].mxu0
    %v1130 = vadd.f32 0.0, %v1129
    %v1131 = vpop.f32.mrb[0].mxu0
    %v1132 = vpop.f32.mrb[0].mxu0
    %v1133 = vpop.f32.mrb[0].mxu0
    %1134 = vdwg.mxu0
    %1135 = vrot.lane.b32.xlu0 %v292, 64
    %v1136 = vpop.permute.xlu0 %1135
    %v1138 = vsel %vm296, %v797, 0
    %v1141 = vsel %vm803, %v1136, 0
    %1143 = vmatprep.subr.bf16.mxu0 0
    %1144 = vmatpush1.bf16.msra.mxu0 %v1141
    %1145 = vmatprep.subr.bf16.mxu0 0
    %1146 = vmatpush1.bf16.msra.mxu0 0
    %1147 = vmatprep.subr.bf16.mxu0 0
    %1148 = vmatpush1.bf16.msra.mxu0 0
    %1149 = vmatprep.subr.bf16.mxu0 0
    %1150 = vmatpush1.bf16.msra.mxu0 0
    %1151 = vmatprep.subr.bf16.mxu0 0
    %1152 = vmatpush1.bf16.msra.mxu0 0
    %1153 = vmatprep.subr.bf16.mxu0 0
    %1154 = vmatpush1.bf16.msra.mxu0 0
    %1155 = vmatprep.subr.bf16.mxu0 0
    %1156 = vmatpush1.bf16.msra.mxu0 0
    %1157 = vmatprep.subr.bf16.mxu0 0
    %1158 = vmatpush1.bf16.msra.mxu0 0
    %1159 = vmatprep.subr.bf16.mxu0 0
    %1160 = vmatpush1.bf16.msra.mxu0 0
    %1161 = vmatprep.subr.bf16.mxu0 0
    %1162 = vmatpush1.bf16.msra.mxu0 0
    %1163 = vmatprep.subr.bf16.mxu0 0
    %1164 = vmatpush1.bf16.msra.mxu0 0
    %1165 = vmatprep.subr.bf16.mxu0 0
    %1166 = vmatpush1.bf16.msra.mxu0 0
    %1167 = vmatprep.subr.bf16.mxu0 0
    %1168 = vmatpush1.bf16.msra.mxu0 0
    %1169 = vmatprep.subr.bf16.mxu0 0
    %1170 = vmatpush1.bf16.msra.mxu0 0
    %1171 = vmatprep.subr.bf16.mxu0 0
    %1172 = vmatpush1.bf16.msra.mxu0 0
    %1173 = vmatprep.subr.bf16.mxu0 0
    %1174 = vmatpush1.bf16.msra.mxu0 0
    %1175 = vmatprep.mubr.bf16.mxu0 0
    %1176 = vmatmul.mubr.bf16.gmra.mrb[0].mxu0 %v1138
    %v1177 = vpop.f32.mrb[0].mxu0
    %v1178 = vadd.f32 0.0, %v1177
    %v1179 = vpop.f32.mrb[0].mxu0
    %v1180 = vpop.f32.mrb[0].mxu0
    %v1181 = vpop.f32.mrb[0].mxu0
    %1182 = vdwg.mxu0
    %1185 = vrot.lane.b32.xlu0 %v890, 8
    %v1186 = vpop.permute.xlu0 %1185
    %1187 = vrot.lane.b32.xlu0 %v1082, 8
    %v1188 = vpop.permute.xlu0 %1187
    %1193 = vrot.lane.b32.xlu0 %v938, 16
    %v1194 = vpop.permute.xlu0 %1193
    %1195 = vrot.lane.b32.xlu0 %v1130, 16
    %v1196 = vpop.permute.xlu0 %1195
    %1201 = vrot.lane.b32.xlu0 %v986, 24
    %v1202 = vpop.permute.xlu0 %1201
    %1203 = vrot.lane.b32.xlu0 %v1178, 24
    %v1204 = vpop.permute.xlu0 %1203
    %v1207 = vsel %vm296, %v842, %v1186
    %v1208 = vsel %vm296, %v1034, %v1188
    %vm1209 = vcmask 130048
    %v1210 = vsel %vm1209, %v1207, %v1194
    %v1211 = vsel %vm1209, %v1208, %v1196
    %vm1212 = vcmask 195584
    %v1213 = vsel %vm1212, %v1210, %v1202
    %v1214 = vsel %vm1212, %v1211, %v1204
    %v1215 = vpack.c.bf16 %v1214, %v1213
    %v1216 = vld [vmem:[%s6] sm:$0xf]
    %v1217 = vld [vmem:[%s6 + $0x4] sm:$0xf]
    %v1218 = vld [vmem:[%s6 + $0x8] sm:$0xf]
    %v1219 = vld [vmem:[%s6 + $0xc] sm:$0xf]
    %v1220 = vld [vmem:[%s3 + $0x4] sm:$0x1]
    %v1221 = vlaneseq
    %v1222 = vshrl.u32 %v1221, 7
    %v1223 = vsub.s32 0, %v1222
    %v1224 = vrot.slane %v1220, %v1223
    %v1229 = vunpack.c.l.b16 %v1216
    %v1230 = vunpack.c.l.b16 %v1217
    %v1231 = vunpack.c.l.b16 %v1218
    %v1232 = vunpack.c.l.b16 %v1219
    %v1233 = vpack.c.b16 %v1230, %v1229
    %v1234 = vpack.c.b16 %v1232, %v1231
    %v1238 = vsel %vm119, %v1215, 0
    %1240 = vmatprep.subr.bf16.mxu0 0
    %1241 = vmatpush1.bf16.msra.mxu0 %v1233
    %1242 = vmatprep.subr.bf16.mxu0 0
    %1243 = vmatpush1.bf16.msra.mxu0 %v1234
    %1244 = vmatprep.subr.bf16.mxu0 0
    %1245 = vmatpush1.bf16.msra.mxu0 0
    %1246 = vmatprep.subr.bf16.mxu0 0
    %1247 = vmatpush1.bf16.msra.mxu0 0
    %1248 = vmatprep.subr.bf16.mxu0 0
    %1249 = vmatpush1.bf16.msra.mxu0 0
    %1250 = vmatprep.subr.bf16.mxu0 0
    %1251 = vmatpush1.bf16.msra.mxu0 0
    %1252 = vmatprep.subr.bf16.mxu0 0
    %1253 = vmatpush1.bf16.msra.mxu0 0
    %1254 = vmatprep.subr.bf16.mxu0 0
    %1255 = vmatpush1.bf16.msra.mxu0 0
    %1256 = vmatprep.subr.bf16.mxu0 0
    %1257 = vmatpush1.bf16.msra.mxu0 0
    %1258 = vmatprep.subr.bf16.mxu0 0
    %1259 = vmatpush1.bf16.msra.mxu0 0
    %1260 = vmatprep.subr.bf16.mxu0 0
    %1261 = vmatpush1.bf16.msra.mxu0 0
    %1262 = vmatprep.subr.bf16.mxu0 0
    %1263 = vmatpush1.bf16.msra.mxu0 0
    %1264 = vmatprep.subr.bf16.mxu0 0
    %1265 = vmatpush1.bf16.msra.mxu0 0
    %1266 = vmatprep.subr.bf16.mxu0 0
    %1267 = vmatpush1.bf16.msra.mxu0 0
    %1268 = vmatprep.subr.bf16.mxu0 0
    %1269 = vmatpush1.bf16.msra.mxu0 0
    %1270 = vmatprep.subr.bf16.mxu0 0
    %1271 = vmatpush1.bf16.msra.mxu0 0
    %1272 = vmatprep.mubr.bf16.mxu0 0
    %1273 = vmatmul.mubr.bf16.gmra.mrb[0].mxu0 %v1238
    %v1274 = vpop.f32.mrb[0].mxu0
    %v1275 = vadd.f32 %v1224, %v1274
    %v1276 = vpop.f32.mrb[0].mxu0
    %v1277 = vpop.f32.mrb[0].mxu0
    %v1278 = vadd.f32 %v1224, %v1277
    %v1279 = vpop.f32.mrb[0].mxu0
    %1280 = vdwg.mxu0
    %v1281 = vadd.f32 %v1275, %v157
    %v1282 = vadd.f32 %v1278, %v158
    %v1283 = vld [vmem:[%s3 + $0x2] sm:$0x1]
    %v1284 = vld [vmem:[%s3 + $0x3] sm:$0x1]
    %v1285 = vsel %vm119, %v1281, 0.0
    %1286 = vadd.xlane.f32.xlu0 %v1285
    %v1287 = vpop.xlane.xlu0 %1286
    %v1288 = vsel %vm119, %v1282, 0.0
    %1289 = vadd.xlane.f32.xlu0 %v1288
    %v1290 = vpop.xlane.xlu0 %1289
    %v1291 = vmul.f32 %v1287, %v126
    %v1292 = vmul.f32 %v1290, %v126
    %v1293 = vsub.f32 %v1281, %v1291
    %v1294 = vsub.f32 %v1282, %v1292
    %v1295 = vmul.f32 %v1293, %v1293
    %v1296 = vmul.f32 %v1294, %v1294
    %v1297 = vsel %vm119, %v1295, 0.0
    %1298 = vadd.xlane.f32.xlu0 %v1297
    %v1299 = vpop.xlane.xlu0 %1298
    %v1300 = vsel %vm119, %v1296, 0.0
    %1301 = vadd.xlane.f32.xlu0 %v1300
    %v1302 = vpop.xlane.xlu0 %1301
    %v1303 = vmul.f32 %v1299, %v126
    %v1304 = vmul.f32 %v1302, %v126
    %v1305 = vadd.f32 %v1303, 1e-05
    %v1306 = vadd.f32 %v1304, 1e-05
    %v1307 = vrsqrt.pop %v1305
    %v1308 = vrsqrt.pop %v1306
    %v1309 = vmul.f32 %v1293, %v1307
    %v1310 = vmul.f32 %v1294, %v1308
    %v1311 = vlaneseq
    %v1312 = vshrl.u32 %v1311, 7
    %v1313 = vsub.s32 0, %v1312
    %v1314 = vrot.slane %v1283, %v1313
    %v1315 = vmul.f32 %v1309, %v1314
    %v1316 = vmul.f32 %v1310, %v1314
    %v1317 = vlaneseq
    %v1318 = vshrl.u32 %v1317, 7
    %v1319 = vsub.s32 0, %v1318
    %v1320 = vrot.slane %v1284, %v1319
    %v1321 = vadd.f32 %v1315, %v1320
    %v1322 = vadd.f32 %v1316, %v1320
    %v1323 = vpack.c.bf16 %v1322, %v1321
    %v1324 = vld [vmem:[%s7] sm:$0xf]
    %v1325 = vld [vmem:[%s7 + $0x4] sm:$0xf]
    %v1326 = vld [vmem:[%s7 + $0x8] sm:$0xf]
    %v1327 = vld [vmem:[%s7 + $0xc] sm:$0xf]
    %v1328 = vld [vmem:[%s3 + $0x7] sm:$0x1]
    %v1329 = vlaneseq
    %v1330 = vshrl.u32 %v1329, 7
    %v1331 = vsub.s32 0, %v1330
    %v1332 = vrot.slane %v1328, %v1331
    %v1337 = vunpack.c.l.b16 %v1324
    %v1338 = vunpack.c.l.b16 %v1325
    %v1339 = vunpack.c.l.b16 %v1326
    %v1340 = vunpack.c.l.b16 %v1327
    %v1341 = vpack.c.b16 %v1338, %v1337
    %v1342 = vpack.c.b16 %v1340, %v1339
    %v1346 = vsel %vm119, %v1323, 0
    %1348 = vmatprep.subr.bf16.mxu0 0
    %1349 = vmatpush1.bf16.msra.mxu0 %v1341
    %1350 = vmatprep.subr.bf16.mxu0 0
    %1351 = vmatpush1.bf16.msra.mxu0 %v1342
    %1352 = vmatprep.subr.bf16.mxu0 0
    %1353 = vmatpush1.bf16.msra.mxu0 0
    %1354 = vmatprep.subr.bf16.mxu0 0
    %1355 = vmatpush1.bf16.msra.mxu0 0
    %1356 = vmatprep.subr.bf16.mxu0 0
    %1357 = vmatpush1.bf16.msra.mxu0 0
    %1358 = vmatprep.subr.bf16.mxu0 0
    %1359 = vmatpush1.bf16.msra.mxu0 0
    %1360 = vmatprep.subr.bf16.mxu0 0
    %1361 = vmatpush1.bf16.msra.mxu0 0
    %1362 = vmatprep.subr.bf16.mxu0 0
    %1363 = vmatpush1.bf16.msra.mxu0 0
    %1364 = vmatprep.subr.bf16.mxu0 0
    %1365 = vmatpush1.bf16.msra.mxu0 0
    %1366 = vmatprep.subr.bf16.mxu0 0
    %1367 = vmatpush1.bf16.msra.mxu0 0
    %1368 = vmatprep.subr.bf16.mxu0 0
    %1369 = vmatpush1.bf16.msra.mxu0 0
    %1370 = vmatprep.subr.bf16.mxu0 0
    %1371 = vmatpush1.bf16.msra.mxu0 0
    %1372 = vmatprep.subr.bf16.mxu0 0
    %1373 = vmatpush1.bf16.msra.mxu0 0
    %1374 = vmatprep.subr.bf16.mxu0 0
    %1375 = vmatpush1.bf16.msra.mxu0 0
    %1376 = vmatprep.subr.bf16.mxu0 0
    %1377 = vmatpush1.bf16.msra.mxu0 0
    %1378 = vmatprep.subr.bf16.mxu0 0
    %1379 = vmatpush1.bf16.msra.mxu0 0
    %1380 = vmatprep.mubr.bf16.mxu0 0
    %1381 = vmatmul.mubr.bf16.gmra.mrb[0].mxu0 %v1346
    %v1382 = vpop.f32.mrb[0].mxu0
    %v1383 = vadd.f32 %v1332, %v1382
    %v1384 = vpop.f32.mrb[0].mxu0
    %v1385 = vpop.f32.mrb[0].mxu0
    %v1386 = vadd.f32 %v1332, %v1385
    %v1387 = vpop.f32.mrb[0].mxu0
    %1388 = vdwg.mxu0
    %v1389 = vmax.f32 %v1383, 0.0
    %v1390 = vmax.f32 %v1386, 0.0
    %v1391 = vpack.c.bf16 %v1390, %v1389
    %v1392 = vld [vmem:[%s8] sm:$0xf]
    %v1393 = vld [vmem:[%s8 + $0x4] sm:$0xf]
    %v1394 = vld [vmem:[%s8 + $0x8] sm:$0xf]
    %v1395 = vld [vmem:[%s8 + $0xc] sm:$0xf]
    %v1396 = vld [vmem:[%s8 + $0x10] sm:$0xf]
    %v1397 = vld [vmem:[%s8 + $0x14] sm:$0xf]
    %v1398 = vld [vmem:[%s8 + $0x18] sm:$0xf]
    %v1399 = vld [vmem:[%s8 + $0x1c] sm:$0xf]
    %v1400 = vld [vmem:[%s8 + $0x20] sm:$0xf]
    %v1401 = vld [vmem:[%s8 + $0x24] sm:$0xf]
    %v1402 = vld [vmem:[%s8 + $0x28] sm:$0xf]
    %v1403 = vld [vmem:[%s8 + $0x2c] sm:$0xf]
    %v1404 = vld [vmem:[%s8 + $0x30] sm:$0xf]
    %v1405 = vld [vmem:[%s8 + $0x34] sm:$0xf]
    %v1406 = vld [vmem:[%s8 + $0x38] sm:$0xf]
    %v1407 = vld [vmem:[%s8 + $0x3c] sm:$0xf]
    %v1408 = vld [vmem:[%s3 + $0x5] sm:$0x1]
    %v1409 = vlaneseq
    %v1410 = vshrl.u32 %v1409, 7
    %v1411 = vsub.s32 0, %v1410
    %v1412 = vrot.slane %v1408, %v1411
    %v1429 = vunpack.c.l.b16 %v1392
    %v1430 = vunpack.c.l.b16 %v1393
    %v1431 = vunpack.c.l.b16 %v1394
    %v1432 = vunpack.c.l.b16 %v1395
    %v1433 = vunpack.c.l.b16 %v1396
    %v1434 = vunpack.c.l.b16 %v1397
    %v1435 = vunpack.c.l.b16 %v1398
    %v1436 = vunpack.c.l.b16 %v1399
    %v1437 = vunpack.c.l.b16 %v1400
    %v1438 = vunpack.c.l.b16 %v1401
    %v1439 = vunpack.c.l.b16 %v1402
    %v1440 = vunpack.c.l.b16 %v1403
    %v1441 = vunpack.c.l.b16 %v1404
    %v1442 = vunpack.c.l.b16 %v1405
    %v1443 = vunpack.c.l.b16 %v1406
    %v1444 = vunpack.c.l.b16 %v1407
    %v1445 = vpack.c.b16 %v1430, %v1429
    %v1446 = vpack.c.b16 %v1432, %v1431
    %v1447 = vpack.c.b16 %v1434, %v1433
    %v1448 = vpack.c.b16 %v1436, %v1435
    %v1449 = vpack.c.b16 %v1438, %v1437
    %v1450 = vpack.c.b16 %v1440, %v1439
    %v1451 = vpack.c.b16 %v1442, %v1441
    %v1452 = vpack.c.b16 %v1444, %v1443
    %1461 = vmatprep.subr.bf16.mxu0 0
    %1462 = vmatpush1.bf16.msra.mxu0 %v1445
    %1463 = vmatprep.subr.bf16.mxu0 0
    %1464 = vmatpush1.bf16.msra.mxu0 %v1446
    %1465 = vmatprep.subr.bf16.mxu0 0
    %1466 = vmatpush1.bf16.msra.mxu0 %v1447
    %1467 = vmatprep.subr.bf16.mxu0 0
    %1468 = vmatpush1.bf16.msra.mxu0 %v1448
    %1469 = vmatprep.subr.bf16.mxu0 0
    %1470 = vmatpush1.bf16.msra.mxu0 %v1449
    %1471 = vmatprep.subr.bf16.mxu0 0
    %1472 = vmatpush1.bf16.msra.mxu0 %v1450
    %1473 = vmatprep.subr.bf16.mxu0 0
    %1474 = vmatpush1.bf16.msra.mxu0 %v1451
    %1475 = vmatprep.subr.bf16.mxu0 0
    %1476 = vmatpush1.bf16.msra.mxu0 %v1452
    %1477 = vmatprep.subr.bf16.mxu0 0
    %1478 = vmatpush1.bf16.msra.mxu0 0
    %1479 = vmatprep.subr.bf16.mxu0 0
    %1480 = vmatpush1.bf16.msra.mxu0 0
    %1481 = vmatprep.subr.bf16.mxu0 0
    %1482 = vmatpush1.bf16.msra.mxu0 0
    %1483 = vmatprep.subr.bf16.mxu0 0
    %1484 = vmatpush1.bf16.msra.mxu0 0
    %1485 = vmatprep.subr.bf16.mxu0 0
    %1486 = vmatpush1.bf16.msra.mxu0 0
    %1487 = vmatprep.subr.bf16.mxu0 0
    %1488 = vmatpush1.bf16.msra.mxu0 0
    %1489 = vmatprep.subr.bf16.mxu0 0
    %1490 = vmatpush1.bf16.msra.mxu0 0
    %1491 = vmatprep.subr.bf16.mxu0 0
    %1492 = vmatpush1.bf16.msra.mxu0 0
    %1493 = vmatprep.mubr.bf16.mxu0 0
    %1494 = vmatmul.mubr.bf16.gmra.mrb[0].mxu0 %v1391
    %v1495 = vpop.f32.mrb[0].mxu0
    %v1496 = vadd.f32 %v1412, %v1495
    %v1497 = vpop.f32.mrb[0].mxu0
    %v1498 = vpop.f32.mrb[0].mxu0
    %v1499 = vadd.f32 %v1412, %v1498
    %v1500 = vpop.f32.mrb[0].mxu0
    %1501 = vdwg.mxu0
    %v1502 = vsel %vm52, 1, 0
    %v1503 = vsel %vm53, 1, 0
    %1504 = vset.pattern.permute.xlu0 6
    %1505 = vperm.xlu0 %1504, %v1502
    %v1506 = vpop.permute.xlu0 %1505
    %1507 = vset.pattern.permute.xlu0 6
    %1508 = vperm.xlu0 %1507, %v1503
    %v1509 = vpop.permute.xlu0 %1508
    %vm1510 = vcmp.eq.s32.totalorder %v1506, 1
    %vm1511 = vcmp.eq.s32.totalorder %v1509, 1
    %v1512 = vsel %vm1510, 0.0, %v1496
    %v1513 = vsel %vm1511, 0.0, %v1499
    %v1514 = vadd.f32 %v1512, %v1321
    %v1515 = vadd.f32 %v1513, %v1322
    %v1516 = vld [vmem:[%s3 + $0x8] sm:$0x1]
    %v1517 = vld [vmem:[%s3 + $0x9] sm:$0x1]
    %v1518 = vsel %vm119, %v1514, 0.0
    %1519 = vadd.xlane.f32.xlu0 %v1518
    %v1520 = vpop.xlane.xlu0 %1519
    %v1521 = vsel %vm119, %v1515, 0.0
    %1522 = vadd.xlane.f32.xlu0 %v1521
    %v1523 = vpop.xlane.xlu0 %1522
    %v1524 = vmul.f32 %v1520, %v126
    %v1525 = vmul.f32 %v1523, %v126
    %v1526 = vsub.f32 %v1514, %v1524
    %v1527 = vsub.f32 %v1515, %v1525
    %v1528 = vmul.f32 %v1526, %v1526
    %v1529 = vmul.f32 %v1527, %v1527
    %v1530 = vsel %vm119, %v1528, 0.0
    %1531 = vadd.xlane.f32.xlu0 %v1530
    %v1532 = vpop.xlane.xlu0 %1531
    %v1533 = vsel %vm119, %v1529, 0.0
    %1534 = vadd.xlane.f32.xlu0 %v1533
    %v1535 = vpop.xlane.xlu0 %1534
    %v1536 = vmul.f32 %v1532, %v126
    %v1537 = vmul.f32 %v1535, %v126
    %v1538 = vadd.f32 %v1536, 1e-05
    %v1539 = vadd.f32 %v1537, 1e-05
    %v1540 = vrsqrt.pop %v1538
    %v1541 = vrsqrt.pop %v1539
    %v1542 = vmul.f32 %v1526, %v1540
    %v1543 = vmul.f32 %v1527, %v1541
    %v1544 = vlaneseq
    %v1545 = vshrl.u32 %v1544, 7
    %v1546 = vsub.s32 0, %v1545
    %v1547 = vrot.slane %v1516, %v1546
    %v1548 = vmul.f32 %v1542, %v1547
    %v1549 = vmul.f32 %v1543, %v1547
    %v1550 = vlaneseq
    %v1551 = vshrl.u32 %v1550, 7
    %v1552 = vsub.s32 0, %v1551
    %v1553 = vrot.slane %v1517, %v1552
    %v1554 = vadd.f32 %v1548, %v1553
    %v1555 = vadd.f32 %v1549, %v1553
    %v1556 = vpack.c.bf16 %v1555, %v1554
    %s1557 = scalar_lea.vmem %s5, 16
    %v1558 = vld [vmem:[%s1557] sm:$0xf]
    %v1559 = vld [vmem:[%s1557 + $0x4] sm:$0xf]
    %v1560 = vld [vmem:[%s1557 + $0x8] sm:$0xf]
    %v1561 = vld [vmem:[%s1557 + $0xc] sm:$0xf]
    %v1562 = vld [vmem:[%s3 + $0xe] sm:$0x1]
    %v1563 = vlaneseq
    %v1564 = vshrl.u32 %v1563, 7
    %v1565 = vsub.s32 0, %v1564
    %v1566 = vrot.slane %v1562, %v1565
    %v1571 = vunpack.c.l.b16 %v1558
    %v1572 = vunpack.c.l.b16 %v1559
    %v1573 = vunpack.c.l.b16 %v1560
    %v1574 = vunpack.c.l.b16 %v1561
    %v1575 = vpack.c.b16 %v1572, %v1571
    %v1576 = vpack.c.b16 %v1574, %v1573
    %v1580 = vsel %vm119, %v1556, 0
    %1582 = vmatprep.subr.bf16.mxu0 0
    %1583 = vmatpush1.bf16.msra.mxu0 %v1575
    %1584 = vmatprep.subr.bf16.mxu0 0
    %1585 = vmatpush1.bf16.msra.mxu0 %v1576
    %1586 = vmatprep.subr.bf16.mxu0 0
    %1587 = vmatpush1.bf16.msra.mxu0 0
    %1588 = vmatprep.subr.bf16.mxu0 0
    %1589 = vmatpush1.bf16.msra.mxu0 0
    %1590 = vmatprep.subr.bf16.mxu0 0
    %1591 = vmatpush1.bf16.msra.mxu0 0
    %1592 = vmatprep.subr.bf16.mxu0 0
    %1593 = vmatpush1.bf16.msra.mxu0 0
    %1594 = vmatprep.subr.bf16.mxu0 0
    %1595 = vmatpush1.bf16.msra.mxu0 0
    %1596 = vmatprep.subr.bf16.mxu0 0
    %1597 = vmatpush1.bf16.msra.mxu0 0
    %1598 = vmatprep.subr.bf16.mxu0 0
    %1599 = vmatpush1.bf16.msra.mxu0 0
    %1600 = vmatprep.subr.bf16.mxu0 0
    %1601 = vmatpush1.bf16.msra.mxu0 0
    %1602 = vmatprep.subr.bf16.mxu0 0
    %1603 = vmatpush1.bf16.msra.mxu0 0
    %1604 = vmatprep.subr.bf16.mxu0 0
    %1605 = vmatpush1.bf16.msra.mxu0 0
    %1606 = vmatprep.subr.bf16.mxu0 0
    %1607 = vmatpush1.bf16.msra.mxu0 0
    %1608 = vmatprep.subr.bf16.mxu0 0
    %1609 = vmatpush1.bf16.msra.mxu0 0
    %1610 = vmatprep.subr.bf16.mxu0 0
    %1611 = vmatpush1.bf16.msra.mxu0 0
    %1612 = vmatprep.subr.bf16.mxu0 0
    %1613 = vmatpush1.bf16.msra.mxu0 0
    %1614 = vmatprep.mubr.bf16.mxu0 0
    %1615 = vmatmul.mubr.bf16.gmra.mrb[0].mxu0 %v1580
    %v1616 = vpop.f32.mrb[0].mxu0
    %v1617 = vadd.f32 %v1566, %v1616
    %v1618 = vpop.f32.mrb[0].mxu0
    %v1619 = vpop.f32.mrb[0].mxu0
    %v1620 = vadd.f32 %v1566, %v1619
    %v1621 = vpop.f32.mrb[0].mxu0
    %1622 = vdwg.mxu0
    %1625 = vrot.lane.b32.xlu0 %v1617, 120
    %v1626 = vpop.permute.xlu0 %1625
    %1627 = vrot.lane.b32.xlu0 %v1620, 120
    %v1628 = vpop.permute.xlu0 %1627
    %1631 = vrot.lane.b32.xlu0 %v1617, 112
    %v1632 = vpop.permute.xlu0 %1631
    %1633 = vrot.lane.b32.xlu0 %v1620, 112
    %v1634 = vpop.permute.xlu0 %1633
    %1637 = vrot.lane.b32.xlu0 %v1617, 104
    %v1638 = vpop.permute.xlu0 %1637
    %1639 = vrot.lane.b32.xlu0 %v1620, 104
    %v1640 = vpop.permute.xlu0 %1639
    %s1643 = sld [smem:[#allocation2 + $0x80]]
    %s1644 = sld [smem:[#allocation2 + $0x180]]
    %v1645 = vstv %s1643
    %v1646 = vmul.f32 %v1645, %v54
    %v1647 = vmul.f32 %v1645, %v55
    %v1648 = vstv %s1644
    %v1649 = vadd.f32 %v1646, %v1648
    %v1650 = vadd.f32 %v1647, %v1648
    %v1651 = vsel %vm59, -1e+30, %v1649
    %v1652 = vsel %vm60, -1e+30, %v1650
    %s1653 = sld [smem:[#allocation2 + $0x81]]
    %s1654 = sld [smem:[#allocation2 + $0x181]]
    %v1655 = vstv %s1653
    %v1656 = vmul.f32 %v1655, %v54
    %v1657 = vmul.f32 %v1655, %v55
    %v1658 = vstv %s1654
    %v1659 = vadd.f32 %v1656, %v1658
    %v1660 = vadd.f32 %v1657, %v1658
    %v1661 = vsel %vm59, -1e+30, %v1659
    %v1662 = vsel %vm60, -1e+30, %v1660
    %s1663 = sld [smem:[#allocation2 + $0x82]]
    %s1664 = sld [smem:[#allocation2 + $0x182]]
    %v1665 = vstv %s1663
    %v1666 = vmul.f32 %v1665, %v54
    %v1667 = vmul.f32 %v1665, %v55
    %v1668 = vstv %s1664
    %v1669 = vadd.f32 %v1666, %v1668
    %v1670 = vadd.f32 %v1667, %v1668
    %v1671 = vsel %vm59, -1e+30, %v1669
    %v1672 = vsel %vm60, -1e+30, %v1670
    %s1673 = sld [smem:[#allocation2 + $0x83]]
    %s1674 = sld [smem:[#allocation2 + $0x183]]
    %v1675 = vstv %s1673
    %v1676 = vmul.f32 %v1675, %v54
    %v1677 = vmul.f32 %v1675, %v55
    %v1678 = vstv %s1674
    %v1679 = vadd.f32 %v1676, %v1678
    %v1680 = vadd.f32 %v1677, %v1678
    %v1681 = vsel %vm59, -1e+30, %v1679
    %v1682 = vsel %vm60, -1e+30, %v1680
    %v1683 = vpack.c.bf16 %v1617, %v1617
    %v1684 = vpack.c.bf16 %v1626, %v1626
    %v1685 = vpack.c.bf16 %v1632, %v1632
    %v1686 = vpack.c.bf16 %v1638, %v1638
    %v1687 = vpack.c.bf16 %v1620, %v1620
    %v1688 = vpack.c.bf16 %v1628, %v1628
    %v1689 = vpack.c.bf16 %v1634, %v1634
    %v1690 = vpack.c.bf16 %v1640, %v1640
    %1692 = vrot.lane.b32.xlu0 %v1683, 96
    %v1693 = vpop.permute.xlu0 %1692
    %v1695 = vsel %vm296, %v1683, 0
    %v1698 = vsel %vm296, %v1693, 0
    %1700 = vmatprep.subr.bf16.mxu0 0
    %1701 = vmatpush1.bf16.xpose.msra.mxu0 %v1698
    %1702 = vmatprep.subr.bf16.mxu0 0
    %1703 = vmatpush1.bf16.xpose.msra.mxu0 0
    %1704 = vmatprep.subr.bf16.mxu0 0
    %1705 = vmatpush1.bf16.xpose.msra.mxu0 0
    %1706 = vmatprep.subr.bf16.mxu0 0
    %1707 = vmatpush1.bf16.xpose.msra.mxu0 0
    %1708 = vmatprep.subr.bf16.mxu0 0
    %1709 = vmatpush1.bf16.xpose.msra.mxu0 0
    %1710 = vmatprep.subr.bf16.mxu0 0
    %1711 = vmatpush1.bf16.xpose.msra.mxu0 0
    %1712 = vmatprep.subr.bf16.mxu0 0
    %1713 = vmatpush1.bf16.xpose.msra.mxu0 0
    %1714 = vmatprep.subr.bf16.mxu0 0
    %1715 = vmatpush1.bf16.xpose.msra.mxu0 0
    %1716 = vmatprep.subr.bf16.mxu0 0
    %1717 = vmatpush1.bf16.xpose.msra.mxu0 0
    %1718 = vmatprep.subr.bf16.mxu0 0
    %1719 = vmatpush1.bf16.xpose.msra.mxu0 0
    %1720 = vmatprep.subr.bf16.mxu0 0
    %1721 = vmatpush1.bf16.xpose.msra.mxu0 0
    %1722 = vmatprep.subr.bf16.mxu0 0
    %1723 = vmatpush1.bf16.xpose.msra.mxu0 0
    %1724 = vmatprep.subr.bf16.mxu0 0
    %1725 = vmatpush1.bf16.xpose.msra.mxu0 0
    %1726 = vmatprep.subr.bf16.mxu0 0
    %1727 = vmatpush1.bf16.xpose.msra.mxu0 0
    %1728 = vmatprep.subr.bf16.mxu0 0
    %1729 = vmatpush1.bf16.xpose.msra.mxu0 0
    %1730 = vmatprep.subr.bf16.mxu0 0
    %1731 = vmatpush1.bf16.xpose.msra.mxu0 0
    %1732 = vmatprep.mubr.bf16.mxu0 0
    %1733 = vmatmul.mubr.bf16.gmra.mrb[0].mxu0 %v1695
    %v1734 = vpop.f32.mrb[0].mxu0
    %v1735 = vadd.f32 0.0, %v1734
    %v1736 = vpop.f32.mrb[0].mxu0
    %v1737 = vpop.f32.mrb[0].mxu0
    %v1738 = vpop.f32.mrb[0].mxu0
    %1739 = vdwg.mxu0
    %1741 = vrot.lane.b32.xlu0 %v1684, 96
    %v1742 = vpop.permute.xlu0 %1741
    %v1744 = vsel %vm296, %v1684, 0
    %v1747 = vsel %vm296, %v1742, 0
    %1749 = vmatprep.subr.bf16.mxu0 0
    %1750 = vmatpush1.bf16.xpose.msra.mxu0 %v1747
    %1751 = vmatprep.subr.bf16.mxu0 0
    %1752 = vmatpush1.bf16.xpose.msra.mxu0 0
    %1753 = vmatprep.subr.bf16.mxu0 0
    %1754 = vmatpush1.bf16.xpose.msra.mxu0 0
    %1755 = vmatprep.subr.bf16.mxu0 0
    %1756 = vmatpush1.bf16.xpose.msra.mxu0 0
    %1757 = vmatprep.subr.bf16.mxu0 0
    %1758 = vmatpush1.bf16.xpose.msra.mxu0 0
    %1759 = vmatprep.subr.bf16.mxu0 0
    %1760 = vmatpush1.bf16.xpose.msra.mxu0 0
    %1761 = vmatprep.subr.bf16.mxu0 0
    %1762 = vmatpush1.bf16.xpose.msra.mxu0 0
    %1763 = vmatprep.subr.bf16.mxu0 0
    %1764 = vmatpush1.bf16.xpose.msra.mxu0 0
    %1765 = vmatprep.subr.bf16.mxu0 0
    %1766 = vmatpush1.bf16.xpose.msra.mxu0 0
    %1767 = vmatprep.subr.bf16.mxu0 0
    %1768 = vmatpush1.bf16.xpose.msra.mxu0 0
    %1769 = vmatprep.subr.bf16.mxu0 0
    %1770 = vmatpush1.bf16.xpose.msra.mxu0 0
    %1771 = vmatprep.subr.bf16.mxu0 0
    %1772 = vmatpush1.bf16.xpose.msra.mxu0 0
    %1773 = vmatprep.subr.bf16.mxu0 0
    %1774 = vmatpush1.bf16.xpose.msra.mxu0 0
    %1775 = vmatprep.subr.bf16.mxu0 0
    %1776 = vmatpush1.bf16.xpose.msra.mxu0 0
    %1777 = vmatprep.subr.bf16.mxu0 0
    %1778 = vmatpush1.bf16.xpose.msra.mxu0 0
    %1779 = vmatprep.subr.bf16.mxu0 0
    %1780 = vmatpush1.bf16.xpose.msra.mxu0 0
    %1781 = vmatprep.mubr.bf16.mxu0 0
    %1782 = vmatmul.mubr.bf16.gmra.mrb[0].mxu0 %v1744
    %v1783 = vpop.f32.mrb[0].mxu0
    %v1784 = vadd.f32 0.0, %v1783
    %v1785 = vpop.f32.mrb[0].mxu0
    %v1786 = vpop.f32.mrb[0].mxu0
    %v1787 = vpop.f32.mrb[0].mxu0
    %1788 = vdwg.mxu0
    %1790 = vrot.lane.b32.xlu0 %v1685, 96
    %v1791 = vpop.permute.xlu0 %1790
    %v1793 = vsel %vm296, %v1685, 0
    %v1796 = vsel %vm296, %v1791, 0
    %1798 = vmatprep.subr.bf16.mxu0 0
    %1799 = vmatpush1.bf16.xpose.msra.mxu0 %v1796
    %1800 = vmatprep.subr.bf16.mxu0 0
    %1801 = vmatpush1.bf16.xpose.msra.mxu0 0
    %1802 = vmatprep.subr.bf16.mxu0 0
    %1803 = vmatpush1.bf16.xpose.msra.mxu0 0
    %1804 = vmatprep.subr.bf16.mxu0 0
    %1805 = vmatpush1.bf16.xpose.msra.mxu0 0
    %1806 = vmatprep.subr.bf16.mxu0 0
    %1807 = vmatpush1.bf16.xpose.msra.mxu0 0
    %1808 = vmatprep.subr.bf16.mxu0 0
    %1809 = vmatpush1.bf16.xpose.msra.mxu0 0
    %1810 = vmatprep.subr.bf16.mxu0 0
    %1811 = vmatpush1.bf16.xpose.msra.mxu0 0
    %1812 = vmatprep.subr.bf16.mxu0 0
    %1813 = vmatpush1.bf16.xpose.msra.mxu0 0
    %1814 = vmatprep.subr.bf16.mxu0 0
    %1815 = vmatpush1.bf16.xpose.msra.mxu0 0
    %1816 = vmatprep.subr.bf16.mxu0 0
    %1817 = vmatpush1.bf16.xpose.msra.mxu0 0
    %1818 = vmatprep.subr.bf16.mxu0 0
    %1819 = vmatpush1.bf16.xpose.msra.mxu0 0
    %1820 = vmatprep.subr.bf16.mxu0 0
    %1821 = vmatpush1.bf16.xpose.msra.mxu0 0
    %1822 = vmatprep.subr.bf16.mxu0 0
    %1823 = vmatpush1.bf16.xpose.msra.mxu0 0
    %1824 = vmatprep.subr.bf16.mxu0 0
    %1825 = vmatpush1.bf16.xpose.msra.mxu0 0
    %1826 = vmatprep.subr.bf16.mxu0 0
    %1827 = vmatpush1.bf16.xpose.msra.mxu0 0
    %1828 = vmatprep.subr.bf16.mxu0 0
    %1829 = vmatpush1.bf16.xpose.msra.mxu0 0
    %1830 = vmatprep.mubr.bf16.mxu0 0
    %1831 = vmatmul.mubr.bf16.gmra.mrb[0].mxu0 %v1793
    %v1832 = vpop.f32.mrb[0].mxu0
    %v1833 = vadd.f32 0.0, %v1832
    %v1834 = vpop.f32.mrb[0].mxu0
    %v1835 = vpop.f32.mrb[0].mxu0
    %v1836 = vpop.f32.mrb[0].mxu0
    %1837 = vdwg.mxu0
    %1839 = vrot.lane.b32.xlu0 %v1686, 96
    %v1840 = vpop.permute.xlu0 %1839
    %v1842 = vsel %vm296, %v1686, 0
    %v1845 = vsel %vm296, %v1840, 0
    %1847 = vmatprep.subr.bf16.mxu0 0
    %1848 = vmatpush1.bf16.xpose.msra.mxu0 %v1845
    %1849 = vmatprep.subr.bf16.mxu0 0
    %1850 = vmatpush1.bf16.xpose.msra.mxu0 0
    %1851 = vmatprep.subr.bf16.mxu0 0
    %1852 = vmatpush1.bf16.xpose.msra.mxu0 0
    %1853 = vmatprep.subr.bf16.mxu0 0
    %1854 = vmatpush1.bf16.xpose.msra.mxu0 0
    %1855 = vmatprep.subr.bf16.mxu0 0
    %1856 = vmatpush1.bf16.xpose.msra.mxu0 0
    %1857 = vmatprep.subr.bf16.mxu0 0
    %1858 = vmatpush1.bf16.xpose.msra.mxu0 0
    %1859 = vmatprep.subr.bf16.mxu0 0
    %1860 = vmatpush1.bf16.xpose.msra.mxu0 0
    %1861 = vmatprep.subr.bf16.mxu0 0
    %1862 = vmatpush1.bf16.xpose.msra.mxu0 0
    %1863 = vmatprep.subr.bf16.mxu0 0
    %1864 = vmatpush1.bf16.xpose.msra.mxu0 0
    %1865 = vmatprep.subr.bf16.mxu0 0
    %1866 = vmatpush1.bf16.xpose.msra.mxu0 0
    %1867 = vmatprep.subr.bf16.mxu0 0
    %1868 = vmatpush1.bf16.xpose.msra.mxu0 0
    %1869 = vmatprep.subr.bf16.mxu0 0
    %1870 = vmatpush1.bf16.xpose.msra.mxu0 0
    %1871 = vmatprep.subr.bf16.mxu0 0
    %1872 = vmatpush1.bf16.xpose.msra.mxu0 0
    %1873 = vmatprep.subr.bf16.mxu0 0
    %1874 = vmatpush1.bf16.xpose.msra.mxu0 0
    %1875 = vmatprep.subr.bf16.mxu0 0
    %1876 = vmatpush1.bf16.xpose.msra.mxu0 0
    %1877 = vmatprep.subr.bf16.mxu0 0
    %1878 = vmatpush1.bf16.xpose.msra.mxu0 0
    %1879 = vmatprep.mubr.bf16.mxu0 0
    %1880 = vmatmul.mubr.bf16.gmra.mrb[0].mxu0 %v1842
    %v1881 = vpop.f32.mrb[0].mxu0
    %v1882 = vadd.f32 0.0, %v1881
    %v1883 = vpop.f32.mrb[0].mxu0
    %v1884 = vpop.f32.mrb[0].mxu0
    %v1885 = vpop.f32.mrb[0].mxu0
    %1886 = vdwg.mxu0
    %1888 = vrot.lane.b32.xlu0 %v1687, 96
    %v1889 = vpop.permute.xlu0 %1888
    %v1891 = vsel %vm296, %v1687, 0
    %v1894 = vsel %vm296, %v1889, 0
    %1896 = vmatprep.subr.bf16.mxu0 0
    %1897 = vmatpush1.bf16.xpose.msra.mxu0 %v1894
    %1898 = vmatprep.subr.bf16.mxu0 0
    %1899 = vmatpush1.bf16.xpose.msra.mxu0 0
    %1900 = vmatprep.subr.bf16.mxu0 0
    %1901 = vmatpush1.bf16.xpose.msra.mxu0 0
    %1902 = vmatprep.subr.bf16.mxu0 0
    %1903 = vmatpush1.bf16.xpose.msra.mxu0 0
    %1904 = vmatprep.subr.bf16.mxu0 0
    %1905 = vmatpush1.bf16.xpose.msra.mxu0 0
    %1906 = vmatprep.subr.bf16.mxu0 0
    %1907 = vmatpush1.bf16.xpose.msra.mxu0 0
    %1908 = vmatprep.subr.bf16.mxu0 0
    %1909 = vmatpush1.bf16.xpose.msra.mxu0 0
    %1910 = vmatprep.subr.bf16.mxu0 0
    %1911 = vmatpush1.bf16.xpose.msra.mxu0 0
    %1912 = vmatprep.subr.bf16.mxu0 0
    %1913 = vmatpush1.bf16.xpose.msra.mxu0 0
    %1914 = vmatprep.subr.bf16.mxu0 0
    %1915 = vmatpush1.bf16.xpose.msra.mxu0 0
    %1916 = vmatprep.subr.bf16.mxu0 0
    %1917 = vmatpush1.bf16.xpose.msra.mxu0 0
    %1918 = vmatprep.subr.bf16.mxu0 0
    %1919 = vmatpush1.bf16.xpose.msra.mxu0 0
    %1920 = vmatprep.subr.bf16.mxu0 0
    %1921 = vmatpush1.bf16.xpose.msra.mxu0 0
    %1922 = vmatprep.subr.bf16.mxu0 0
    %1923 = vmatpush1.bf16.xpose.msra.mxu0 0
    %1924 = vmatprep.subr.bf16.mxu0 0
    %1925 = vmatpush1.bf16.xpose.msra.mxu0 0
    %1926 = vmatprep.subr.bf16.mxu0 0
    %1927 = vmatpush1.bf16.xpose.msra.mxu0 0
    %1928 = vmatprep.mubr.bf16.mxu0 0
    %1929 = vmatmul.mubr.bf16.gmra.mrb[0].mxu0 %v1891
    %v1930 = vpop.f32.mrb[0].mxu0
    %v1931 = vadd.f32 0.0, %v1930
    %v1932 = vpop.f32.mrb[0].mxu0
    %v1933 = vpop.f32.mrb[0].mxu0
    %v1934 = vpop.f32.mrb[0].mxu0
    %1935 = vdwg.mxu0
    %1937 = vrot.lane.b32.xlu0 %v1688, 96
    %v1938 = vpop.permute.xlu0 %1937
    %v1940 = vsel %vm296, %v1688, 0
    %v1943 = vsel %vm296, %v1938, 0
    %1945 = vmatprep.subr.bf16.mxu0 0
    %1946 = vmatpush1.bf16.xpose.msra.mxu0 %v1943
    %1947 = vmatprep.subr.bf16.mxu0 0
    %1948 = vmatpush1.bf16.xpose.msra.mxu0 0
    %1949 = vmatprep.subr.bf16.mxu0 0
    %1950 = vmatpush1.bf16.xpose.msra.mxu0 0
    %1951 = vmatprep.subr.bf16.mxu0 0
    %1952 = vmatpush1.bf16.xpose.msra.mxu0 0
    %1953 = vmatprep.subr.bf16.mxu0 0
    %1954 = vmatpush1.bf16.xpose.msra.mxu0 0
    %1955 = vmatprep.subr.bf16.mxu0 0
    %1956 = vmatpush1.bf16.xpose.msra.mxu0 0
    %1957 = vmatprep.subr.bf16.mxu0 0
    %1958 = vmatpush1.bf16.xpose.msra.mxu0 0
    %1959 = vmatprep.subr.bf16.mxu0 0
    %1960 = vmatpush1.bf16.xpose.msra.mxu0 0
    %1961 = vmatprep.subr.bf16.mxu0 0
    %1962 = vmatpush1.bf16.xpose.msra.mxu0 0
    %1963 = vmatprep.subr.bf16.mxu0 0
    %1964 = vmatpush1.bf16.xpose.msra.mxu0 0
    %1965 = vmatprep.subr.bf16.mxu0 0
    %1966 = vmatpush1.bf16.xpose.msra.mxu0 0
    %1967 = vmatprep.subr.bf16.mxu0 0
    %1968 = vmatpush1.bf16.xpose.msra.mxu0 0
    %1969 = vmatprep.subr.bf16.mxu0 0
    %1970 = vmatpush1.bf16.xpose.msra.mxu0 0
    %1971 = vmatprep.subr.bf16.mxu0 0
    %1972 = vmatpush1.bf16.xpose.msra.mxu0 0
    %1973 = vmatprep.subr.bf16.mxu0 0
    %1974 = vmatpush1.bf16.xpose.msra.mxu0 0
    %1975 = vmatprep.subr.bf16.mxu0 0
    %1976 = vmatpush1.bf16.xpose.msra.mxu0 0
    %1977 = vmatprep.mubr.bf16.mxu0 0
    %1978 = vmatmul.mubr.bf16.gmra.mrb[0].mxu0 %v1940
    %v1979 = vpop.f32.mrb[0].mxu0
    %v1980 = vadd.f32 0.0, %v1979
    %v1981 = vpop.f32.mrb[0].mxu0
    %v1982 = vpop.f32.mrb[0].mxu0
    %v1983 = vpop.f32.mrb[0].mxu0
    %1984 = vdwg.mxu0
    %1986 = vrot.lane.b32.xlu0 %v1689, 96
    %v1987 = vpop.permute.xlu0 %1986
    %v1989 = vsel %vm296, %v1689, 0
    %v1992 = vsel %vm296, %v1987, 0
    %1994 = vmatprep.subr.bf16.mxu0 0
    %1995 = vmatpush1.bf16.xpose.msra.mxu0 %v1992
    %1996 = vmatprep.subr.bf16.mxu0 0
    %1997 = vmatpush1.bf16.xpose.msra.mxu0 0
    %1998 = vmatprep.subr.bf16.mxu0 0
    %1999 = vmatpush1.bf16.xpose.msra.mxu0 0
    %2000 = vmatprep.subr.bf16.mxu0 0
    %2001 = vmatpush1.bf16.xpose.msra.mxu0 0
    %2002 = vmatprep.subr.bf16.mxu0 0
    %2003 = vmatpush1.bf16.xpose.msra.mxu0 0
    %2004 = vmatprep.subr.bf16.mxu0 0
    %2005 = vmatpush1.bf16.xpose.msra.mxu0 0
    %2006 = vmatprep.subr.bf16.mxu0 0
    %2007 = vmatpush1.bf16.xpose.msra.mxu0 0
    %2008 = vmatprep.subr.bf16.mxu0 0
    %2009 = vmatpush1.bf16.xpose.msra.mxu0 0
    %2010 = vmatprep.subr.bf16.mxu0 0
    %2011 = vmatpush1.bf16.xpose.msra.mxu0 0
    %2012 = vmatprep.subr.bf16.mxu0 0
    %2013 = vmatpush1.bf16.xpose.msra.mxu0 0
    %2014 = vmatprep.subr.bf16.mxu0 0
    %2015 = vmatpush1.bf16.xpose.msra.mxu0 0
    %2016 = vmatprep.subr.bf16.mxu0 0
    %2017 = vmatpush1.bf16.xpose.msra.mxu0 0
    %2018 = vmatprep.subr.bf16.mxu0 0
    %2019 = vmatpush1.bf16.xpose.msra.mxu0 0
    %2020 = vmatprep.subr.bf16.mxu0 0
    %2021 = vmatpush1.bf16.xpose.msra.mxu0 0
    %2022 = vmatprep.subr.bf16.mxu0 0
    %2023 = vmatpush1.bf16.xpose.msra.mxu0 0
    %2024 = vmatprep.subr.bf16.mxu0 0
    %2025 = vmatpush1.bf16.xpose.msra.mxu0 0
    %2026 = vmatprep.mubr.bf16.mxu0 0
    %2027 = vmatmul.mubr.bf16.gmra.mrb[0].mxu0 %v1989
    %v2028 = vpop.f32.mrb[0].mxu0
    %v2029 = vadd.f32 0.0, %v2028
    %v2030 = vpop.f32.mrb[0].mxu0
    %v2031 = vpop.f32.mrb[0].mxu0
    %v2032 = vpop.f32.mrb[0].mxu0
    %2033 = vdwg.mxu0
    %2035 = vrot.lane.b32.xlu0 %v1690, 96
    %v2036 = vpop.permute.xlu0 %2035
    %v2038 = vsel %vm296, %v1690, 0
    %v2041 = vsel %vm296, %v2036, 0
    %2043 = vmatprep.subr.bf16.mxu0 0
    %2044 = vmatpush1.bf16.xpose.msra.mxu0 %v2041
    %2045 = vmatprep.subr.bf16.mxu0 0
    %2046 = vmatpush1.bf16.xpose.msra.mxu0 0
    %2047 = vmatprep.subr.bf16.mxu0 0
    %2048 = vmatpush1.bf16.xpose.msra.mxu0 0
    %2049 = vmatprep.subr.bf16.mxu0 0
    %2050 = vmatpush1.bf16.xpose.msra.mxu0 0
    %2051 = vmatprep.subr.bf16.mxu0 0
    %2052 = vmatpush1.bf16.xpose.msra.mxu0 0
    %2053 = vmatprep.subr.bf16.mxu0 0
    %2054 = vmatpush1.bf16.xpose.msra.mxu0 0
    %2055 = vmatprep.subr.bf16.mxu0 0
    %2056 = vmatpush1.bf16.xpose.msra.mxu0 0
    %2057 = vmatprep.subr.bf16.mxu0 0
    %2058 = vmatpush1.bf16.xpose.msra.mxu0 0
    %2059 = vmatprep.subr.bf16.mxu0 0
    %2060 = vmatpush1.bf16.xpose.msra.mxu0 0
    %2061 = vmatprep.subr.bf16.mxu0 0
    %2062 = vmatpush1.bf16.xpose.msra.mxu0 0
    %2063 = vmatprep.subr.bf16.mxu0 0
    %2064 = vmatpush1.bf16.xpose.msra.mxu0 0
    %2065 = vmatprep.subr.bf16.mxu0 0
    %2066 = vmatpush1.bf16.xpose.msra.mxu0 0
    %2067 = vmatprep.subr.bf16.mxu0 0
    %2068 = vmatpush1.bf16.xpose.msra.mxu0 0
    %2069 = vmatprep.subr.bf16.mxu0 0
    %2070 = vmatpush1.bf16.xpose.msra.mxu0 0
    %2071 = vmatprep.subr.bf16.mxu0 0
    %2072 = vmatpush1.bf16.xpose.msra.mxu0 0
    %2073 = vmatprep.subr.bf16.mxu0 0
    %2074 = vmatpush1.bf16.xpose.msra.mxu0 0
    %2075 = vmatprep.mubr.bf16.mxu0 0
    %2076 = vmatmul.mubr.bf16.gmra.mrb[0].mxu0 %v2038
    %v2077 = vpop.f32.mrb[0].mxu0
    %v2078 = vadd.f32 0.0, %v2077
    %v2079 = vpop.f32.mrb[0].mxu0
    %v2080 = vpop.f32.mrb[0].mxu0
    %v2081 = vpop.f32.mrb[0].mxu0
    %2082 = vdwg.mxu0
    %v2083 = vmul.f32 %v1735, 0.35355338
    %v2084 = vmul.f32 %v1784, 0.35355338
    %v2085 = vmul.f32 %v1833, 0.35355338
    %v2086 = vmul.f32 %v1882, 0.35355338
    %v2087 = vmul.f32 %v1931, 0.35355338
    %v2088 = vmul.f32 %v1980, 0.35355338
    %v2089 = vmul.f32 %v2029, 0.35355338
    %v2090 = vmul.f32 %v2078, 0.35355338
    %v2091 = vadd.f32 %v2083, %v1651
    %v2092 = vadd.f32 %v2084, %v1661
    %v2093 = vadd.f32 %v2085, %v1671
    %v2094 = vadd.f32 %v2086, %v1681
    %v2095 = vadd.f32 %v2087, %v1652
    %v2096 = vadd.f32 %v2088, %v1662
    %v2097 = vadd.f32 %v2089, %v1672
    %v2098 = vadd.f32 %v2090, %v1682
    %v2099 = vsel %vm296, %v2091, -inf
    %2100 = vmax.xlane.f32.xlu0 %v2099
    %v2101 = vpop.xlane.xlu0 %2100
    %v2102 = vsel %vm296, %v2092, -inf
    %2103 = vmax.xlane.f32.xlu0 %v2102
    %v2104 = vpop.xlane.xlu0 %2103
    %v2105 = vsel %vm296, %v2093, -inf
    %2106 = vmax.xlane.f32.xlu0 %v2105
    %v2107 = vpop.xlane.xlu0 %2106
    %v2108 = vsel %vm296, %v2094, -inf
    %2109 = vmax.xlane.f32.xlu0 %v2108
    %v2110 = vpop.xlane.xlu0 %2109
    %v2111 = vsel %vm296, %v2095, -inf
    %2112 = vmax.xlane.f32.xlu0 %v2111
    %v2113 = vpop.xlane.xlu0 %2112
    %v2114 = vsel %vm296, %v2096, -inf
    %2115 = vmax.xlane.f32.xlu0 %v2114
    %v2116 = vpop.xlane.xlu0 %2115
    %v2117 = vsel %vm296, %v2097, -inf
    %2118 = vmax.xlane.f32.xlu0 %v2117
    %v2119 = vpop.xlane.xlu0 %2118
    %v2120 = vsel %vm296, %v2098, -inf
    %2121 = vmax.xlane.f32.xlu0 %v2120
    %v2122 = vpop.xlane.xlu0 %2121
    %v2123 = vsub.f32 %v2091, %v2101
    %v2124 = vsub.f32 %v2092, %v2104
    %v2125 = vsub.f32 %v2093, %v2107
    %v2126 = vsub.f32 %v2094, %v2110
    %v2127 = vsub.f32 %v2095, %v2113
    %v2128 = vsub.f32 %v2096, %v2116
    %v2129 = vsub.f32 %v2097, %v2119
    %v2130 = vsub.f32 %v2098, %v2122
    %v2131 = vmul.f32 %v2123, 1.442695
    %v2132 = vpow.pop %v2131
    %v2133 = vmul.f32 %v2124, 1.442695
    %v2134 = vpow.pop %v2133
    %v2135 = vmul.f32 %v2125, 1.442695
    %v2136 = vpow.pop %v2135
    %v2137 = vmul.f32 %v2126, 1.442695
    %v2138 = vpow.pop %v2137
    %v2139 = vmul.f32 %v2127, 1.442695
    %v2140 = vpow.pop %v2139
    %v2141 = vmul.f32 %v2128, 1.442695
    %v2142 = vpow.pop %v2141
    %v2143 = vmul.f32 %v2129, 1.442695
    %v2144 = vpow.pop %v2143
    %v2145 = vmul.f32 %v2130, 1.442695
    %v2146 = vpow.pop %v2145
    %v2147 = vsel %vm296, %v2132, 0.0
    %2148 = vadd.xlane.f32.xlu0 %v2147
    %v2149 = vpop.xlane.xlu0 %2148
    %v2150 = vsel %vm296, %v2134, 0.0
    %2151 = vadd.xlane.f32.xlu0 %v2150
    %v2152 = vpop.xlane.xlu0 %2151
    %v2153 = vsel %vm296, %v2136, 0.0
    %2154 = vadd.xlane.f32.xlu0 %v2153
    %v2155 = vpop.xlane.xlu0 %2154
    %v2156 = vsel %vm296, %v2138, 0.0
    %2157 = vadd.xlane.f32.xlu0 %v2156
    %v2158 = vpop.xlane.xlu0 %2157
    %v2159 = vsel %vm296, %v2140, 0.0
    %2160 = vadd.xlane.f32.xlu0 %v2159
    %v2161 = vpop.xlane.xlu0 %2160
    %v2162 = vsel %vm296, %v2142, 0.0
    %2163 = vadd.xlane.f32.xlu0 %v2162
    %v2164 = vpop.xlane.xlu0 %2163
    %v2165 = vsel %vm296, %v2144, 0.0
    %2166 = vadd.xlane.f32.xlu0 %v2165
    %v2167 = vpop.xlane.xlu0 %2166
    %v2168 = vsel %vm296, %v2146, 0.0
    %2169 = vadd.xlane.f32.xlu0 %v2168
    %v2170 = vpop.xlane.xlu0 %2169
    %v2171 = vrcp.pop %v2149
    %v2172 = vmul.f32 %v2132, %v2171
    %v2173 = vrcp.pop %v2152
    %v2174 = vmul.f32 %v2134, %v2173
    %v2175 = vrcp.pop %v2155
    %v2176 = vmul.f32 %v2136, %v2175
    %v2177 = vrcp.pop %v2158
    %v2178 = vmul.f32 %v2138, %v2177
    %v2179 = vrcp.pop %v2161
    %v2180 = vmul.f32 %v2140, %v2179
    %v2181 = vrcp.pop %v2164
    %v2182 = vmul.f32 %v2142, %v2181
    %v2183 = vrcp.pop %v2167
    %v2184 = vmul.f32 %v2144, %v2183
    %v2185 = vrcp.pop %v2170
    %v2186 = vmul.f32 %v2146, %v2185
    %v2187 = vpack.c.bf16 %v2172, %v2172
    %v2188 = vpack.c.bf16 %v2174, %v2174
    %v2189 = vpack.c.bf16 %v2176, %v2176
    %v2190 = vpack.c.bf16 %v2178, %v2178
    %v2191 = vpack.c.bf16 %v2180, %v2180
    %v2192 = vpack.c.bf16 %v2182, %v2182
    %v2193 = vpack.c.bf16 %v2184, %v2184
    %v2194 = vpack.c.bf16 %v2186, %v2186
    %2195 = vrot.lane.b32.xlu0 %v1683, 64
    %v2196 = vpop.permute.xlu0 %2195
    %v2198 = vsel %vm296, %v2187, 0
    %v2201 = vsel %vm803, %v2196, 0
    %2203 = vmatprep.subr.bf16.mxu0 0
    %2204 = vmatpush1.bf16.msra.mxu0 %v2201
    %2205 = vmatprep.subr.bf16.mxu0 0
    %2206 = vmatpush1.bf16.msra.mxu0 0
    %2207 = vmatprep.subr.bf16.mxu0 0
    %2208 = vmatpush1.bf16.msra.mxu0 0
    %2209 = vmatprep.subr.bf16.mxu0 0
    %2210 = vmatpush1.bf16.msra.mxu0 0
    %2211 = vmatprep.subr.bf16.mxu0 0
    %2212 = vmatpush1.bf16.msra.mxu0 0
    %2213 = vmatprep.subr.bf16.mxu0 0
    %2214 = vmatpush1.bf16.msra.mxu0 0
    %2215 = vmatprep.subr.bf16.mxu0 0
    %2216 = vmatpush1.bf16.msra.mxu0 0
    %2217 = vmatprep.subr.bf16.mxu0 0
    %2218 = vmatpush1.bf16.msra.mxu0 0
    %2219 = vmatprep.subr.bf16.mxu0 0
    %2220 = vmatpush1.bf16.msra.mxu0 0
    %2221 = vmatprep.subr.bf16.mxu0 0
    %2222 = vmatpush1.bf16.msra.mxu0 0
    %2223 = vmatprep.subr.bf16.mxu0 0
    %2224 = vmatpush1.bf16.msra.mxu0 0
    %2225 = vmatprep.subr.bf16.mxu0 0
    %2226 = vmatpush1.bf16.msra.mxu0 0
    %2227 = vmatprep.subr.bf16.mxu0 0
    %2228 = vmatpush1.bf16.msra.mxu0 0
    %2229 = vmatprep.subr.bf16.mxu0 0
    %2230 = vmatpush1.bf16.msra.mxu0 0
    %2231 = vmatprep.subr.bf16.mxu0 0
    %2232 = vmatpush1.bf16.msra.mxu0 0
    %2233 = vmatprep.subr.bf16.mxu0 0
    %2234 = vmatpush1.bf16.msra.mxu0 0
    %2235 = vmatprep.mubr.bf16.mxu0 0
    %2236 = vmatmul.mubr.bf16.gmra.mrb[0].mxu0 %v2198
    %v2237 = vpop.f32.mrb[0].mxu0
    %v2238 = vadd.f32 0.0, %v2237
    %v2239 = vpop.f32.mrb[0].mxu0
    %v2240 = vpop.f32.mrb[0].mxu0
    %v2241 = vpop.f32.mrb[0].mxu0
    %2242 = vdwg.mxu0
    %2243 = vrot.lane.b32.xlu0 %v1684, 64
    %v2244 = vpop.permute.xlu0 %2243
    %v2246 = vsel %vm296, %v2188, 0
    %v2249 = vsel %vm803, %v2244, 0
    %2251 = vmatprep.subr.bf16.mxu0 0
    %2252 = vmatpush1.bf16.msra.mxu0 %v2249
    %2253 = vmatprep.subr.bf16.mxu0 0
    %2254 = vmatpush1.bf16.msra.mxu0 0
    %2255 = vmatprep.subr.bf16.mxu0 0
    %2256 = vmatpush1.bf16.msra.mxu0 0
    %2257 = vmatprep.subr.bf16.mxu0 0
    %2258 = vmatpush1.bf16.msra.mxu0 0
    %2259 = vmatprep.subr.bf16.mxu0 0
    %2260 = vmatpush1.bf16.msra.mxu0 0
    %2261 = vmatprep.subr.bf16.mxu0 0
    %2262 = vmatpush1.bf16.msra.mxu0 0
    %2263 = vmatprep.subr.bf16.mxu0 0
    %2264 = vmatpush1.bf16.msra.mxu0 0
    %2265 = vmatprep.subr.bf16.mxu0 0
    %2266 = vmatpush1.bf16.msra.mxu0 0
    %2267 = vmatprep.subr.bf16.mxu0 0
    %2268 = vmatpush1.bf16.msra.mxu0 0
    %2269 = vmatprep.subr.bf16.mxu0 0
    %2270 = vmatpush1.bf16.msra.mxu0 0
    %2271 = vmatprep.subr.bf16.mxu0 0
    %2272 = vmatpush1.bf16.msra.mxu0 0
    %2273 = vmatprep.subr.bf16.mxu0 0
    %2274 = vmatpush1.bf16.msra.mxu0 0
    %2275 = vmatprep.subr.bf16.mxu0 0
    %2276 = vmatpush1.bf16.msra.mxu0 0
    %2277 = vmatprep.subr.bf16.mxu0 0
    %2278 = vmatpush1.bf16.msra.mxu0 0
    %2279 = vmatprep.subr.bf16.mxu0 0
    %2280 = vmatpush1.bf16.msra.mxu0 0
    %2281 = vmatprep.subr.bf16.mxu0 0
    %2282 = vmatpush1.bf16.msra.mxu0 0
    %2283 = vmatprep.mubr.bf16.mxu0 0
    %2284 = vmatmul.mubr.bf16.gmra.mrb[0].mxu0 %v2246
    %v2285 = vpop.f32.mrb[0].mxu0
    %v2286 = vadd.f32 0.0, %v2285
    %v2287 = vpop.f32.mrb[0].mxu0
    %v2288 = vpop.f32.mrb[0].mxu0
    %v2289 = vpop.f32.mrb[0].mxu0
    %2290 = vdwg.mxu0
    %2291 = vrot.lane.b32.xlu0 %v1685, 64
    %v2292 = vpop.permute.xlu0 %2291
    %v2294 = vsel %vm296, %v2189, 0
    %v2297 = vsel %vm803, %v2292, 0
    %2299 = vmatprep.subr.bf16.mxu0 0
    %2300 = vmatpush1.bf16.msra.mxu0 %v2297
    %2301 = vmatprep.subr.bf16.mxu0 0
    %2302 = vmatpush1.bf16.msra.mxu0 0
    %2303 = vmatprep.subr.bf16.mxu0 0
    %2304 = vmatpush1.bf16.msra.mxu0 0
    %2305 = vmatprep.subr.bf16.mxu0 0
    %2306 = vmatpush1.bf16.msra.mxu0 0
    %2307 = vmatprep.subr.bf16.mxu0 0
    %2308 = vmatpush1.bf16.msra.mxu0 0
    %2309 = vmatprep.subr.bf16.mxu0 0
    %2310 = vmatpush1.bf16.msra.mxu0 0
    %2311 = vmatprep.subr.bf16.mxu0 0
    %2312 = vmatpush1.bf16.msra.mxu0 0
    %2313 = vmatprep.subr.bf16.mxu0 0
    %2314 = vmatpush1.bf16.msra.mxu0 0
    %2315 = vmatprep.subr.bf16.mxu0 0
    %2316 = vmatpush1.bf16.msra.mxu0 0
    %2317 = vmatprep.subr.bf16.mxu0 0
    %2318 = vmatpush1.bf16.msra.mxu0 0
    %2319 = vmatprep.subr.bf16.mxu0 0
    %2320 = vmatpush1.bf16.msra.mxu0 0
    %2321 = vmatprep.subr.bf16.mxu0 0
    %2322 = vmatpush1.bf16.msra.mxu0 0
    %2323 = vmatprep.subr.bf16.mxu0 0
    %2324 = vmatpush1.bf16.msra.mxu0 0
    %2325 = vmatprep.subr.bf16.mxu0 0
    %2326 = vmatpush1.bf16.msra.mxu0 0
    %2327 = vmatprep.subr.bf16.mxu0 0
    %2328 = vmatpush1.bf16.msra.mxu0 0
    %2329 = vmatprep.subr.bf16.mxu0 0
    %2330 = vmatpush1.bf16.msra.mxu0 0
    %2331 = vmatprep.mubr.bf16.mxu0 0
    %2332 = vmatmul.mubr.bf16.gmra.mrb[0].mxu0 %v2294
    %v2333 = vpop.f32.mrb[0].mxu0
    %v2334 = vadd.f32 0.0, %v2333
    %v2335 = vpop.f32.mrb[0].mxu0
    %v2336 = vpop.f32.mrb[0].mxu0
    %v2337 = vpop.f32.mrb[0].mxu0
    %2338 = vdwg.mxu0
    %2339 = vrot.lane.b32.xlu0 %v1686, 64
    %v2340 = vpop.permute.xlu0 %2339
    %v2342 = vsel %vm296, %v2190, 0
    %v2345 = vsel %vm803, %v2340, 0
    %2347 = vmatprep.subr.bf16.mxu0 0
    %2348 = vmatpush1.bf16.msra.mxu0 %v2345
    %2349 = vmatprep.subr.bf16.mxu0 0
    %2350 = vmatpush1.bf16.msra.mxu0 0
    %2351 = vmatprep.subr.bf16.mxu0 0
    %2352 = vmatpush1.bf16.msra.mxu0 0
    %2353 = vmatprep.subr.bf16.mxu0 0
    %2354 = vmatpush1.bf16.msra.mxu0 0
    %2355 = vmatprep.subr.bf16.mxu0 0
    %2356 = vmatpush1.bf16.msra.mxu0 0
    %2357 = vmatprep.subr.bf16.mxu0 0
    %2358 = vmatpush1.bf16.msra.mxu0 0
    %2359 = vmatprep.subr.bf16.mxu0 0
    %2360 = vmatpush1.bf16.msra.mxu0 0
    %2361 = vmatprep.subr.bf16.mxu0 0
    %2362 = vmatpush1.bf16.msra.mxu0 0
    %2363 = vmatprep.subr.bf16.mxu0 0
    %2364 = vmatpush1.bf16.msra.mxu0 0
    %2365 = vmatprep.subr.bf16.mxu0 0
    %2366 = vmatpush1.bf16.msra.mxu0 0
    %2367 = vmatprep.subr.bf16.mxu0 0
    %2368 = vmatpush1.bf16.msra.mxu0 0
    %2369 = vmatprep.subr.bf16.mxu0 0
    %2370 = vmatpush1.bf16.msra.mxu0 0
    %2371 = vmatprep.subr.bf16.mxu0 0
    %2372 = vmatpush1.bf16.msra.mxu0 0
    %2373 = vmatprep.subr.bf16.mxu0 0
    %2374 = vmatpush1.bf16.msra.mxu0 0
    %2375 = vmatprep.subr.bf16.mxu0 0
    %2376 = vmatpush1.bf16.msra.mxu0 0
    %2377 = vmatprep.subr.bf16.mxu0 0
    %2378 = vmatpush1.bf16.msra.mxu0 0
    %2379 = vmatprep.mubr.bf16.mxu0 0
    %2380 = vmatmul.mubr.bf16.gmra.mrb[0].mxu0 %v2342
    %v2381 = vpop.f32.mrb[0].mxu0
    %v2382 = vadd.f32 0.0, %v2381
    %v2383 = vpop.f32.mrb[0].mxu0
    %v2384 = vpop.f32.mrb[0].mxu0
    %v2385 = vpop.f32.mrb[0].mxu0
    %2386 = vdwg.mxu0
    %2387 = vrot.lane.b32.xlu0 %v1687, 64
    %v2388 = vpop.permute.xlu0 %2387
    %v2390 = vsel %vm296, %v2191, 0
    %v2393 = vsel %vm803, %v2388, 0
    %2395 = vmatprep.subr.bf16.mxu0 0
    %2396 = vmatpush1.bf16.msra.mxu0 %v2393
    %2397 = vmatprep.subr.bf16.mxu0 0
    %2398 = vmatpush1.bf16.msra.mxu0 0
    %2399 = vmatprep.subr.bf16.mxu0 0
    %2400 = vmatpush1.bf16.msra.mxu0 0
    %2401 = vmatprep.subr.bf16.mxu0 0
    %2402 = vmatpush1.bf16.msra.mxu0 0
    %2403 = vmatprep.subr.bf16.mxu0 0
    %2404 = vmatpush1.bf16.msra.mxu0 0
    %2405 = vmatprep.subr.bf16.mxu0 0
    %2406 = vmatpush1.bf16.msra.mxu0 0
    %2407 = vmatprep.subr.bf16.mxu0 0
    %2408 = vmatpush1.bf16.msra.mxu0 0
    %2409 = vmatprep.subr.bf16.mxu0 0
    %2410 = vmatpush1.bf16.msra.mxu0 0
    %2411 = vmatprep.subr.bf16.mxu0 0
    %2412 = vmatpush1.bf16.msra.mxu0 0
    %2413 = vmatprep.subr.bf16.mxu0 0
    %2414 = vmatpush1.bf16.msra.mxu0 0
    %2415 = vmatprep.subr.bf16.mxu0 0
    %2416 = vmatpush1.bf16.msra.mxu0 0
    %2417 = vmatprep.subr.bf16.mxu0 0
    %2418 = vmatpush1.bf16.msra.mxu0 0
    %2419 = vmatprep.subr.bf16.mxu0 0
    %2420 = vmatpush1.bf16.msra.mxu0 0
    %2421 = vmatprep.subr.bf16.mxu0 0
    %2422 = vmatpush1.bf16.msra.mxu0 0
    %2423 = vmatprep.subr.bf16.mxu0 0
    %2424 = vmatpush1.bf16.msra.mxu0 0
    %2425 = vmatprep.subr.bf16.mxu0 0
    %2426 = vmatpush1.bf16.msra.mxu0 0
    %2427 = vmatprep.mubr.bf16.mxu0 0
    %2428 = vmatmul.mubr.bf16.gmra.mrb[0].mxu0 %v2390
    %v2429 = vpop.f32.mrb[0].mxu0
    %v2430 = vadd.f32 0.0, %v2429
    %v2431 = vpop.f32.mrb[0].mxu0
    %v2432 = vpop.f32.mrb[0].mxu0
    %v2433 = vpop.f32.mrb[0].mxu0
    %2434 = vdwg.mxu0
    %2435 = vrot.lane.b32.xlu0 %v1688, 64
    %v2436 = vpop.permute.xlu0 %2435
    %v2438 = vsel %vm296, %v2192, 0
    %v2441 = vsel %vm803, %v2436, 0
    %2443 = vmatprep.subr.bf16.mxu0 0
    %2444 = vmatpush1.bf16.msra.mxu0 %v2441
    %2445 = vmatprep.subr.bf16.mxu0 0
    %2446 = vmatpush1.bf16.msra.mxu0 0
    %2447 = vmatprep.subr.bf16.mxu0 0
    %2448 = vmatpush1.bf16.msra.mxu0 0
    %2449 = vmatprep.subr.bf16.mxu0 0
    %2450 = vmatpush1.bf16.msra.mxu0 0
    %2451 = vmatprep.subr.bf16.mxu0 0
    %2452 = vmatpush1.bf16.msra.mxu0 0
    %2453 = vmatprep.subr.bf16.mxu0 0
    %2454 = vmatpush1.bf16.msra.mxu0 0
    %2455 = vmatprep.subr.bf16.mxu0 0
    %2456 = vmatpush1.bf16.msra.mxu0 0
    %2457 = vmatprep.subr.bf16.mxu0 0
    %2458 = vmatpush1.bf16.msra.mxu0 0
    %2459 = vmatprep.subr.bf16.mxu0 0
    %2460 = vmatpush1.bf16.msra.mxu0 0
    %2461 = vmatprep.subr.bf16.mxu0 0
    %2462 = vmatpush1.bf16.msra.mxu0 0
    %2463 = vmatprep.subr.bf16.mxu0 0
    %2464 = vmatpush1.bf16.msra.mxu0 0
    %2465 = vmatprep.subr.bf16.mxu0 0
    %2466 = vmatpush1.bf16.msra.mxu0 0
    %2467 = vmatprep.subr.bf16.mxu0 0
    %2468 = vmatpush1.bf16.msra.mxu0 0
    %2469 = vmatprep.subr.bf16.mxu0 0
    %2470 = vmatpush1.bf16.msra.mxu0 0
    %2471 = vmatprep.subr.bf16.mxu0 0
    %2472 = vmatpush1.bf16.msra.mxu0 0
    %2473 = vmatprep.subr.bf16.mxu0 0
    %2474 = vmatpush1.bf16.msra.mxu0 0
    %2475 = vmatprep.mubr.bf16.mxu0 0
    %2476 = vmatmul.mubr.bf16.gmra.mrb[0].mxu0 %v2438
    %v2477 = vpop.f32.mrb[0].mxu0
    %v2478 = vadd.f32 0.0, %v2477
    %v2479 = vpop.f32.mrb[0].mxu0
    %v2480 = vpop.f32.mrb[0].mxu0
    %v2481 = vpop.f32.mrb[0].mxu0
    %2482 = vdwg.mxu0
    %2483 = vrot.lane.b32.xlu0 %v1689, 64
    %v2484 = vpop.permute.xlu0 %2483
    %v2486 = vsel %vm296, %v2193, 0
    %v2489 = vsel %vm803, %v2484, 0
    %2491 = vmatprep.subr.bf16.mxu0 0
    %2492 = vmatpush1.bf16.msra.mxu0 %v2489
    %2493 = vmatprep.subr.bf16.mxu0 0
    %2494 = vmatpush1.bf16.msra.mxu0 0
    %2495 = vmatprep.subr.bf16.mxu0 0
    %2496 = vmatpush1.bf16.msra.mxu0 0
    %2497 = vmatprep.subr.bf16.mxu0 0
    %2498 = vmatpush1.bf16.msra.mxu0 0
    %2499 = vmatprep.subr.bf16.mxu0 0
    %2500 = vmatpush1.bf16.msra.mxu0 0
    %2501 = vmatprep.subr.bf16.mxu0 0
    %2502 = vmatpush1.bf16.msra.mxu0 0
    %2503 = vmatprep.subr.bf16.mxu0 0
    %2504 = vmatpush1.bf16.msra.mxu0 0
    %2505 = vmatprep.subr.bf16.mxu0 0
    %2506 = vmatpush1.bf16.msra.mxu0 0
    %2507 = vmatprep.subr.bf16.mxu0 0
    %2508 = vmatpush1.bf16.msra.mxu0 0
    %2509 = vmatprep.subr.bf16.mxu0 0
    %2510 = vmatpush1.bf16.msra.mxu0 0
    %2511 = vmatprep.subr.bf16.mxu0 0
    %2512 = vmatpush1.bf16.msra.mxu0 0
    %2513 = vmatprep.subr.bf16.mxu0 0
    %2514 = vmatpush1.bf16.msra.mxu0 0
    %2515 = vmatprep.subr.bf16.mxu0 0
    %2516 = vmatpush1.bf16.msra.mxu0 0
    %2517 = vmatprep.subr.bf16.mxu0 0
    %2518 = vmatpush1.bf16.msra.mxu0 0
    %2519 = vmatprep.subr.bf16.mxu0 0
    %2520 = vmatpush1.bf16.msra.mxu0 0
    %2521 = vmatprep.subr.bf16.mxu0 0
    %2522 = vmatpush1.bf16.msra.mxu0 0
    %2523 = vmatprep.mubr.bf16.mxu0 0
    %2524 = vmatmul.mubr.bf16.gmra.mrb[0].mxu0 %v2486
    %v2525 = vpop.f32.mrb[0].mxu0
    %v2526 = vadd.f32 0.0, %v2525
    %v2527 = vpop.f32.mrb[0].mxu0
    %v2528 = vpop.f32.mrb[0].mxu0
    %v2529 = vpop.f32.mrb[0].mxu0
    %2530 = vdwg.mxu0
    %2531 = vrot.lane.b32.xlu0 %v1690, 64
    %v2532 = vpop.permute.xlu0 %2531
    %v2534 = vsel %vm296, %v2194, 0
    %v2537 = vsel %vm803, %v2532, 0
    %2539 = vmatprep.subr.bf16.mxu0 0
    %2540 = vmatpush1.bf16.msra.mxu0 %v2537
    %2541 = vmatprep.subr.bf16.mxu0 0
    %2542 = vmatpush1.bf16.msra.mxu0 0
    %2543 = vmatprep.subr.bf16.mxu0 0
    %2544 = vmatpush1.bf16.msra.mxu0 0
    %2545 = vmatprep.subr.bf16.mxu0 0
    %2546 = vmatpush1.bf16.msra.mxu0 0
    %2547 = vmatprep.subr.bf16.mxu0 0
    %2548 = vmatpush1.bf16.msra.mxu0 0
    %2549 = vmatprep.subr.bf16.mxu0 0
    %2550 = vmatpush1.bf16.msra.mxu0 0
    %2551 = vmatprep.subr.bf16.mxu0 0
    %2552 = vmatpush1.bf16.msra.mxu0 0
    %2553 = vmatprep.subr.bf16.mxu0 0
    %2554 = vmatpush1.bf16.msra.mxu0 0
    %2555 = vmatprep.subr.bf16.mxu0 0
    %2556 = vmatpush1.bf16.msra.mxu0 0
    %2557 = vmatprep.subr.bf16.mxu0 0
    %2558 = vmatpush1.bf16.msra.mxu0 0
    %2559 = vmatprep.subr.bf16.mxu0 0
    %2560 = vmatpush1.bf16.msra.mxu0 0
    %2561 = vmatprep.subr.bf16.mxu0 0
    %2562 = vmatpush1.bf16.msra.mxu0 0
    %2563 = vmatprep.subr.bf16.mxu0 0
    %2564 = vmatpush1.bf16.msra.mxu0 0
    %2565 = vmatprep.subr.bf16.mxu0 0
    %2566 = vmatpush1.bf16.msra.mxu0 0
    %2567 = vmatprep.subr.bf16.mxu0 0
    %2568 = vmatpush1.bf16.msra.mxu0 0
    %2569 = vmatprep.subr.bf16.mxu0 0
    %2570 = vmatpush1.bf16.msra.mxu0 0
    %2571 = vmatprep.mubr.bf16.mxu0 0
    %2572 = vmatmul.mubr.bf16.gmra.mrb[0].mxu0 %v2534
    %v2573 = vpop.f32.mrb[0].mxu0
    %v2574 = vadd.f32 0.0, %v2573
    %v2575 = vpop.f32.mrb[0].mxu0
    %v2576 = vpop.f32.mrb[0].mxu0
    %v2577 = vpop.f32.mrb[0].mxu0
    %2578 = vdwg.mxu0
    %2581 = vrot.lane.b32.xlu0 %v2286, 8
    %v2582 = vpop.permute.xlu0 %2581
    %2583 = vrot.lane.b32.xlu0 %v2478, 8
    %v2584 = vpop.permute.xlu0 %2583
    %2589 = vrot.lane.b32.xlu0 %v2334, 16
    %v2590 = vpop.permute.xlu0 %2589
    %2591 = vrot.lane.b32.xlu0 %v2526, 16
    %v2592 = vpop.permute.xlu0 %2591
    %2597 = vrot.lane.b32.xlu0 %v2382, 24
    %v2598 = vpop.permute.xlu0 %2597
    %2599 = vrot.lane.b32.xlu0 %v2574, 24
    %v2600 = vpop.permute.xlu0 %2599
    %v2603 = vsel %vm296, %v2238, %v2582
    %v2604 = vsel %vm296, %v2430, %v2584
    %v2605 = vsel %vm1209, %v2603, %v2590
    %v2606 = vsel %vm1209, %v2604, %v2592
    %v2607 = vsel %vm1212, %v2605, %v2598
    %v2608 = vsel %vm1212, %v2606, %v2600
    %v2609 = vpack.c.bf16 %v2608, %v2607
    %s2610 = scalar_lea.vmem %s6, 16
    %v2611 = vld [vmem:[%s2610] sm:$0xf]
    %v2612 = vld [vmem:[%s2610 + $0x4] sm:$0xf]
    %v2613 = vld [vmem:[%s2610 + $0x8] sm:$0xf]
    %v2614 = vld [vmem:[%s2610 + $0xc] sm:$0xf]
    %v2615 = vld [vmem:[%s3 + $0xc] sm:$0x1]
    %v2616 = vlaneseq
    %v2617 = vshrl.u32 %v2616, 7
    %v2618 = vsub.s32 0, %v2617
    %v2619 = vrot.slane %v2615, %v2618
    %v2624 = vunpack.c.l.b16 %v2611
    %v2625 = vunpack.c.l.b16 %v2612
    %v2626 = vunpack.c.l.b16 %v2613
    %v2627 = vunpack.c.l.b16 %v2614
    %v2628 = vpack.c.b16 %v2625, %v2624
    %v2629 = vpack.c.b16 %v2627, %v2626
    %v2633 = vsel %vm119, %v2609, 0
    %2635 = vmatprep.subr.bf16.mxu0 0
    %2636 = vmatpush1.bf16.msra.mxu0 %v2628
    %2637 = vmatprep.subr.bf16.mxu0 0
    %2638 = vmatpush1.bf16.msra.mxu0 %v2629
    %2639 = vmatprep.subr.bf16.mxu0 0
    %2640 = vmatpush1.bf16.msra.mxu0 0
    %2641 = vmatprep.subr.bf16.mxu0 0
    %2642 = vmatpush1.bf16.msra.mxu0 0
    %2643 = vmatprep.subr.bf16.mxu0 0
    %2644 = vmatpush1.bf16.msra.mxu0 0
    %2645 = vmatprep.subr.bf16.mxu0 0
    %2646 = vmatpush1.bf16.msra.mxu0 0
    %2647 = vmatprep.subr.bf16.mxu0 0
    %2648 = vmatpush1.bf16.msra.mxu0 0
    %2649 = vmatprep.subr.bf16.mxu0 0
    %2650 = vmatpush1.bf16.msra.mxu0 0
    %2651 = vmatprep.subr.bf16.mxu0 0
    %2652 = vmatpush1.bf16.msra.mxu0 0
    %2653 = vmatprep.subr.bf16.mxu0 0
    %2654 = vmatpush1.bf16.msra.mxu0 0
    %2655 = vmatprep.subr.bf16.mxu0 0
    %2656 = vmatpush1.bf16.msra.mxu0 0
    %2657 = vmatprep.subr.bf16.mxu0 0
    %2658 = vmatpush1.bf16.msra.mxu0 0
    %2659 = vmatprep.subr.bf16.mxu0 0
    %2660 = vmatpush1.bf16.msra.mxu0 0
    %2661 = vmatprep.subr.bf16.mxu0 0
    %2662 = vmatpush1.bf16.msra.mxu0 0
    %2663 = vmatprep.subr.bf16.mxu0 0
    %2664 = vmatpush1.bf16.msra.mxu0 0
    %2665 = vmatprep.subr.bf16.mxu0 0
    %2666 = vmatpush1.bf16.msra.mxu0 0
    %2667 = vmatprep.mubr.bf16.mxu0 0
    %2668 = vmatmul.mubr.bf16.gmra.mrb[0].mxu0 %v2633
    %v2669 = vpop.f32.mrb[0].mxu0
    %v2670 = vadd.f32 %v2619, %v2669
    %v2671 = vpop.f32.mrb[0].mxu0
    %v2672 = vpop.f32.mrb[0].mxu0
    %v2673 = vadd.f32 %v2619, %v2672
    %v2674 = vpop.f32.mrb[0].mxu0
    %2675 = vdwg.mxu0
    %v2676 = vadd.f32 %v2670, %v1554
    %v2677 = vadd.f32 %v2673, %v1555
    %v2678 = vld [vmem:[%s3 + $0xa] sm:$0x1]
    %v2679 = vld [vmem:[%s3 + $0xb] sm:$0x1]
    %v2680 = vsel %vm119, %v2676, 0.0
    %2681 = vadd.xlane.f32.xlu0 %v2680
    %v2682 = vpop.xlane.xlu0 %2681
    %v2683 = vsel %vm119, %v2677, 0.0
    %2684 = vadd.xlane.f32.xlu0 %v2683
    %v2685 = vpop.xlane.xlu0 %2684
    %v2686 = vmul.f32 %v2682, %v126
    %v2687 = vmul.f32 %v2685, %v126
    %v2688 = vsub.f32 %v2676, %v2686
    %v2689 = vsub.f32 %v2677, %v2687
    %v2690 = vmul.f32 %v2688, %v2688
    %v2691 = vmul.f32 %v2689, %v2689
    %v2692 = vsel %vm119, %v2690, 0.0
    %2693 = vadd.xlane.f32.xlu0 %v2692
    %v2694 = vpop.xlane.xlu0 %2693
    %v2695 = vsel %vm119, %v2691, 0.0
    %2696 = vadd.xlane.f32.xlu0 %v2695
    %v2697 = vpop.xlane.xlu0 %2696
    %v2698 = vmul.f32 %v2694, %v126
    %v2699 = vmul.f32 %v2697, %v126
    %v2700 = vadd.f32 %v2698, 1e-05
    %v2701 = vadd.f32 %v2699, 1e-05
    %v2702 = vrsqrt.pop %v2700
    %v2703 = vrsqrt.pop %v2701
    %v2704 = vmul.f32 %v2688, %v2702
    %v2705 = vmul.f32 %v2689, %v2703
    %v2706 = vlaneseq
    %v2707 = vshrl.u32 %v2706, 7
    %v2708 = vsub.s32 0, %v2707
    %v2709 = vrot.slane %v2678, %v2708
    %v2710 = vmul.f32 %v2704, %v2709
    %v2711 = vmul.f32 %v2705, %v2709
    %v2712 = vlaneseq
    %v2713 = vshrl.u32 %v2712, 7
    %v2714 = vsub.s32 0, %v2713
    %v2715 = vrot.slane %v2679, %v2714
    %v2716 = vadd.f32 %v2710, %v2715
    %v2717 = vadd.f32 %v2711, %v2715
    %v2718 = vpack.c.bf16 %v2717, %v2716
    %s2719 = scalar_lea.vmem %s7, 16
    %v2720 = vld [vmem:[%s2719] sm:$0xf]
    %v2721 = vld [vmem:[%s2719 + $0x4] sm:$0xf]
    %v2722 = vld [vmem:[%s2719 + $0x8] sm:$0xf]
    %v2723 = vld [vmem:[%s2719 + $0xc] sm:$0xf]
    %v2724 = vld [vmem:[%s3 + $0xf] sm:$0x1]
    %v2725 = vlaneseq
    %v2726 = vshrl.u32 %v2725, 7
    %v2727 = vsub.s32 0, %v2726
    %v2728 = vrot.slane %v2724, %v2727
    %v2733 = vunpack.c.l.b16 %v2720
    %v2734 = vunpack.c.l.b16 %v2721
    %v2735 = vunpack.c.l.b16 %v2722
    %v2736 = vunpack.c.l.b16 %v2723
    %v2737 = vpack.c.b16 %v2734, %v2733
    %v2738 = vpack.c.b16 %v2736, %v2735
    %v2742 = vsel %vm119, %v2718, 0
    %2744 = vmatprep.subr.bf16.mxu0 0
    %2745 = vmatpush1.bf16.msra.mxu0 %v2737
    %2746 = vmatprep.subr.bf16.mxu0 0
    %2747 = vmatpush1.bf16.msra.mxu0 %v2738
    %2748 = vmatprep.subr.bf16.mxu0 0
    %2749 = vmatpush1.bf16.msra.mxu0 0
    %2750 = vmatprep.subr.bf16.mxu0 0
    %2751 = vmatpush1.bf16.msra.mxu0 0
    %2752 = vmatprep.subr.bf16.mxu0 0
    %2753 = vmatpush1.bf16.msra.mxu0 0
    %2754 = vmatprep.subr.bf16.mxu0 0
    %2755 = vmatpush1.bf16.msra.mxu0 0
    %2756 = vmatprep.subr.bf16.mxu0 0
    %2757 = vmatpush1.bf16.msra.mxu0 0
    %2758 = vmatprep.subr.bf16.mxu0 0
    %2759 = vmatpush1.bf16.msra.mxu0 0
    %2760 = vmatprep.subr.bf16.mxu0 0
    %2761 = vmatpush1.bf16.msra.mxu0 0
    %2762 = vmatprep.subr.bf16.mxu0 0
    %2763 = vmatpush1.bf16.msra.mxu0 0
    %2764 = vmatprep.subr.bf16.mxu0 0
    %2765 = vmatpush1.bf16.msra.mxu0 0
    %2766 = vmatprep.subr.bf16.mxu0 0
    %2767 = vmatpush1.bf16.msra.mxu0 0
    %2768 = vmatprep.subr.bf16.mxu0 0
    %2769 = vmatpush1.bf16.msra.mxu0 0
    %2770 = vmatprep.subr.bf16.mxu0 0
    %2771 = vmatpush1.bf16.msra.mxu0 0
    %2772 = vmatprep.subr.bf16.mxu0 0
    %2773 = vmatpush1.bf16.msra.mxu0 0
    %2774 = vmatprep.subr.bf16.mxu0 0
    %2775 = vmatpush1.bf16.msra.mxu0 0
    %2776 = vmatprep.mubr.bf16.mxu0 0
    %2777 = vmatmul.mubr.bf16.gmra.mrb[0].mxu0 %v2742
    %v2778 = vpop.f32.mrb[0].mxu0
    %v2779 = vadd.f32 %v2728, %v2778
    %v2780 = vpop.f32.mrb[0].mxu0
    %v2781 = vpop.f32.mrb[0].mxu0
    %v2782 = vadd.f32 %v2728, %v2781
    %v2783 = vpop.f32.mrb[0].mxu0
    %2784 = vdwg.mxu0
    %v2785 = vmax.f32 %v2779, 0.0
    %v2786 = vmax.f32 %v2782, 0.0
    %v2787 = vpack.c.bf16 %v2786, %v2785
    %s2788 = scalar_lea.vmem %s8, 64
    %v2789 = vld [vmem:[%s2788] sm:$0xf]
    %v2790 = vld [vmem:[%s2788 + $0x4] sm:$0xf]
    %v2791 = vld [vmem:[%s2788 + $0x8] sm:$0xf]
    %v2792 = vld [vmem:[%s2788 + $0xc] sm:$0xf]
    %v2793 = vld [vmem:[%s2788 + $0x10] sm:$0xf]
    %v2794 = vld [vmem:[%s2788 + $0x14] sm:$0xf]
    %v2795 = vld [vmem:[%s2788 + $0x18] sm:$0xf]
    %v2796 = vld [vmem:[%s2788 + $0x1c] sm:$0xf]
    %v2797 = vld [vmem:[%s2788 + $0x20] sm:$0xf]
    %v2798 = vld [vmem:[%s2788 + $0x24] sm:$0xf]
    %v2799 = vld [vmem:[%s2788 + $0x28] sm:$0xf]
    %v2800 = vld [vmem:[%s2788 + $0x2c] sm:$0xf]
    %v2801 = vld [vmem:[%s2788 + $0x30] sm:$0xf]
    %v2802 = vld [vmem:[%s2788 + $0x34] sm:$0xf]
    %v2803 = vld [vmem:[%s2788 + $0x38] sm:$0xf]
    %v2804 = vld [vmem:[%s2788 + $0x3c] sm:$0xf]
    %v2805 = vld [vmem:[%s3 + $0xd] sm:$0x1]
    %v2806 = vlaneseq
    %v2807 = vshrl.u32 %v2806, 7
    %v2808 = vsub.s32 0, %v2807
    %v2809 = vrot.slane %v2805, %v2808
    %v2826 = vunpack.c.l.b16 %v2789
    %v2827 = vunpack.c.l.b16 %v2790
    %v2828 = vunpack.c.l.b16 %v2791
    %v2829 = vunpack.c.l.b16 %v2792
    %v2830 = vunpack.c.l.b16 %v2793
    %v2831 = vunpack.c.l.b16 %v2794
    %v2832 = vunpack.c.l.b16 %v2795
    %v2833 = vunpack.c.l.b16 %v2796
    %v2834 = vunpack.c.l.b16 %v2797
    %v2835 = vunpack.c.l.b16 %v2798
    %v2836 = vunpack.c.l.b16 %v2799
    %v2837 = vunpack.c.l.b16 %v2800
    %v2838 = vunpack.c.l.b16 %v2801
    %v2839 = vunpack.c.l.b16 %v2802
    %v2840 = vunpack.c.l.b16 %v2803
    %v2841 = vunpack.c.l.b16 %v2804
    %v2842 = vpack.c.b16 %v2827, %v2826
    %v2843 = vpack.c.b16 %v2829, %v2828
    %v2844 = vpack.c.b16 %v2831, %v2830
    %v2845 = vpack.c.b16 %v2833, %v2832
    %v2846 = vpack.c.b16 %v2835, %v2834
    %v2847 = vpack.c.b16 %v2837, %v2836
    %v2848 = vpack.c.b16 %v2839, %v2838
    %v2849 = vpack.c.b16 %v2841, %v2840
    %2858 = vmatprep.subr.bf16.mxu0 0
    %2859 = vmatpush1.bf16.msra.mxu0 %v2842
    %2860 = vmatprep.subr.bf16.mxu0 0
    %2861 = vmatpush1.bf16.msra.mxu0 %v2843
    %2862 = vmatprep.subr.bf16.mxu0 0
    %2863 = vmatpush1.bf16.msra.mxu0 %v2844
    %2864 = vmatprep.subr.bf16.mxu0 0
    %2865 = vmatpush1.bf16.msra.mxu0 %v2845
    %2866 = vmatprep.subr.bf16.mxu0 0
    %2867 = vmatpush1.bf16.msra.mxu0 %v2846
    %2868 = vmatprep.subr.bf16.mxu0 0
    %2869 = vmatpush1.bf16.msra.mxu0 %v2847
    %2870 = vmatprep.subr.bf16.mxu0 0
    %2871 = vmatpush1.bf16.msra.mxu0 %v2848
    %2872 = vmatprep.subr.bf16.mxu0 0
    %2873 = vmatpush1.bf16.msra.mxu0 %v2849
    %2874 = vmatprep.subr.bf16.mxu0 0
    %2875 = vmatpush1.bf16.msra.mxu0 0
    %2876 = vmatprep.subr.bf16.mxu0 0
    %2877 = vmatpush1.bf16.msra.mxu0 0
    %2878 = vmatprep.subr.bf16.mxu0 0
    %2879 = vmatpush1.bf16.msra.mxu0 0
    %2880 = vmatprep.subr.bf16.mxu0 0
    %2881 = vmatpush1.bf16.msra.mxu0 0
    %2882 = vmatprep.subr.bf16.mxu0 0
    %2883 = vmatpush1.bf16.msra.mxu0 0
    %2884 = vmatprep.subr.bf16.mxu0 0
    %2885 = vmatpush1.bf16.msra.mxu0 0
    %2886 = vmatprep.subr.bf16.mxu0 0
    %2887 = vmatpush1.bf16.msra.mxu0 0
    %2888 = vmatprep.subr.bf16.mxu0 0
    %2889 = vmatpush1.bf16.msra.mxu0 0
    %2890 = vmatprep.mubr.bf16.mxu0 0
    %2891 = vmatmul.mubr.bf16.gmra.mrb[0].mxu0 %v2787
    %v2892 = vpop.f32.mrb[0].mxu0
    %v2893 = vadd.f32 %v2809, %v2892
    %v2894 = vpop.f32.mrb[0].mxu0
    %v2895 = vpop.f32.mrb[0].mxu0
    %v2896 = vadd.f32 %v2809, %v2895
    %v2897 = vpop.f32.mrb[0].mxu0
    %2898 = vdwg.mxu0
    %v2899 = vsel %vm1510, 0.0, %v2893
    %v2900 = vsel %vm1511, 0.0, %v2896
    %v2901 = vadd.f32 %v2899, %v2716
    %v2902 = vadd.f32 %v2900, %v2717
    %v2903 = vld [vmem:[%s3 + $0x11] sm:$0x1]
    %v2904 = vld [vmem:[%s3 + $0x12] sm:$0x1]
    %v2905 = vsel %vm119, %v2901, 0.0
    %2906 = vadd.xlane.f32.xlu0 %v2905
    %v2907 = vpop.xlane.xlu0 %2906
    %v2908 = vsel %vm119, %v2902, 0.0
    %2909 = vadd.xlane.f32.xlu0 %v2908
    %v2910 = vpop.xlane.xlu0 %2909
    %v2911 = vmul.f32 %v2907, %v126
    %v2912 = vmul.f32 %v2910, %v126
    %v2913 = vsub.f32 %v2901, %v2911
    %v2914 = vsub.f32 %v2902, %v2912
    %v2915 = vmul.f32 %v2913, %v2913
    %v2916 = vmul.f32 %v2914, %v2914
    %v2917 = vsel %vm119, %v2915, 0.0
    %2918 = vadd.xlane.f32.xlu0 %v2917
    %v2919 = vpop.xlane.xlu0 %2918
    %v2920 = vsel %vm119, %v2916, 0.0
    %2921 = vadd.xlane.f32.xlu0 %v2920
    %v2922 = vpop.xlane.xlu0 %2921
    %v2923 = vmul.f32 %v2919, %v126
    %v2924 = vmul.f32 %v2922, %v126
    %v2925 = vadd.f32 %v2923, 1e-05
    %v2926 = vadd.f32 %v2924, 1e-05
    %v2927 = vrsqrt.pop %v2925
    %v2928 = vrsqrt.pop %v2926
    %v2929 = vmul.f32 %v2913, %v2927
    %v2930 = vmul.f32 %v2914, %v2928
    %v2931 = vlaneseq
    %v2932 = vshrl.u32 %v2931, 7
    %v2933 = vsub.s32 0, %v2932
    %v2934 = vrot.slane %v2903, %v2933
    %v2935 = vmul.f32 %v2929, %v2934
    %v2936 = vmul.f32 %v2930, %v2934
    %v2937 = vlaneseq
    %v2938 = vshrl.u32 %v2937, 7
    %v2939 = vsub.s32 0, %v2938
    %v2940 = vrot.slane %v2904, %v2939
    %v2941 = vadd.f32 %v2935, %v2940
    %v2942 = vadd.f32 %v2936, %v2940
    %v2943 = vsel %vm119, %v2941, 0.0
    %v2944 = vrot.slane %v2943, 4
    %v2945 = vadd.f32 %v2943, %v2944
    %v2946 = vrot.slane %v2945, 2
    %v2947 = vadd.f32 %v2945, %v2946
    %v2948 = vrot.slane %v2947, 1
    %v2949 = vadd.f32 %v2947, %v2948
    %v2950 = vrcp.pop 8.0
    %v2951 = vmul.f32 %v2949, %v2950
    %v2952 = vsel %vm119, %v2942, 0.0
    %v2953 = vrot.slane %v2952, 4
    %v2954 = vadd.f32 %v2952, %v2953
    %v2955 = vrot.slane %v2954, 2
    %v2956 = vadd.f32 %v2954, %v2955
    %v2957 = vrot.slane %v2956, 1
    %v2958 = vadd.f32 %v2956, %v2957
    %v2959 = vmul.f32 %v2958, %v2950
    %vm2960 = vcmask 1040384
    %v2961 = vsel %vm2960, %v2951, %v2959
    %v2962 = vpack.c.bf16 %v2961, %v2961
    %v2963 = vld [vmem:[%s9] sm:$0xf]
    %v2964 = vld [vmem:[%s9 + $0x4] sm:$0xf]
    %v2965 = vld [vmem:[%s9 + $0x8] sm:$0xf]
    %v2966 = vld [vmem:[%s9 + $0xc] sm:$0xf]
    %v2967 = vld [vmem:[%s3 + $0x13] sm:$0x1]
    %v2968 = vlaneseq
    %v2969 = vshrl.u32 %v2968, 7
    %v2970 = vsub.s32 0, %v2969
    %v2971 = vrot.slane %v2967, %v2970
    %v2976 = vunpack.c.l.b16 %v2963
    %v2977 = vunpack.c.l.b16 %v2964
    %v2978 = vunpack.c.l.b16 %v2965
    %v2979 = vunpack.c.l.b16 %v2966
    %v2980 = vpack.c.b16 %v2977, %v2976
    %v2981 = vpack.c.b16 %v2979, %v2978
    %v2985 = vsel %vm119, %v2962, 0
    %2987 = vmatprep.subr.bf16.mxu0 0
    %2988 = vmatpush1.bf16.msra.mxu0 %v2980
    %2989 = vmatprep.subr.bf16.mxu0 0
    %2990 = vmatpush1.bf16.msra.mxu0 %v2981
    %2991 = vmatprep.subr.bf16.mxu0 0
    %2992 = vmatpush1.bf16.msra.mxu0 0
    %2993 = vmatprep.subr.bf16.mxu0 0
    %2994 = vmatpush1.bf16.msra.mxu0 0
    %2995 = vmatprep.subr.bf16.mxu0 0
    %2996 = vmatpush1.bf16.msra.mxu0 0
    %2997 = vmatprep.subr.bf16.mxu0 0
    %2998 = vmatpush1.bf16.msra.mxu0 0
    %2999 = vmatprep.subr.bf16.mxu0 0
    %3000 = vmatpush1.bf16.msra.mxu0 0
    %3001 = vmatprep.subr.bf16.mxu0 0
    %3002 = vmatpush1.bf16.msra.mxu0 0
    %3003 = vmatprep.subr.bf16.mxu0 0
    %3004 = vmatpush1.bf16.msra.mxu0 0
    %3005 = vmatprep.subr.bf16.mxu0 0
    %3006 = vmatpush1.bf16.msra.mxu0 0
    %3007 = vmatprep.subr.bf16.mxu0 0
    %3008 = vmatpush1.bf16.msra.mxu0 0
    %3009 = vmatprep.subr.bf16.mxu0 0
    %3010 = vmatpush1.bf16.msra.mxu0 0
    %3011 = vmatprep.subr.bf16.mxu0 0
    %3012 = vmatpush1.bf16.msra.mxu0 0
    %3013 = vmatprep.subr.bf16.mxu0 0
    %3014 = vmatpush1.bf16.msra.mxu0 0
    %3015 = vmatprep.subr.bf16.mxu0 0
    %3016 = vmatpush1.bf16.msra.mxu0 0
    %3017 = vmatprep.subr.bf16.mxu0 0
    %3018 = vmatpush1.bf16.msra.mxu0 0
    %3019 = vmatprep.mubr.bf16.mxu0 0
    %3020 = vmatmul.mubr.bf16.gmra.mrb[0].mxu0 %v2985
    %v3021 = vpop.f32.mrb[0].mxu0
    %v3022 = vadd.f32 %v2971, %v3021
    %v3023 = vpop.f32.mrb[0].mxu0
    %v3024 = vpop.f32.mrb[0].mxu0
    %v3025 = vpop.f32.mrb[0].mxu0
    %3026 = vdwg.mxu0
    %3027 = vst [vmem:[#allocation5] sm:$0x3] %v3022
    // Predicated region
    $region46: #{transformer_forward.1} parent=1 // pred_check
      _
    $region47: #{transformer_forward.1} parent=1 // pred_check_branch
      %3029 = sbr.rel (0) target = $region49
    $region48: #{transformer_forward.1} parent=1 // pred_region
      %s3031 = ssub.s32 32, 32
      %3032 = vsyncadd [#allocation3], %s3031
      %s3034 = sshll.u32 [#allocation5], 4
      %s3035 = int_to_ptr.vmem [resolvable:$true] %s3034
      %3037 = dma.vmem_to_hbm [thread:$0]  %s3035, 32, %s10, [#allocation3]
    $region49: #{transformer_forward.1} parent=1 // pred_fallthru
      _
    // Predicated region
    $region50: #{transformer_forward.1} parent=1 // pred_check
      _
    $region51: #{transformer_forward.1} parent=1 // pred_check_branch
      %3039 = sbr.rel (0) target = $region53
    $region52: #{transformer_forward.1} parent=1 // pred_region
      %3040 = dma.done [#allocation3], 32
    $region53: #{transformer_forward.1} parent=1 // pred_fallthru
      _
    %3041 = vsyncpa [#allocation3], 1
    %3042 = vsyncpa [#allocation4], 1

</llo_original>
